<compile_context>
chip_gen: v7x
topology: tpu7x:2x2x1
jax: 0.10.0
libtpu: 0.0.40
codegen_flags: <defaults>
</compile_context>

<pallas_src>
import functools
import math

import jax
import jax.numpy as jnp
from jax.experimental import pallas as pl
from jax.experimental.pallas import tpu as pltpu

# ---------------- tiny synthetic "prot_bert_bfd" config ----------------
HIDDEN       = 32
INTERMEDIATE = 64
NUM_HEADS    = 4
HEAD_DIM     = HIDDEN // NUM_HEADS
NUM_LAYERS   = 2
SEQ          = 8
VOCAB        = 30
NUM_CLASSES  = 5
CLS_PAD      = 128           # lane-dense classifier width (only first NUM_CLASSES used)
LN_EPS       = 1e-12         # BERT layernorm eps


# ---------------------------- fused kernel ----------------------------
def _layernorm(x, g, b):
    mean = jnp.mean(x, axis=-1, keepdims=True)
    var = jnp.mean(jnp.square(x - mean), axis=-1, keepdims=True)
    return (x - mean) * jax.lax.rsqrt(var + LN_EPS) * g + b


def _fused_kernel(ids_ref,                       # scalar-prefetch (SMEM): [SEQ] int32
                  word_emb_ref, pos_emb_ref, type_row_ref,
                  emb_ln_g_ref, emb_ln_b_ref,
                  w_qkv_ref, b_qkv_ref, w_o_ref, b_o_ref,
                  ln1_g_ref, ln1_b_ref,
                  w_ff1_ref, b_ff1_ref, w_ff2_ref, b_ff2_ref,
                  ln2_g_ref, ln2_b_ref,
                  cls_w_ref, cls_b_ref,
                  out_ref,                       # [1, CLS_PAD]
                  emb_scratch):                  # VMEM [SEQ, HIDDEN]
    # ---- embeddings: scalar-indexed gather from the VMEM-resident table ----
    for s in range(SEQ):
        emb_scratch[pl.ds(s, 1), :] = word_emb_ref[ids_ref[s]]   # [1, HIDDEN]
    h = emb_scratch[...] + pos_emb_ref[...] + type_row_ref[...]
    h = _layernorm(h, emb_ln_g_ref[...], emb_ln_b_ref[...])

    scale = 1.0 / math.sqrt(HEAD_DIM)

    for l in range(NUM_LAYERS):                  # static unroll (NUM_LAYERS=2)
        # ---- self-attention (all heads in one body, lane slices of the QKV block) ----
        qkv = jnp.dot(h, w_qkv_ref[l], preferred_element_type=jnp.float32) + b_qkv_ref[l]
        q = qkv[:, 0:HIDDEN]
        k = qkv[:, HIDDEN:2 * HIDDEN]
        v = qkv[:, 2 * HIDDEN:3 * HIDDEN]

        ctx_heads = []
        for hh in range(NUM_HEADS):
            lo, hi = hh * HEAD_DIM, (hh + 1) * HEAD_DIM
            qh, kh, vh = q[:, lo:hi], k[:, lo:hi], v[:, lo:hi]
            s_att = jnp.dot(qh, kh.T, preferred_element_type=jnp.float32) * scale
            s_att = s_att - jnp.max(s_att, axis=-1, keepdims=True)
            p = jnp.exp(s_att)
            p = p * pl.reciprocal(jnp.sum(p, axis=-1, keepdims=True), approx=True)
            ctx_heads.append(jnp.dot(p, vh, preferred_element_type=jnp.float32))
        ctx = jnp.concatenate(ctx_heads, axis=-1)                # [SEQ, HIDDEN]

        attn_out = jnp.dot(ctx, w_o_ref[l], preferred_element_type=jnp.float32) + b_o_ref[l]
        h = _layernorm(attn_out + h, ln1_g_ref[l], ln1_b_ref[l])

        # ---- feed-forward (gelu) ----
        ff = jnp.dot(h, w_ff1_ref[l], preferred_element_type=jnp.float32) + b_ff1_ref[l]
        ff = jax.nn.gelu(ff, approximate=True)
        ff = jnp.dot(ff, w_ff2_ref[l], preferred_element_type=jnp.float32) + b_ff2_ref[l]
        h = _layernorm(ff + h, ln2_g_ref[l], ln2_b_ref[l])

    # ---- classifier + softmax on CLS token, lane-dense 128-wide output ----
    cls = h[0:1, :]                                              # [1, HIDDEN]
    logits = jnp.dot(cls, cls_w_ref[...], preferred_element_type=jnp.float32) + cls_b_ref[...]
    lane = jax.lax.broadcasted_iota(jnp.int32, (1, CLS_PAD), 1)
    logits = jnp.where(lane < NUM_CLASSES, logits, -1e30)        # mask the padded lanes
    m = jnp.max(logits, axis=-1, keepdims=True)
    e = jnp.exp(logits - m)
    probs = e / jnp.sum(e, axis=-1, keepdims=True)               # exact: probs sum to 1
    out_ref[...] = probs.astype(out_ref.dtype)


# --------------------- deterministic parameter init ---------------------
def init_params(key):
    ks = iter(jax.random.split(key, 16))

    def dense(k, shape, scale=0.02):
        return (scale * jax.random.normal(k, shape)).astype(jnp.float32)

    cls_w = dense(next(ks), (HIDDEN, NUM_CLASSES))
    params = {
        "word_emb": dense(next(ks), (VOCAB, 1, HIDDEN)),   # [VOCAB, 1, HIDDEN] for row gather
        "pos_emb": dense(next(ks), (SEQ, HIDDEN)),
        "type_emb": dense(next(ks), (2, HIDDEN)),
        "emb_ln_g": jnp.ones((1, HIDDEN), jnp.float32),
        "emb_ln_b": jnp.zeros((1, HIDDEN), jnp.float32),
        "w_qkv": dense(next(ks), (NUM_LAYERS, HIDDEN, 3 * HIDDEN)),
        "b_qkv": jnp.zeros((NUM_LAYERS, 1, 3 * HIDDEN), jnp.float32),
        "w_o": dense(next(ks), (NUM_LAYERS, HIDDEN, HIDDEN)),
        "b_o": jnp.zeros((NUM_LAYERS, 1, HIDDEN), jnp.float32),
        "ln1_g": jnp.ones((NUM_LAYERS, 1, HIDDEN), jnp.float32),
        "ln1_b": jnp.zeros((NUM_LAYERS, 1, HIDDEN), jnp.float32),
        "w_ff1": dense(next(ks), (NUM_LAYERS, HIDDEN, INTERMEDIATE)),
        "b_ff1": jnp.zeros((NUM_LAYERS, 1, INTERMEDIATE), jnp.float32),
        "w_ff2": dense(next(ks), (NUM_LAYERS, INTERMEDIATE, HIDDEN)),
        "b_ff2": jnp.zeros((NUM_LAYERS, 1, HIDDEN), jnp.float32),
        "ln2_g": jnp.ones((NUM_LAYERS, 1, HIDDEN), jnp.float32),
        "ln2_b": jnp.zeros((NUM_LAYERS, 1, HIDDEN), jnp.float32),
        # classifier padded lane-dense to CLS_PAD; only first NUM_CLASSES columns meaningful
        "cls_w": jnp.pad(cls_w, ((0, 0), (0, CLS_PAD - NUM_CLASSES))),
        "cls_b": jnp.zeros((1, CLS_PAD), jnp.float32),
    }
    return params


# ------------------------------ forward ---------------------------------
@jax.jit
def inorganic_ion_classifier_forward(params, input_ids):
    """input_ids: [1, SEQ] int32 token ids (batch of 1, like the tokenizer output)."""
    ids = input_ids[0].astype(jnp.int32)                   # [SEQ] -> SMEM scalar prefetch
    type_row = params["type_emb"][0:1]                     # [1, HIDDEN] (token type 0)

    def full(shape):
        return pl.BlockSpec(shape, lambda i, ids_ref, _s=shape: (0,) * len(_s))

    in_specs = [
        full((VOCAB, 1, HIDDEN)),                          # word_emb
        full((SEQ, HIDDEN)),                               # pos_emb
        full((1, HIDDEN)),                                 # type_row
        full((1, HIDDEN)),                                 # emb_ln_g
        full((1, HIDDEN)),                                 # emb_ln_b
        full((NUM_LAYERS, HIDDEN, 3 * HIDDEN)),            # w_qkv
        full((NUM_LAYERS, 1, 3 * HIDDEN)),                 # b_qkv
        full((NUM_LAYERS, HIDDEN, HIDDEN)),                # w_o
        full((NUM_LAYERS, 1, HIDDEN)),                     # b_o
        full((NUM_LAYERS, 1, HIDDEN)),                     # ln1_g
        full((NUM_LAYERS, 1, HIDDEN)),                     # ln1_b
        full((NUM_LAYERS, HIDDEN, INTERMEDIATE)),          # w_ff1
        full((NUM_LAYERS, 1, INTERMEDIATE)),               # b_ff1
        full((NUM_LAYERS, INTERMEDIATE, HIDDEN)),          # w_ff2
        full((NUM_LAYERS, 1, HIDDEN)),                     # b_ff2
        full((NUM_LAYERS, 1, HIDDEN)),                     # ln2_g
        full((NUM_LAYERS, 1, HIDDEN)),                     # ln2_b
        full((HIDDEN, CLS_PAD)),                           # cls_w (padded)
        full((1, CLS_PAD)),                                # cls_b (padded)
    ]

    grid_spec = pltpu.PrefetchScalarGridSpec(
        num_scalar_prefetch=1,
        grid=(1,),
        in_specs=in_specs,
        out_specs=pl.BlockSpec((1, CLS_PAD), lambda i, ids_ref: (0, 0)),
        scratch_shapes=[pltpu.VMEM((SEQ, HIDDEN), jnp.float32)],
    )

    probs_pad = pl.pallas_call(
        _fused_kernel,
        out_shape=jax.ShapeDtypeStruct((1, CLS_PAD), jnp.float32),
        grid_spec=grid_spec,
        compiler_params=pltpu.CompilerParams(dimension_semantics=("arbitrary",)),
    )(ids,
      params["word_emb"], params["pos_emb"], type_row,
      params["emb_ln_g"], params["emb_ln_b"],
      params["w_qkv"], params["b_qkv"], params["w_o"], params["b_o"],
      params["ln1_g"], params["ln1_b"],
      params["w_ff1"], params["b_ff1"], params["w_ff2"], params["b_ff2"],
      params["ln2_g"], params["ln2_b"],
      params["cls_w"], params["cls_b"])

    return probs_pad[:, :NUM_CLASSES]                      # [1, NUM_CLASSES]


# ------------------------ pure-JAX reference ------------------------
def reference_forward(params, input_ids):
    ids = input_ids[0]
    word = params["word_emb"][:, 0, :][ids]                # [SEQ, HIDDEN]
    h = word + params["pos_emb"] + params["type_emb"][0:1]
    ln = lambda x, g, b: (x - x.mean(-1, keepdims=True)) * jax.lax.rsqrt(
        x.var(-1, keepdims=True) + LN_EPS) * g + b
    h = ln(h, params["emb_ln_g"], params["emb_ln_b"])
    for l in range(NUM_LAYERS):
        qkv = h @ params["w_qkv"][l] + params["b_qkv"][l]
        q, k, v = jnp.split(qkv, 3, axis=-1)
        heads = []
        for hh in range(NUM_HEADS):
            lo, hi = hh * HEAD_DIM, (hh + 1) * HEAD_DIM
            s = (q[:, lo:hi] @ k[:, lo:hi].T) / math.sqrt(HEAD_DIM)
            p = jax.nn.softmax(s, axis=-1)
            heads.append(p @ v[:, lo:hi])
        ctx = jnp.concatenate(heads, axis=-1)
        h = ln(ctx @ params["w_o"][l] + params["b_o"][l] + h,
               params["ln1_g"][l], params["ln1_b"][l])
        ff = jax.nn.gelu(h @ params["w_ff1"][l] + params["b_ff1"][l], approximate=True)
        h = ln(ff @ params["w_ff2"][l] + params["b_ff2"][l] + h,
               params["ln2_g"][l], params["ln2_b"][l])
    logits = h[0:1, :] @ params["cls_w"][:, :NUM_CLASSES] + params["cls_b"][:, :NUM_CLASSES]
    return jax.nn.softmax(logits, axis=-1)


# -------------------------------- main -----------------------------------
if __name__ == "__main__":
    key = jax.random.PRNGKey(0)
    pkey, ikey = jax.random.split(key)
    params = init_params(pkey)
    input_ids = jax.random.randint(ikey, (1, SEQ), 0, VOCAB, dtype=jnp.int32)

    probs = inorganic_ion_classifier_forward(params, input_ids)
    probs = jax.block_until_ready(probs)

    assert probs.shape == (1, NUM_CLASSES)
    assert bool(jnp.isfinite(probs).all())
    assert abs(float(probs.sum()) - 1.0) < 1e-4

    ref = reference_forward(params, input_ids)
    assert bool(jnp.allclose(probs, ref, atol=1e-2)), (probs, ref)

    print("KERNEL_OK")
</pallas_src>

<mosaic_0001>
module attributes {stable_mosaic.version = 11 : i64} {
  func.func @_fused_kernel(%arg0: i32, %arg1: memref<8xi32, #tpu.memory_space<smem>>, %arg2: memref<30x1x32xf32, #tpu.memory_space<vmem>>, %arg3: memref<8x32xf32, #tpu.memory_space<vmem>>, %arg4: memref<1x32xf32, #tpu.memory_space<vmem>>, %arg5: memref<1x32xf32, #tpu.memory_space<vmem>>, %arg6: memref<1x32xf32, #tpu.memory_space<vmem>>, %arg7: memref<2x32x96xf32, #tpu.memory_space<vmem>>, %arg8: memref<2x1x96xf32, #tpu.memory_space<vmem>>, %arg9: memref<2x32x32xf32, #tpu.memory_space<vmem>>, %arg10: memref<2x1x32xf32, #tpu.memory_space<vmem>>, %arg11: memref<2x1x32xf32, #tpu.memory_space<vmem>>, %arg12: memref<2x1x32xf32, #tpu.memory_space<vmem>>, %arg13: memref<2x32x64xf32, #tpu.memory_space<vmem>>, %arg14: memref<2x1x64xf32, #tpu.memory_space<vmem>>, %arg15: memref<2x64x32xf32, #tpu.memory_space<vmem>>, %arg16: memref<2x1x32xf32, #tpu.memory_space<vmem>>, %arg17: memref<2x1x32xf32, #tpu.memory_space<vmem>>, %arg18: memref<2x1x32xf32, #tpu.memory_space<vmem>>, %arg19: memref<32x128xf32, #tpu.memory_space<vmem>>, %arg20: memref<1x128xf32, #tpu.memory_space<vmem>>, %arg21: memref<1x128xf32, #tpu.memory_space<vmem>>, %arg22: memref<8x32xf32, #tpu.memory_space<vmem>>) attributes {dimension_semantics = [#tpu.dimension_semantics<arbitrary>], iteration_bounds = array<i64: 1>, scalar_prefetch = 1 : i64, scratch_operands = 1 : i64, tpu.core_type = #tpu.core_type<tc>, window_params = [{pipeline_mode = #tpu.pipeline_mode<synchronous>, transform_indices = @transform_0, window_bounds = array<i64: 30, 1, 32>}, {pipeline_mode = #tpu.pipeline_mode<synchronous>, transform_indices = @transform_1, window_bounds = array<i64: 8, 32>}, {pipeline_mode = #tpu.pipeline_mode<synchronous>, transform_indices = @transform_2, window_bounds = array<i64: 1, 32>}, {pipeline_mode = #tpu.pipeline_mode<synchronous>, transform_indices = @transform_3, window_bounds = array<i64: 1, 32>}, {pipeline_mode = #tpu.pipeline_mode<synchronous>, transform_indices = @transform_4, window_bounds = array<i64: 1, 32>}, {pipeline_mode = #tpu.pipeline_mode<synchronous>, transform_indices = @transform_5, window_bounds = array<i64: 2, 32, 96>}, {pipeline_mode = #tpu.pipeline_mode<synchronous>, transform_indices = @transform_6, window_bounds = array<i64: 2, 1, 96>}, {pipeline_mode = #tpu.pipeline_mode<synchronous>, transform_indices = @transform_7, window_bounds = array<i64: 2, 32, 32>}, {pipeline_mode = #tpu.pipeline_mode<synchronous>, transform_indices = @transform_8, window_bounds = array<i64: 2, 1, 32>}, {pipeline_mode = #tpu.pipeline_mode<synchronous>, transform_indices = @transform_9, window_bounds = array<i64: 2, 1, 32>}, {pipeline_mode = #tpu.pipeline_mode<synchronous>, transform_indices = @transform_10, window_bounds = array<i64: 2, 1, 32>}, {pipeline_mode = #tpu.pipeline_mode<synchronous>, transform_indices = @transform_11, window_bounds = array<i64: 2, 32, 64>}, {pipeline_mode = #tpu.pipeline_mode<synchronous>, transform_indices = @transform_12, window_bounds = array<i64: 2, 1, 64>}, {pipeline_mode = #tpu.pipeline_mode<synchronous>, transform_indices = @transform_13, window_bounds = array<i64: 2, 64, 32>}, {pipeline_mode = #tpu.pipeline_mode<synchronous>, transform_indices = @transform_14, window_bounds = array<i64: 2, 1, 32>}, {pipeline_mode = #tpu.pipeline_mode<synchronous>, transform_indices = @transform_15, window_bounds = array<i64: 2, 1, 32>}, {pipeline_mode = #tpu.pipeline_mode<synchronous>, transform_indices = @transform_16, window_bounds = array<i64: 2, 1, 32>}, {pipeline_mode = #tpu.pipeline_mode<synchronous>, transform_indices = @transform_17, window_bounds = array<i64: 32, 128>}, {pipeline_mode = #tpu.pipeline_mode<synchronous>, transform_indices = @transform_18, window_bounds = array<i64: 1, 128>}, {pipeline_mode = #tpu.pipeline_mode<synchronous>, transform_indices = @transform_19, window_bounds = array<i64: 1, 128>}]} {
    %c0 = arith.constant 0 : index
    %0 = memref.load %arg1[%c0] : memref<8xi32, #tpu.memory_space<smem>>
    %1 = arith.index_cast %0 : i32 to index
    %c0_0 = arith.constant 0 : index
    %c0_1 = arith.constant 0 : index
    %2 = vector.load %arg2[%1, %c0_0, %c0_1] : memref<30x1x32xf32, #tpu.memory_space<vmem>>, vector<1x1x32xf32>
    %3 = vector.shape_cast %2 : vector<1x1x32xf32> to vector<1x32xf32>
    %c0_2 = arith.constant 0 : index
    %c0_3 = arith.constant 0 : index
    %4 = vector.load %arg22[%c0_2, %c0_3] : memref<8x32xf32, #tpu.memory_space<vmem>>, vector<1x32xf32>
    tpu.vector_store %arg22[%c0_2, %c0_3], %3 {strides = array<i32>} : memref<8x32xf32, #tpu.memory_space<vmem>>, vector<1x32xf32>,
    %c1 = arith.constant 1 : index
    %5 = memref.load %arg1[%c1] : memref<8xi32, #tpu.memory_space<smem>>
    %6 = arith.index_cast %5 : i32 to index
    %c0_4 = arith.constant 0 : index
    %c0_5 = arith.constant 0 : index
    %7 = vector.load %arg2[%6, %c0_4, %c0_5] : memref<30x1x32xf32, #tpu.memory_space<vmem>>, vector<1x1x32xf32>
    %8 = vector.shape_cast %7 : vector<1x1x32xf32> to vector<1x32xf32>
    %c1_6 = arith.constant 1 : index
    %c0_7 = arith.constant 0 : index
    %9 = vector.load %arg22[%c1_6, %c0_7] : memref<8x32xf32, #tpu.memory_space<vmem>>, vector<1x32xf32>
    tpu.vector_store %arg22[%c1_6, %c0_7], %8 {strides = array<i32>} : memref<8x32xf32, #tpu.memory_space<vmem>>, vector<1x32xf32>,
    %c2 = arith.constant 2 : index
    %10 = memref.load %arg1[%c2] : memref<8xi32, #tpu.memory_space<smem>>
    %11 = arith.index_cast %10 : i32 to index
    %c0_8 = arith.constant 0 : index
    %c0_9 = arith.constant 0 : index
    %12 = vector.load %arg2[%11, %c0_8, %c0_9] : memref<30x1x32xf32, #tpu.memory_space<vmem>>, vector<1x1x32xf32>
    %13 = vector.shape_cast %12 : vector<1x1x32xf32> to vector<1x32xf32>
    %c2_10 = arith.constant 2 : index
    %c0_11 = arith.constant 0 : index
    %14 = vector.load %arg22[%c2_10, %c0_11] : memref<8x32xf32, #tpu.memory_space<vmem>>, vector<1x32xf32>
    tpu.vector_store %arg22[%c2_10, %c0_11], %13 {strides = array<i32>} : memref<8x32xf32, #tpu.memory_space<vmem>>, vector<1x32xf32>,
    %c3 = arith.constant 3 : index
    %15 = memref.load %arg1[%c3] : memref<8xi32, #tpu.memory_space<smem>>
    %16 = arith.index_cast %15 : i32 to index
    %c0_12 = arith.constant 0 : index
    %c0_13 = arith.constant 0 : index
    %17 = vector.load %arg2[%16, %c0_12, %c0_13] : memref<30x1x32xf32, #tpu.memory_space<vmem>>, vector<1x1x32xf32>
    %18 = vector.shape_cast %17 : vector<1x1x32xf32> to vector<1x32xf32>
    %c3_14 = arith.constant 3 : index
    %c0_15 = arith.constant 0 : index
    %19 = vector.load %arg22[%c3_14, %c0_15] : memref<8x32xf32, #tpu.memory_space<vmem>>, vector<1x32xf32>
    tpu.vector_store %arg22[%c3_14, %c0_15], %18 {strides = array<i32>} : memref<8x32xf32, #tpu.memory_space<vmem>>, vector<1x32xf32>,
    %c4 = arith.constant 4 : index
    %20 = memref.load %arg1[%c4] : memref<8xi32, #tpu.memory_space<smem>>
    %21 = arith.index_cast %20 : i32 to index
    %c0_16 = arith.constant 0 : index
    %c0_17 = arith.constant 0 : index
    %22 = vector.load %arg2[%21, %c0_16, %c0_17] : memref<30x1x32xf32, #tpu.memory_space<vmem>>, vector<1x1x32xf32>
    %23 = vector.shape_cast %22 : vector<1x1x32xf32> to vector<1x32xf32>
    %c4_18 = arith.constant 4 : index
    %c0_19 = arith.constant 0 : index
    %24 = vector.load %arg22[%c4_18, %c0_19] : memref<8x32xf32, #tpu.memory_space<vmem>>, vector<1x32xf32>
    tpu.vector_store %arg22[%c4_18, %c0_19], %23 {strides = array<i32>} : memref<8x32xf32, #tpu.memory_space<vmem>>, vector<1x32xf32>,
    %c5 = arith.constant 5 : index
    %25 = memref.load %arg1[%c5] : memref<8xi32, #tpu.memory_space<smem>>
    %26 = arith.index_cast %25 : i32 to index
    %c0_20 = arith.constant 0 : index
    %c0_21 = arith.constant 0 : index
    %27 = vector.load %arg2[%26, %c0_20, %c0_21] : memref<30x1x32xf32, #tpu.memory_space<vmem>>, vector<1x1x32xf32>
    %28 = vector.shape_cast %27 : vector<1x1x32xf32> to vector<1x32xf32>
    %c5_22 = arith.constant 5 : index
    %c0_23 = arith.constant 0 : index
    %29 = vector.load %arg22[%c5_22, %c0_23] : memref<8x32xf32, #tpu.memory_space<vmem>>, vector<1x32xf32>
    tpu.vector_store %arg22[%c5_22, %c0_23], %28 {strides = array<i32>} : memref<8x32xf32, #tpu.memory_space<vmem>>, vector<1x32xf32>,
    %c6 = arith.constant 6 : index
    %30 = memref.load %arg1[%c6] : memref<8xi32, #tpu.memory_space<smem>>
    %31 = arith.index_cast %30 : i32 to index
    %c0_24 = arith.constant 0 : index
    %c0_25 = arith.constant 0 : index
    %32 = vector.load %arg2[%31, %c0_24, %c0_25] : memref<30x1x32xf32, #tpu.memory_space<vmem>>, vector<1x1x32xf32>
    %33 = vector.shape_cast %32 : vector<1x1x32xf32> to vector<1x32xf32>
    %c6_26 = arith.constant 6 : index
    %c0_27 = arith.constant 0 : index
    %34 = vector.load %arg22[%c6_26, %c0_27] : memref<8x32xf32, #tpu.memory_space<vmem>>, vector<1x32xf32>
    tpu.vector_store %arg22[%c6_26, %c0_27], %33 {strides = array<i32>} : memref<8x32xf32, #tpu.memory_space<vmem>>, vector<1x32xf32>,
    %c7 = arith.constant 7 : index
    %35 = memref.load %arg1[%c7] : memref<8xi32, #tpu.memory_space<smem>>
    %36 = arith.index_cast %35 : i32 to index
    %c0_28 = arith.constant 0 : index
    %c0_29 = arith.constant 0 : index
    %37 = vector.load %arg2[%36, %c0_28, %c0_29] : memref<30x1x32xf32, #tpu.memory_space<vmem>>, vector<1x1x32xf32>
    %38 = vector.shape_cast %37 : vector<1x1x32xf32> to vector<1x32xf32>
    %c7_30 = arith.constant 7 : index
    %c0_31 = arith.constant 0 : index
    %39 = vector.load %arg22[%c7_30, %c0_31] : memref<8x32xf32, #tpu.memory_space<vmem>>, vector<1x32xf32>
    tpu.vector_store %arg22[%c7_30, %c0_31], %38 {strides = array<i32>} : memref<8x32xf32, #tpu.memory_space<vmem>>, vector<1x32xf32>,
    %c0_32 = arith.constant 0 : index
    %c0_33 = arith.constant 0 : index
    %40 = vector.load %arg22[%c0_32, %c0_33] : memref<8x32xf32, #tpu.memory_space<vmem>>, vector<8x32xf32>
    %c0_34 = arith.constant 0 : index
    %c0_35 = arith.constant 0 : index
    %41 = vector.load %arg3[%c0_34, %c0_35] : memref<8x32xf32, #tpu.memory_space<vmem>>, vector<8x32xf32>
    %42 = arith.addf %40, %41 : vector<8x32xf32>
    %c0_36 = arith.constant 0 : index
    %c0_37 = arith.constant 0 : index
    %43 = vector.load %arg4[%c0_36, %c0_37] : memref<1x32xf32, #tpu.memory_space<vmem>>, vector<1x32xf32>
    %44 = vector.broadcast %43 : vector<1x32xf32> to vector<8x32xf32>
    %45 = arith.addf %42, %44 : vector<8x32xf32>
    %c0_38 = arith.constant 0 : index
    %c0_39 = arith.constant 0 : index
    %46 = vector.load %arg5[%c0_38, %c0_39] : memref<1x32xf32, #tpu.memory_space<vmem>>, vector<1x32xf32>
    %c0_40 = arith.constant 0 : index
    %c0_41 = arith.constant 0 : index
    %47 = vector.load %arg6[%c0_40, %c0_41] : memref<1x32xf32, #tpu.memory_space<vmem>>, vector<1x32xf32>
    %cst = arith.constant dense<0.000000e+00> : vector<8xf32>
    %48 = vector.multi_reduction <add>, %45, %cst [1] : vector<8x32xf32> to vector<8xf32>
    %49 = vector.shape_cast %48 : vector<8xf32> to vector<8x1xf32>
    %cst_42 = arith.constant 3.200000e+01 : f32
    %50 = vector.broadcast %cst_42 : f32 to vector<8x1xf32>
    %51 = arith.divf %49, %50 : vector<8x1xf32>
    %52 = vector.broadcast %51 : vector<8x1xf32> to vector<8x32xf32>
    %53 = arith.subf %45, %52 : vector<8x32xf32>
    %54 = arith.mulf %53, %53 : vector<8x32xf32>
    %cst_43 = arith.constant dense<0.000000e+00> : vector<8xf32>
    %55 = vector.multi_reduction <add>, %54, %cst_43 [1] : vector<8x32xf32> to vector<8xf32>
    %56 = vector.shape_cast %55 : vector<8xf32> to vector<8x1xf32>
    %cst_44 = arith.constant 3.200000e+01 : f32
    %57 = vector.broadcast %cst_44 : f32 to vector<8x1xf32>
    %58 = arith.divf %56, %57 : vector<8x1xf32>
    %59 = vector.broadcast %51 : vector<8x1xf32> to vector<8x32xf32>
    %60 = arith.subf %45, %59 : vector<8x32xf32>
    %cst_45 = arith.constant 9.99999996E-13 : f32
    %61 = vector.broadcast %cst_45 : f32 to vector<8x1xf32>
    %62 = arith.addf %58, %61 : vector<8x1xf32>
    %63 = math.rsqrt %62 : vector<8x1xf32>
    %64 = vector.broadcast %63 : vector<8x1xf32> to vector<8x32xf32>
    %65 = arith.mulf %60, %64 : vector<8x32xf32>
    %66 = vector.broadcast %46 : vector<1x32xf32> to vector<8x32xf32>
    %67 = arith.mulf %65, %66 : vector<8x32xf32>
    %68 = vector.broadcast %47 : vector<1x32xf32> to vector<8x32xf32>
    %69 = arith.addf %67, %68 : vector<8x32xf32>
    %c0_46 = arith.constant 0 : index
    %c0_47 = arith.constant 0 : index
    %c0_48 = arith.constant 0 : index
    %70 = vector.load %arg7[%c0_46, %c0_47, %c0_48] : memref<2x32x96xf32, #tpu.memory_space<vmem>>, vector<1x32x96xf32>
    %71 = vector.shape_cast %70 : vector<1x32x96xf32> to vector<32x96xf32>
    %cst_49 = arith.constant dense<0.000000e+00> : vector<8x96xf32>
    %72 = tpu.matmul %69, %71, %cst_49 {dimension_numbers = #tpu.dot_dimension_numbers<[1], [0], [0], [1], [0, 0, 1, 1], [], []>} : vector<8x32xf32>, vector<32x96xf32>, vector<8x96xf32> -> vector<8x96xf32>
    %c0_50 = arith.constant 0 : index
    %c0_51 = arith.constant 0 : index
    %c0_52 = arith.constant 0 : index
    %73 = vector.load %arg8[%c0_50, %c0_51, %c0_52] : memref<2x1x96xf32, #tpu.memory_space<vmem>>, vector<1x1x96xf32>
    %74 = vector.shape_cast %73 : vector<1x1x96xf32> to vector<1x96xf32>
    %75 = vector.broadcast %74 : vector<1x96xf32> to vector<8x96xf32>
    %76 = arith.addf %72, %75 : vector<8x96xf32>
    %77 = vector.extract_strided_slice %76 {offsets = [0, 0], sizes = [8, 32], strides = [1, 1]} : vector<8x96xf32> to vector<8x32xf32>
    %78 = vector.extract_strided_slice %76 {offsets = [0, 32], sizes = [8, 32], strides = [1, 1]} : vector<8x96xf32> to vector<8x32xf32>
    %79 = vector.extract_strided_slice %76 {offsets = [0, 64], sizes = [8, 32], strides = [1, 1]} : vector<8x96xf32> to vector<8x32xf32>
    %80 = vector.extract_strided_slice %77 {offsets = [0, 0], sizes = [8, 8], strides = [1, 1]} : vector<8x32xf32> to vector<8x8xf32>
    %81 = vector.extract_strided_slice %78 {offsets = [0, 0], sizes = [8, 8], strides = [1, 1]} : vector<8x32xf32> to vector<8x8xf32>
    %82 = vector.extract_strided_slice %79 {offsets = [0, 0], sizes = [8, 8], strides = [1, 1]} : vector<8x32xf32> to vector<8x8xf32>
    %83 = tpu.transpose %81, [1, 0] : vector<8x8xf32> -> vector<8x8xf32>
    %cst_53 = arith.constant dense<0.000000e+00> : vector<8x8xf32>
    %84 = tpu.matmul %80, %83, %cst_53 {dimension_numbers = #tpu.dot_dimension_numbers<[1], [0], [0], [1], [0, 0, 1, 1], [], []>} : vector<8x8xf32>, vector<8x8xf32>, vector<8x8xf32> -> vector<8x8xf32>
    %cst_54 = arith.constant 0.353553385 : f32
    %85 = vector.broadcast %cst_54 : f32 to vector<8x8xf32>
    %86 = arith.mulf %84, %85 : vector<8x8xf32>
    %cst_55 = arith.constant dense<0xFF800000> : vector<8xf32>
    %87 = vector.multi_reduction <maximumf>, %86, %cst_55 [1] : vector<8x8xf32> to vector<8xf32>
    %88 = vector.shape_cast %87 : vector<8xf32> to vector<8x1xf32>
    %89 = vector.broadcast %88 : vector<8x1xf32> to vector<8x8xf32>
    %90 = arith.subf %86, %89 : vector<8x8xf32>
    %91 = math.exp %90 : vector<8x8xf32>
    %cst_56 = arith.constant dense<0.000000e+00> : vector<8xf32>
    %92 = vector.multi_reduction <add>, %91, %cst_56 [1] : vector<8x8xf32> to vector<8xf32>
    %93 = vector.shape_cast %92 : vector<8xf32> to vector<8x1xf32>
    %94 = tpu.reciprocal %93 {approx = true} : vector<8x1xf32> -> vector<8x1xf32>
    %95 = vector.broadcast %94 : vector<8x1xf32> to vector<8x8xf32>
    %96 = arith.mulf %91, %95 : vector<8x8xf32>
    %cst_57 = arith.constant dense<0.000000e+00> : vector<8x8xf32>
    %97 = tpu.matmul %96, %82, %cst_57 {dimension_numbers = #tpu.dot_dimension_numbers<[1], [0], [0], [1], [0, 0, 1, 1], [], []>} : vector<8x8xf32>, vector<8x8xf32>, vector<8x8xf32> -> vector<8x8xf32>
    %98 = vector.extract_strided_slice %77 {offsets = [0, 8], sizes = [8, 8], strides = [1, 1]} : vector<8x32xf32> to vector<8x8xf32>
    %99 = vector.extract_strided_slice %78 {offsets = [0, 8], sizes = [8, 8], strides = [1, 1]} : vector<8x32xf32> to vector<8x8xf32>
    %100 = vector.extract_strided_slice %79 {offsets = [0, 8], sizes = [8, 8], strides = [1, 1]} : vector<8x32xf32> to vector<8x8xf32>
    %101 = tpu.transpose %99, [1, 0] : vector<8x8xf32> -> vector<8x8xf32>
    %cst_58 = arith.constant dense<0.000000e+00> : vector<8x8xf32>
    %102 = tpu.matmul %98, %101, %cst_58 {dimension_numbers = #tpu.dot_dimension_numbers<[1], [0], [0], [1], [0, 0, 1, 1], [], []>} : vector<8x8xf32>, vector<8x8xf32>, vector<8x8xf32> -> vector<8x8xf32>
    %cst_59 = arith.constant 0.353553385 : f32
    %103 = vector.broadcast %cst_59 : f32 to vector<8x8xf32>
    %104 = arith.mulf %102, %103 : vector<8x8xf32>
    %cst_60 = arith.constant dense<0xFF800000> : vector<8xf32>
    %105 = vector.multi_reduction <maximumf>, %104, %cst_60 [1] : vector<8x8xf32> to vector<8xf32>
    %106 = vector.shape_cast %105 : vector<8xf32> to vector<8x1xf32>
    %107 = vector.broadcast %106 : vector<8x1xf32> to vector<8x8xf32>
    %108 = arith.subf %104, %107 : vector<8x8xf32>
    %109 = math.exp %108 : vector<8x8xf32>
    %cst_61 = arith.constant dense<0.000000e+00> : vector<8xf32>
    %110 = vector.multi_reduction <add>, %109, %cst_61 [1] : vector<8x8xf32> to vector<8xf32>
    %111 = vector.shape_cast %110 : vector<8xf32> to vector<8x1xf32>
    %112 = tpu.reciprocal %111 {approx = true} : vector<8x1xf32> -> vector<8x1xf32>
    %113 = vector.broadcast %112 : vector<8x1xf32> to vector<8x8xf32>
    %114 = arith.mulf %109, %113 : vector<8x8xf32>
    %cst_62 = arith.constant dense<0.000000e+00> : vector<8x8xf32>
    %115 = tpu.matmul %114, %100, %cst_62 {dimension_numbers = #tpu.dot_dimension_numbers<[1], [0], [0], [1], [0, 0, 1, 1], [], []>} : vector<8x8xf32>, vector<8x8xf32>, vector<8x8xf32> -> vector<8x8xf32>
    %116 = vector.extract_strided_slice %77 {offsets = [0, 16], sizes = [8, 8], strides = [1, 1]} : vector<8x32xf32> to vector<8x8xf32>
    %117 = vector.extract_strided_slice %78 {offsets = [0, 16], sizes = [8, 8], strides = [1, 1]} : vector<8x32xf32> to vector<8x8xf32>
    %118 = vector.extract_strided_slice %79 {offsets = [0, 16], sizes = [8, 8], strides = [1, 1]} : vector<8x32xf32> to vector<8x8xf32>
    %119 = tpu.transpose %117, [1, 0] : vector<8x8xf32> -> vector<8x8xf32>
    %cst_63 = arith.constant dense<0.000000e+00> : vector<8x8xf32>
    %120 = tpu.matmul %116, %119, %cst_63 {dimension_numbers = #tpu.dot_dimension_numbers<[1], [0], [0], [1], [0, 0, 1, 1], [], []>} : vector<8x8xf32>, vector<8x8xf32>, vector<8x8xf32> -> vector<8x8xf32>
    %cst_64 = arith.constant 0.353553385 : f32
    %121 = vector.broadcast %cst_64 : f32 to vector<8x8xf32>
    %122 = arith.mulf %120, %121 : vector<8x8xf32>
    %cst_65 = arith.constant dense<0xFF800000> : vector<8xf32>
    %123 = vector.multi_reduction <maximumf>, %122, %cst_65 [1] : vector<8x8xf32> to vector<8xf32>
    %124 = vector.shape_cast %123 : vector<8xf32> to vector<8x1xf32>
    %125 = vector.broadcast %124 : vector<8x1xf32> to vector<8x8xf32>
    %126 = arith.subf %122, %125 : vector<8x8xf32>
    %127 = math.exp %126 : vector<8x8xf32>
    %cst_66 = arith.constant dense<0.000000e+00> : vector<8xf32>
    %128 = vector.multi_reduction <add>, %127, %cst_66 [1] : vector<8x8xf32> to vector<8xf32>
    %129 = vector.shape_cast %128 : vector<8xf32> to vector<8x1xf32>
    %130 = tpu.reciprocal %129 {approx = true} : vector<8x1xf32> -> vector<8x1xf32>
    %131 = vector.broadcast %130 : vector<8x1xf32> to vector<8x8xf32>
    %132 = arith.mulf %127, %131 : vector<8x8xf32>
    %cst_67 = arith.constant dense<0.000000e+00> : vector<8x8xf32>
    %133 = tpu.matmul %132, %118, %cst_67 {dimension_numbers = #tpu.dot_dimension_numbers<[1], [0], [0], [1], [0, 0, 1, 1], [], []>} : vector<8x8xf32>, vector<8x8xf32>, vector<8x8xf32> -> vector<8x8xf32>
    %134 = vector.extract_strided_slice %77 {offsets = [0, 24], sizes = [8, 8], strides = [1, 1]} : vector<8x32xf32> to vector<8x8xf32>
    %135 = vector.extract_strided_slice %78 {offsets = [0, 24], sizes = [8, 8], strides = [1, 1]} : vector<8x32xf32> to vector<8x8xf32>
    %136 = vector.extract_strided_slice %79 {offsets = [0, 24], sizes = [8, 8], strides = [1, 1]} : vector<8x32xf32> to vector<8x8xf32>
    %137 = tpu.transpose %135, [1, 0] : vector<8x8xf32> -> vector<8x8xf32>
    %cst_68 = arith.constant dense<0.000000e+00> : vector<8x8xf32>
    %138 = tpu.matmul %134, %137, %cst_68 {dimension_numbers = #tpu.dot_dimension_numbers<[1], [0], [0], [1], [0, 0, 1, 1], [], []>} : vector<8x8xf32>, vector<8x8xf32>, vector<8x8xf32> -> vector<8x8xf32>
    %cst_69 = arith.constant 0.353553385 : f32
    %139 = vector.broadcast %cst_69 : f32 to vector<8x8xf32>
    %140 = arith.mulf %138, %139 : vector<8x8xf32>
    %cst_70 = arith.constant dense<0xFF800000> : vector<8xf32>
    %141 = vector.multi_reduction <maximumf>, %140, %cst_70 [1] : vector<8x8xf32> to vector<8xf32>
    %142 = vector.shape_cast %141 : vector<8xf32> to vector<8x1xf32>
    %143 = vector.broadcast %142 : vector<8x1xf32> to vector<8x8xf32>
    %144 = arith.subf %140, %143 : vector<8x8xf32>
    %145 = math.exp %144 : vector<8x8xf32>
    %cst_71 = arith.constant dense<0.000000e+00> : vector<8xf32>
    %146 = vector.multi_reduction <add>, %145, %cst_71 [1] : vector<8x8xf32> to vector<8xf32>
    %147 = vector.shape_cast %146 : vector<8xf32> to vector<8x1xf32>
    %148 = tpu.reciprocal %147 {approx = true} : vector<8x1xf32> -> vector<8x1xf32>
    %149 = vector.broadcast %148 : vector<8x1xf32> to vector<8x8xf32>
    %150 = arith.mulf %145, %149 : vector<8x8xf32>
    %cst_72 = arith.constant dense<0.000000e+00> : vector<8x8xf32>
    %151 = tpu.matmul %150, %136, %cst_72 {dimension_numbers = #tpu.dot_dimension_numbers<[1], [0], [0], [1], [0, 0, 1, 1], [], []>} : vector<8x8xf32>, vector<8x8xf32>, vector<8x8xf32> -> vector<8x8xf32>
    %152 = tpu.concatenate %97, %115, %133, %151 in 1 : vector<8x8xf32>, vector<8x8xf32>, vector<8x8xf32>, vector<8x8xf32> -> vector<8x32xf32>
    %c0_73 = arith.constant 0 : index
    %c0_74 = arith.constant 0 : index
    %c0_75 = arith.constant 0 : index
    %153 = vector.load %arg9[%c0_73, %c0_74, %c0_75] : memref<2x32x32xf32, #tpu.memory_space<vmem>>, vector<1x32x32xf32>
    %154 = vector.shape_cast %153 : vector<1x32x32xf32> to vector<32x32xf32>
    %cst_76 = arith.constant dense<0.000000e+00> : vector<8x32xf32>
    %155 = tpu.matmul %152, %154, %cst_76 {dimension_numbers = #tpu.dot_dimension_numbers<[1], [0], [0], [1], [0, 0, 1, 1], [], []>} : vector<8x32xf32>, vector<32x32xf32>, vector<8x32xf32> -> vector<8x32xf32>
    %c0_77 = arith.constant 0 : index
    %c0_78 = arith.constant 0 : index
    %c0_79 = arith.constant 0 : index
    %156 = vector.load %arg10[%c0_77, %c0_78, %c0_79] : memref<2x1x32xf32, #tpu.memory_space<vmem>>, vector<1x1x32xf32>
    %157 = vector.shape_cast %156 : vector<1x1x32xf32> to vector<1x32xf32>
    %158 = vector.broadcast %157 : vector<1x32xf32> to vector<8x32xf32>
    %159 = arith.addf %155, %158 : vector<8x32xf32>
    %160 = arith.addf %159, %69 : vector<8x32xf32>
    %c0_80 = arith.constant 0 : index
    %c0_81 = arith.constant 0 : index
    %c0_82 = arith.constant 0 : index
    %161 = vector.load %arg11[%c0_80, %c0_81, %c0_82] : memref<2x1x32xf32, #tpu.memory_space<vmem>>, vector<1x1x32xf32>
    %162 = vector.shape_cast %161 : vector<1x1x32xf32> to vector<1x32xf32>
    %c0_83 = arith.constant 0 : index
    %c0_84 = arith.constant 0 : index
    %c0_85 = arith.constant 0 : index
    %163 = vector.load %arg12[%c0_83, %c0_84, %c0_85] : memref<2x1x32xf32, #tpu.memory_space<vmem>>, vector<1x1x32xf32>
    %164 = vector.shape_cast %163 : vector<1x1x32xf32> to vector<1x32xf32>
    %cst_86 = arith.constant dense<0.000000e+00> : vector<8xf32>
    %165 = vector.multi_reduction <add>, %160, %cst_86 [1] : vector<8x32xf32> to vector<8xf32>
    %166 = vector.shape_cast %165 : vector<8xf32> to vector<8x1xf32>
    %cst_87 = arith.constant 3.200000e+01 : f32
    %167 = vector.broadcast %cst_87 : f32 to vector<8x1xf32>
    %168 = arith.divf %166, %167 : vector<8x1xf32>
    %169 = vector.broadcast %168 : vector<8x1xf32> to vector<8x32xf32>
    %170 = arith.subf %160, %169 : vector<8x32xf32>
    %171 = arith.mulf %170, %170 : vector<8x32xf32>
    %cst_88 = arith.constant dense<0.000000e+00> : vector<8xf32>
    %172 = vector.multi_reduction <add>, %171, %cst_88 [1] : vector<8x32xf32> to vector<8xf32>
    %173 = vector.shape_cast %172 : vector<8xf32> to vector<8x1xf32>
    %cst_89 = arith.constant 3.200000e+01 : f32
    %174 = vector.broadcast %cst_89 : f32 to vector<8x1xf32>
    %175 = arith.divf %173, %174 : vector<8x1xf32>
    %176 = vector.broadcast %168 : vector<8x1xf32> to vector<8x32xf32>
    %177 = arith.subf %160, %176 : vector<8x32xf32>
    %cst_90 = arith.constant 9.99999996E-13 : f32
    %178 = vector.broadcast %cst_90 : f32 to vector<8x1xf32>
    %179 = arith.addf %175, %178 : vector<8x1xf32>
    %180 = math.rsqrt %179 : vector<8x1xf32>
    %181 = vector.broadcast %180 : vector<8x1xf32> to vector<8x32xf32>
    %182 = arith.mulf %177, %181 : vector<8x32xf32>
    %183 = vector.broadcast %162 : vector<1x32xf32> to vector<8x32xf32>
    %184 = arith.mulf %182, %183 : vector<8x32xf32>
    %185 = vector.broadcast %164 : vector<1x32xf32> to vector<8x32xf32>
    %186 = arith.addf %184, %185 : vector<8x32xf32>
    %c0_91 = arith.constant 0 : index
    %c0_92 = arith.constant 0 : index
    %c0_93 = arith.constant 0 : index
    %187 = vector.load %arg13[%c0_91, %c0_92, %c0_93] : memref<2x32x64xf32, #tpu.memory_space<vmem>>, vector<1x32x64xf32>
    %188 = vector.shape_cast %187 : vector<1x32x64xf32> to vector<32x64xf32>
    %cst_94 = arith.constant dense<0.000000e+00> : vector<8x64xf32>
    %189 = tpu.matmul %186, %188, %cst_94 {dimension_numbers = #tpu.dot_dimension_numbers<[1], [0], [0], [1], [0, 0, 1, 1], [], []>} : vector<8x32xf32>, vector<32x64xf32>, vector<8x64xf32> -> vector<8x64xf32>
    %c0_95 = arith.constant 0 : index
    %c0_96 = arith.constant 0 : index
    %c0_97 = arith.constant 0 : index
    %190 = vector.load %arg14[%c0_95, %c0_96, %c0_97] : memref<2x1x64xf32, #tpu.memory_space<vmem>>, vector<1x1x64xf32>
    %191 = vector.shape_cast %190 : vector<1x1x64xf32> to vector<1x64xf32>
    %192 = vector.broadcast %191 : vector<1x64xf32> to vector<8x64xf32>
    %193 = arith.addf %189, %192 : vector<8x64xf32>
    %194 = arith.mulf %193, %193 : vector<8x64xf32>
    %195 = arith.mulf %193, %194 : vector<8x64xf32>
    %cst_98 = arith.constant 4.471500e-02 : f32
    %196 = vector.broadcast %cst_98 : f32 to vector<8x64xf32>
    %197 = arith.mulf %196, %195 : vector<8x64xf32>
    %198 = arith.addf %193, %197 : vector<8x64xf32>
    %cst_99 = arith.constant 0.797884583 : f32
    %199 = vector.broadcast %cst_99 : f32 to vector<8x64xf32>
    %200 = arith.mulf %199, %198 : vector<8x64xf32>
    %201 = math.tanh %200 : vector<8x64xf32>
    %cst_100 = arith.constant 1.000000e+00 : f32
    %202 = vector.broadcast %cst_100 : f32 to vector<8x64xf32>
    %203 = arith.addf %202, %201 : vector<8x64xf32>
    %cst_101 = arith.constant 5.000000e-01 : f32
    %204 = vector.broadcast %cst_101 : f32 to vector<8x64xf32>
    %205 = arith.mulf %204, %203 : vector<8x64xf32>
    %206 = arith.mulf %193, %205 : vector<8x64xf32>
    %c0_102 = arith.constant 0 : index
    %c0_103 = arith.constant 0 : index
    %c0_104 = arith.constant 0 : index
    %207 = vector.load %arg15[%c0_102, %c0_103, %c0_104] : memref<2x64x32xf32, #tpu.memory_space<vmem>>, vector<1x64x32xf32>
    %208 = vector.shape_cast %207 : vector<1x64x32xf32> to vector<64x32xf32>
    %cst_105 = arith.constant dense<0.000000e+00> : vector<8x32xf32>
    %209 = tpu.matmul %206, %208, %cst_105 {dimension_numbers = #tpu.dot_dimension_numbers<[1], [0], [0], [1], [0, 0, 1, 1], [], []>} : vector<8x64xf32>, vector<64x32xf32>, vector<8x32xf32> -> vector<8x32xf32>
    %c0_106 = arith.constant 0 : index
    %c0_107 = arith.constant 0 : index
    %c0_108 = arith.constant 0 : index
    %210 = vector.load %arg16[%c0_106, %c0_107, %c0_108] : memref<2x1x32xf32, #tpu.memory_space<vmem>>, vector<1x1x32xf32>
    %211 = vector.shape_cast %210 : vector<1x1x32xf32> to vector<1x32xf32>
    %212 = vector.broadcast %211 : vector<1x32xf32> to vector<8x32xf32>
    %213 = arith.addf %209, %212 : vector<8x32xf32>
    %214 = arith.addf %213, %186 : vector<8x32xf32>
    %c0_109 = arith.constant 0 : index
    %c0_110 = arith.constant 0 : index
    %c0_111 = arith.constant 0 : index
    %215 = vector.load %arg17[%c0_109, %c0_110, %c0_111] : memref<2x1x32xf32, #tpu.memory_space<vmem>>, vector<1x1x32xf32>
    %216 = vector.shape_cast %215 : vector<1x1x32xf32> to vector<1x32xf32>
    %c0_112 = arith.constant 0 : index
    %c0_113 = arith.constant 0 : index
    %c0_114 = arith.constant 0 : index
    %217 = vector.load %arg18[%c0_112, %c0_113, %c0_114] : memref<2x1x32xf32, #tpu.memory_space<vmem>>, vector<1x1x32xf32>
    %218 = vector.shape_cast %217 : vector<1x1x32xf32> to vector<1x32xf32>
    %cst_115 = arith.constant dense<0.000000e+00> : vector<8xf32>
    %219 = vector.multi_reduction <add>, %214, %cst_115 [1] : vector<8x32xf32> to vector<8xf32>
    %220 = vector.shape_cast %219 : vector<8xf32> to vector<8x1xf32>
    %cst_116 = arith.constant 3.200000e+01 : f32
    %221 = vector.broadcast %cst_116 : f32 to vector<8x1xf32>
    %222 = arith.divf %220, %221 : vector<8x1xf32>
    %223 = vector.broadcast %222 : vector<8x1xf32> to vector<8x32xf32>
    %224 = arith.subf %214, %223 : vector<8x32xf32>
    %225 = arith.mulf %224, %224 : vector<8x32xf32>
    %cst_117 = arith.constant dense<0.000000e+00> : vector<8xf32>
    %226 = vector.multi_reduction <add>, %225, %cst_117 [1] : vector<8x32xf32> to vector<8xf32>
    %227 = vector.shape_cast %226 : vector<8xf32> to vector<8x1xf32>
    %cst_118 = arith.constant 3.200000e+01 : f32
    %228 = vector.broadcast %cst_118 : f32 to vector<8x1xf32>
    %229 = arith.divf %227, %228 : vector<8x1xf32>
    %230 = vector.broadcast %222 : vector<8x1xf32> to vector<8x32xf32>
    %231 = arith.subf %214, %230 : vector<8x32xf32>
    %cst_119 = arith.constant 9.99999996E-13 : f32
    %232 = vector.broadcast %cst_119 : f32 to vector<8x1xf32>
    %233 = arith.addf %229, %232 : vector<8x1xf32>
    %234 = math.rsqrt %233 : vector<8x1xf32>
    %235 = vector.broadcast %234 : vector<8x1xf32> to vector<8x32xf32>
    %236 = arith.mulf %231, %235 : vector<8x32xf32>
    %237 = vector.broadcast %216 : vector<1x32xf32> to vector<8x32xf32>
    %238 = arith.mulf %236, %237 : vector<8x32xf32>
    %239 = vector.broadcast %218 : vector<1x32xf32> to vector<8x32xf32>
    %240 = arith.addf %238, %239 : vector<8x32xf32>
    %c1_120 = arith.constant 1 : index
    %c0_121 = arith.constant 0 : index
    %c0_122 = arith.constant 0 : index
    %241 = vector.load %arg7[%c1_120, %c0_121, %c0_122] : memref<2x32x96xf32, #tpu.memory_space<vmem>>, vector<1x32x96xf32>
    %242 = vector.shape_cast %241 : vector<1x32x96xf32> to vector<32x96xf32>
    %cst_123 = arith.constant dense<0.000000e+00> : vector<8x96xf32>
    %243 = tpu.matmul %240, %242, %cst_123 {dimension_numbers = #tpu.dot_dimension_numbers<[1], [0], [0], [1], [0, 0, 1, 1], [], []>} : vector<8x32xf32>, vector<32x96xf32>, vector<8x96xf32> -> vector<8x96xf32>
    %c1_124 = arith.constant 1 : index
    %c0_125 = arith.constant 0 : index
    %c0_126 = arith.constant 0 : index
    %244 = vector.load %arg8[%c1_124, %c0_125, %c0_126] : memref<2x1x96xf32, #tpu.memory_space<vmem>>, vector<1x1x96xf32>
    %245 = vector.shape_cast %244 : vector<1x1x96xf32> to vector<1x96xf32>
    %246 = vector.broadcast %245 : vector<1x96xf32> to vector<8x96xf32>
    %247 = arith.addf %243, %246 : vector<8x96xf32>
    %248 = vector.extract_strided_slice %247 {offsets = [0, 0], sizes = [8, 32], strides = [1, 1]} : vector<8x96xf32> to vector<8x32xf32>
    %249 = vector.extract_strided_slice %247 {offsets = [0, 32], sizes = [8, 32], strides = [1, 1]} : vector<8x96xf32> to vector<8x32xf32>
    %250 = vector.extract_strided_slice %247 {offsets = [0, 64], sizes = [8, 32], strides = [1, 1]} : vector<8x96xf32> to vector<8x32xf32>
    %251 = vector.extract_strided_slice %248 {offsets = [0, 0], sizes = [8, 8], strides = [1, 1]} : vector<8x32xf32> to vector<8x8xf32>
    %252 = vector.extract_strided_slice %249 {offsets = [0, 0], sizes = [8, 8], strides = [1, 1]} : vector<8x32xf32> to vector<8x8xf32>
    %253 = vector.extract_strided_slice %250 {offsets = [0, 0], sizes = [8, 8], strides = [1, 1]} : vector<8x32xf32> to vector<8x8xf32>
    %254 = tpu.transpose %252, [1, 0] : vector<8x8xf32> -> vector<8x8xf32>
    %cst_127 = arith.constant dense<0.000000e+00> : vector<8x8xf32>
    %255 = tpu.matmul %251, %254, %cst_127 {dimension_numbers = #tpu.dot_dimension_numbers<[1], [0], [0], [1], [0, 0, 1, 1], [], []>} : vector<8x8xf32>, vector<8x8xf32>, vector<8x8xf32> -> vector<8x8xf32>
    %cst_128 = arith.constant 0.353553385 : f32
    %256 = vector.broadcast %cst_128 : f32 to vector<8x8xf32>
    %257 = arith.mulf %255, %256 : vector<8x8xf32>
    %cst_129 = arith.constant dense<0xFF800000> : vector<8xf32>
    %258 = vector.multi_reduction <maximumf>, %257, %cst_129 [1] : vector<8x8xf32> to vector<8xf32>
    %259 = vector.shape_cast %258 : vector<8xf32> to vector<8x1xf32>
    %260 = vector.broadcast %259 : vector<8x1xf32> to vector<8x8xf32>
    %261 = arith.subf %257, %260 : vector<8x8xf32>
    %262 = math.exp %261 : vector<8x8xf32>
    %cst_130 = arith.constant dense<0.000000e+00> : vector<8xf32>
    %263 = vector.multi_reduction <add>, %262, %cst_130 [1] : vector<8x8xf32> to vector<8xf32>
    %264 = vector.shape_cast %263 : vector<8xf32> to vector<8x1xf32>
    %265 = tpu.reciprocal %264 {approx = true} : vector<8x1xf32> -> vector<8x1xf32>
    %266 = vector.broadcast %265 : vector<8x1xf32> to vector<8x8xf32>
    %267 = arith.mulf %262, %266 : vector<8x8xf32>
    %cst_131 = arith.constant dense<0.000000e+00> : vector<8x8xf32>
    %268 = tpu.matmul %267, %253, %cst_131 {dimension_numbers = #tpu.dot_dimension_numbers<[1], [0], [0], [1], [0, 0, 1, 1], [], []>} : vector<8x8xf32>, vector<8x8xf32>, vector<8x8xf32> -> vector<8x8xf32>
    %269 = vector.extract_strided_slice %248 {offsets = [0, 8], sizes = [8, 8], strides = [1, 1]} : vector<8x32xf32> to vector<8x8xf32>
    %270 = vector.extract_strided_slice %249 {offsets = [0, 8], sizes = [8, 8], strides = [1, 1]} : vector<8x32xf32> to vector<8x8xf32>
    %271 = vector.extract_strided_slice %250 {offsets = [0, 8], sizes = [8, 8], strides = [1, 1]} : vector<8x32xf32> to vector<8x8xf32>
    %272 = tpu.transpose %270, [1, 0] : vector<8x8xf32> -> vector<8x8xf32>
    %cst_132 = arith.constant dense<0.000000e+00> : vector<8x8xf32>
    %273 = tpu.matmul %269, %272, %cst_132 {dimension_numbers = #tpu.dot_dimension_numbers<[1], [0], [0], [1], [0, 0, 1, 1], [], []>} : vector<8x8xf32>, vector<8x8xf32>, vector<8x8xf32> -> vector<8x8xf32>
    %cst_133 = arith.constant 0.353553385 : f32
    %274 = vector.broadcast %cst_133 : f32 to vector<8x8xf32>
    %275 = arith.mulf %273, %274 : vector<8x8xf32>
    %cst_134 = arith.constant dense<0xFF800000> : vector<8xf32>
    %276 = vector.multi_reduction <maximumf>, %275, %cst_134 [1] : vector<8x8xf32> to vector<8xf32>
    %277 = vector.shape_cast %276 : vector<8xf32> to vector<8x1xf32>
    %278 = vector.broadcast %277 : vector<8x1xf32> to vector<8x8xf32>
    %279 = arith.subf %275, %278 : vector<8x8xf32>
    %280 = math.exp %279 : vector<8x8xf32>
    %cst_135 = arith.constant dense<0.000000e+00> : vector<8xf32>
    %281 = vector.multi_reduction <add>, %280, %cst_135 [1] : vector<8x8xf32> to vector<8xf32>
    %282 = vector.shape_cast %281 : vector<8xf32> to vector<8x1xf32>
    %283 = tpu.reciprocal %282 {approx = true} : vector<8x1xf32> -> vector<8x1xf32>
    %284 = vector.broadcast %283 : vector<8x1xf32> to vector<8x8xf32>
    %285 = arith.mulf %280, %284 : vector<8x8xf32>
    %cst_136 = arith.constant dense<0.000000e+00> : vector<8x8xf32>
    %286 = tpu.matmul %285, %271, %cst_136 {dimension_numbers = #tpu.dot_dimension_numbers<[1], [0], [0], [1], [0, 0, 1, 1], [], []>} : vector<8x8xf32>, vector<8x8xf32>, vector<8x8xf32> -> vector<8x8xf32>
    %287 = vector.extract_strided_slice %248 {offsets = [0, 16], sizes = [8, 8], strides = [1, 1]} : vector<8x32xf32> to vector<8x8xf32>
    %288 = vector.extract_strided_slice %249 {offsets = [0, 16], sizes = [8, 8], strides = [1, 1]} : vector<8x32xf32> to vector<8x8xf32>
    %289 = vector.extract_strided_slice %250 {offsets = [0, 16], sizes = [8, 8], strides = [1, 1]} : vector<8x32xf32> to vector<8x8xf32>
    %290 = tpu.transpose %288, [1, 0] : vector<8x8xf32> -> vector<8x8xf32>
    %cst_137 = arith.constant dense<0.000000e+00> : vector<8x8xf32>
    %291 = tpu.matmul %287, %290, %cst_137 {dimension_numbers = #tpu.dot_dimension_numbers<[1], [0], [0], [1], [0, 0, 1, 1], [], []>} : vector<8x8xf32>, vector<8x8xf32>, vector<8x8xf32> -> vector<8x8xf32>
    %cst_138 = arith.constant 0.353553385 : f32
    %292 = vector.broadcast %cst_138 : f32 to vector<8x8xf32>
    %293 = arith.mulf %291, %292 : vector<8x8xf32>
    %cst_139 = arith.constant dense<0xFF800000> : vector<8xf32>
    %294 = vector.multi_reduction <maximumf>, %293, %cst_139 [1] : vector<8x8xf32> to vector<8xf32>
    %295 = vector.shape_cast %294 : vector<8xf32> to vector<8x1xf32>
    %296 = vector.broadcast %295 : vector<8x1xf32> to vector<8x8xf32>
    %297 = arith.subf %293, %296 : vector<8x8xf32>
    %298 = math.exp %297 : vector<8x8xf32>
    %cst_140 = arith.constant dense<0.000000e+00> : vector<8xf32>
    %299 = vector.multi_reduction <add>, %298, %cst_140 [1] : vector<8x8xf32> to vector<8xf32>
    %300 = vector.shape_cast %299 : vector<8xf32> to vector<8x1xf32>
    %301 = tpu.reciprocal %300 {approx = true} : vector<8x1xf32> -> vector<8x1xf32>
    %302 = vector.broadcast %301 : vector<8x1xf32> to vector<8x8xf32>
    %303 = arith.mulf %298, %302 : vector<8x8xf32>
    %cst_141 = arith.constant dense<0.000000e+00> : vector<8x8xf32>
    %304 = tpu.matmul %303, %289, %cst_141 {dimension_numbers = #tpu.dot_dimension_numbers<[1], [0], [0], [1], [0, 0, 1, 1], [], []>} : vector<8x8xf32>, vector<8x8xf32>, vector<8x8xf32> -> vector<8x8xf32>
    %305 = vector.extract_strided_slice %248 {offsets = [0, 24], sizes = [8, 8], strides = [1, 1]} : vector<8x32xf32> to vector<8x8xf32>
    %306 = vector.extract_strided_slice %249 {offsets = [0, 24], sizes = [8, 8], strides = [1, 1]} : vector<8x32xf32> to vector<8x8xf32>
    %307 = vector.extract_strided_slice %250 {offsets = [0, 24], sizes = [8, 8], strides = [1, 1]} : vector<8x32xf32> to vector<8x8xf32>
    %308 = tpu.transpose %306, [1, 0] : vector<8x8xf32> -> vector<8x8xf32>
    %cst_142 = arith.constant dense<0.000000e+00> : vector<8x8xf32>
    %309 = tpu.matmul %305, %308, %cst_142 {dimension_numbers = #tpu.dot_dimension_numbers<[1], [0], [0], [1], [0, 0, 1, 1], [], []>} : vector<8x8xf32>, vector<8x8xf32>, vector<8x8xf32> -> vector<8x8xf32>
    %cst_143 = arith.constant 0.353553385 : f32
    %310 = vector.broadcast %cst_143 : f32 to vector<8x8xf32>
    %311 = arith.mulf %309, %310 : vector<8x8xf32>
    %cst_144 = arith.constant dense<0xFF800000> : vector<8xf32>
    %312 = vector.multi_reduction <maximumf>, %311, %cst_144 [1] : vector<8x8xf32> to vector<8xf32>
    %313 = vector.shape_cast %312 : vector<8xf32> to vector<8x1xf32>
    %314 = vector.broadcast %313 : vector<8x1xf32> to vector<8x8xf32>
    %315 = arith.subf %311, %314 : vector<8x8xf32>
    %316 = math.exp %315 : vector<8x8xf32>
    %cst_145 = arith.constant dense<0.000000e+00> : vector<8xf32>
    %317 = vector.multi_reduction <add>, %316, %cst_145 [1] : vector<8x8xf32> to vector<8xf32>
    %318 = vector.shape_cast %317 : vector<8xf32> to vector<8x1xf32>
    %319 = tpu.reciprocal %318 {approx = true} : vector<8x1xf32> -> vector<8x1xf32>
    %320 = vector.broadcast %319 : vector<8x1xf32> to vector<8x8xf32>
    %321 = arith.mulf %316, %320 : vector<8x8xf32>
    %cst_146 = arith.constant dense<0.000000e+00> : vector<8x8xf32>
    %322 = tpu.matmul %321, %307, %cst_146 {dimension_numbers = #tpu.dot_dimension_numbers<[1], [0], [0], [1], [0, 0, 1, 1], [], []>} : vector<8x8xf32>, vector<8x8xf32>, vector<8x8xf32> -> vector<8x8xf32>
    %323 = tpu.concatenate %268, %286, %304, %322 in 1 : vector<8x8xf32>, vector<8x8xf32>, vector<8x8xf32>, vector<8x8xf32> -> vector<8x32xf32>
    %c1_147 = arith.constant 1 : index
    %c0_148 = arith.constant 0 : index
    %c0_149 = arith.constant 0 : index
    %324 = vector.load %arg9[%c1_147, %c0_148, %c0_149] : memref<2x32x32xf32, #tpu.memory_space<vmem>>, vector<1x32x32xf32>
    %325 = vector.shape_cast %324 : vector<1x32x32xf32> to vector<32x32xf32>
    %cst_150 = arith.constant dense<0.000000e+00> : vector<8x32xf32>
    %326 = tpu.matmul %323, %325, %cst_150 {dimension_numbers = #tpu.dot_dimension_numbers<[1], [0], [0], [1], [0, 0, 1, 1], [], []>} : vector<8x32xf32>, vector<32x32xf32>, vector<8x32xf32> -> vector<8x32xf32>
    %c1_151 = arith.constant 1 : index
    %c0_152 = arith.constant 0 : index
    %c0_153 = arith.constant 0 : index
    %327 = vector.load %arg10[%c1_151, %c0_152, %c0_153] : memref<2x1x32xf32, #tpu.memory_space<vmem>>, vector<1x1x32xf32>
    %328 = vector.shape_cast %327 : vector<1x1x32xf32> to vector<1x32xf32>
    %329 = vector.broadcast %328 : vector<1x32xf32> to vector<8x32xf32>
    %330 = arith.addf %326, %329 : vector<8x32xf32>
    %331 = arith.addf %330, %240 : vector<8x32xf32>
    %c1_154 = arith.constant 1 : index
    %c0_155 = arith.constant 0 : index
    %c0_156 = arith.constant 0 : index
    %332 = vector.load %arg11[%c1_154, %c0_155, %c0_156] : memref<2x1x32xf32, #tpu.memory_space<vmem>>, vector<1x1x32xf32>
    %333 = vector.shape_cast %332 : vector<1x1x32xf32> to vector<1x32xf32>
    %c1_157 = arith.constant 1 : index
    %c0_158 = arith.constant 0 : index
    %c0_159 = arith.constant 0 : index
    %334 = vector.load %arg12[%c1_157, %c0_158, %c0_159] : memref<2x1x32xf32, #tpu.memory_space<vmem>>, vector<1x1x32xf32>
    %335 = vector.shape_cast %334 : vector<1x1x32xf32> to vector<1x32xf32>
    %cst_160 = arith.constant dense<0.000000e+00> : vector<8xf32>
    %336 = vector.multi_reduction <add>, %331, %cst_160 [1] : vector<8x32xf32> to vector<8xf32>
    %337 = vector.shape_cast %336 : vector<8xf32> to vector<8x1xf32>
    %cst_161 = arith.constant 3.200000e+01 : f32
    %338 = vector.broadcast %cst_161 : f32 to vector<8x1xf32>
    %339 = arith.divf %337, %338 : vector<8x1xf32>
    %340 = vector.broadcast %339 : vector<8x1xf32> to vector<8x32xf32>
    %341 = arith.subf %331, %340 : vector<8x32xf32>
    %342 = arith.mulf %341, %341 : vector<8x32xf32>
    %cst_162 = arith.constant dense<0.000000e+00> : vector<8xf32>
    %343 = vector.multi_reduction <add>, %342, %cst_162 [1] : vector<8x32xf32> to vector<8xf32>
    %344 = vector.shape_cast %343 : vector<8xf32> to vector<8x1xf32>
    %cst_163 = arith.constant 3.200000e+01 : f32
    %345 = vector.broadcast %cst_163 : f32 to vector<8x1xf32>
    %346 = arith.divf %344, %345 : vector<8x1xf32>
    %347 = vector.broadcast %339 : vector<8x1xf32> to vector<8x32xf32>
    %348 = arith.subf %331, %347 : vector<8x32xf32>
    %cst_164 = arith.constant 9.99999996E-13 : f32
    %349 = vector.broadcast %cst_164 : f32 to vector<8x1xf32>
    %350 = arith.addf %346, %349 : vector<8x1xf32>
    %351 = math.rsqrt %350 : vector<8x1xf32>
    %352 = vector.broadcast %351 : vector<8x1xf32> to vector<8x32xf32>
    %353 = arith.mulf %348, %352 : vector<8x32xf32>
    %354 = vector.broadcast %333 : vector<1x32xf32> to vector<8x32xf32>
    %355 = arith.mulf %353, %354 : vector<8x32xf32>
    %356 = vector.broadcast %335 : vector<1x32xf32> to vector<8x32xf32>
    %357 = arith.addf %355, %356 : vector<8x32xf32>
    %c1_165 = arith.constant 1 : index
    %c0_166 = arith.constant 0 : index
    %c0_167 = arith.constant 0 : index
    %358 = vector.load %arg13[%c1_165, %c0_166, %c0_167] : memref<2x32x64xf32, #tpu.memory_space<vmem>>, vector<1x32x64xf32>
    %359 = vector.shape_cast %358 : vector<1x32x64xf32> to vector<32x64xf32>
    %cst_168 = arith.constant dense<0.000000e+00> : vector<8x64xf32>
    %360 = tpu.matmul %357, %359, %cst_168 {dimension_numbers = #tpu.dot_dimension_numbers<[1], [0], [0], [1], [0, 0, 1, 1], [], []>} : vector<8x32xf32>, vector<32x64xf32>, vector<8x64xf32> -> vector<8x64xf32>
    %c1_169 = arith.constant 1 : index
    %c0_170 = arith.constant 0 : index
    %c0_171 = arith.constant 0 : index
    %361 = vector.load %arg14[%c1_169, %c0_170, %c0_171] : memref<2x1x64xf32, #tpu.memory_space<vmem>>, vector<1x1x64xf32>
    %362 = vector.shape_cast %361 : vector<1x1x64xf32> to vector<1x64xf32>
    %363 = vector.broadcast %362 : vector<1x64xf32> to vector<8x64xf32>
    %364 = arith.addf %360, %363 : vector<8x64xf32>
    %365 = arith.mulf %364, %364 : vector<8x64xf32>
    %366 = arith.mulf %364, %365 : vector<8x64xf32>
    %cst_172 = arith.constant 4.471500e-02 : f32
    %367 = vector.broadcast %cst_172 : f32 to vector<8x64xf32>
    %368 = arith.mulf %367, %366 : vector<8x64xf32>
    %369 = arith.addf %364, %368 : vector<8x64xf32>
    %cst_173 = arith.constant 0.797884583 : f32
    %370 = vector.broadcast %cst_173 : f32 to vector<8x64xf32>
    %371 = arith.mulf %370, %369 : vector<8x64xf32>
    %372 = math.tanh %371 : vector<8x64xf32>
    %cst_174 = arith.constant 1.000000e+00 : f32
    %373 = vector.broadcast %cst_174 : f32 to vector<8x64xf32>
    %374 = arith.addf %373, %372 : vector<8x64xf32>
    %cst_175 = arith.constant 5.000000e-01 : f32
    %375 = vector.broadcast %cst_175 : f32 to vector<8x64xf32>
    %376 = arith.mulf %375, %374 : vector<8x64xf32>
    %377 = arith.mulf %364, %376 : vector<8x64xf32>
    %c1_176 = arith.constant 1 : index
    %c0_177 = arith.constant 0 : index
    %c0_178 = arith.constant 0 : index
    %378 = vector.load %arg15[%c1_176, %c0_177, %c0_178] : memref<2x64x32xf32, #tpu.memory_space<vmem>>, vector<1x64x32xf32>
    %379 = vector.shape_cast %378 : vector<1x64x32xf32> to vector<64x32xf32>
    %cst_179 = arith.constant dense<0.000000e+00> : vector<8x32xf32>
    %380 = tpu.matmul %377, %379, %cst_179 {dimension_numbers = #tpu.dot_dimension_numbers<[1], [0], [0], [1], [0, 0, 1, 1], [], []>} : vector<8x64xf32>, vector<64x32xf32>, vector<8x32xf32> -> vector<8x32xf32>
    %c1_180 = arith.constant 1 : index
    %c0_181 = arith.constant 0 : index
    %c0_182 = arith.constant 0 : index
    %381 = vector.load %arg16[%c1_180, %c0_181, %c0_182] : memref<2x1x32xf32, #tpu.memory_space<vmem>>, vector<1x1x32xf32>
    %382 = vector.shape_cast %381 : vector<1x1x32xf32> to vector<1x32xf32>
    %383 = vector.broadcast %382 : vector<1x32xf32> to vector<8x32xf32>
    %384 = arith.addf %380, %383 : vector<8x32xf32>
    %385 = arith.addf %384, %357 : vector<8x32xf32>
    %c1_183 = arith.constant 1 : index
    %c0_184 = arith.constant 0 : index
    %c0_185 = arith.constant 0 : index
    %386 = vector.load %arg17[%c1_183, %c0_184, %c0_185] : memref<2x1x32xf32, #tpu.memory_space<vmem>>, vector<1x1x32xf32>
    %387 = vector.shape_cast %386 : vector<1x1x32xf32> to vector<1x32xf32>
    %c1_186 = arith.constant 1 : index
    %c0_187 = arith.constant 0 : index
    %c0_188 = arith.constant 0 : index
    %388 = vector.load %arg18[%c1_186, %c0_187, %c0_188] : memref<2x1x32xf32, #tpu.memory_space<vmem>>, vector<1x1x32xf32>
    %389 = vector.shape_cast %388 : vector<1x1x32xf32> to vector<1x32xf32>
    %cst_189 = arith.constant dense<0.000000e+00> : vector<8xf32>
    %390 = vector.multi_reduction <add>, %385, %cst_189 [1] : vector<8x32xf32> to vector<8xf32>
    %391 = vector.shape_cast %390 : vector<8xf32> to vector<8x1xf32>
    %cst_190 = arith.constant 3.200000e+01 : f32
    %392 = vector.broadcast %cst_190 : f32 to vector<8x1xf32>
    %393 = arith.divf %391, %392 : vector<8x1xf32>
    %394 = vector.broadcast %393 : vector<8x1xf32> to vector<8x32xf32>
    %395 = arith.subf %385, %394 : vector<8x32xf32>
    %396 = arith.mulf %395, %395 : vector<8x32xf32>
    %cst_191 = arith.constant dense<0.000000e+00> : vector<8xf32>
    %397 = vector.multi_reduction <add>, %396, %cst_191 [1] : vector<8x32xf32> to vector<8xf32>
    %398 = vector.shape_cast %397 : vector<8xf32> to vector<8x1xf32>
    %cst_192 = arith.constant 3.200000e+01 : f32
    %399 = vector.broadcast %cst_192 : f32 to vector<8x1xf32>
    %400 = arith.divf %398, %399 : vector<8x1xf32>
    %401 = vector.broadcast %393 : vector<8x1xf32> to vector<8x32xf32>
    %402 = arith.subf %385, %401 : vector<8x32xf32>
    %cst_193 = arith.constant 9.99999996E-13 : f32
    %403 = vector.broadcast %cst_193 : f32 to vector<8x1xf32>
    %404 = arith.addf %400, %403 : vector<8x1xf32>
    %405 = math.rsqrt %404 : vector<8x1xf32>
    %406 = vector.broadcast %405 : vector<8x1xf32> to vector<8x32xf32>
    %407 = arith.mulf %402, %406 : vector<8x32xf32>
    %408 = vector.broadcast %387 : vector<1x32xf32> to vector<8x32xf32>
    %409 = arith.mulf %407, %408 : vector<8x32xf32>
    %410 = vector.broadcast %389 : vector<1x32xf32> to vector<8x32xf32>
    %411 = arith.addf %409, %410 : vector<8x32xf32>
    %412 = vector.extract_strided_slice %411 {offsets = [0, 0], sizes = [1, 32], strides = [1, 1]} : vector<8x32xf32> to vector<1x32xf32>
    %c0_194 = arith.constant 0 : index
    %c0_195 = arith.constant 0 : index
    %413 = vector.load %arg19[%c0_194, %c0_195] : memref<32x128xf32, #tpu.memory_space<vmem>>, vector<32x128xf32>
    %cst_196 = arith.constant dense<0.000000e+00> : vector<1x128xf32>
    %414 = tpu.matmul %412, %413, %cst_196 {dimension_numbers = #tpu.dot_dimension_numbers<[1], [0], [0], [1], [0, 0, 1, 1], [], []>} : vector<1x32xf32>, vector<32x128xf32>, vector<1x128xf32> -> vector<1x128xf32>
    %c0_197 = arith.constant 0 : index
    %c0_198 = arith.constant 0 : index
    %415 = vector.load %arg20[%c0_197, %c0_198] : memref<1x128xf32, #tpu.memory_space<vmem>>, vector<1x128xf32>
    %416 = arith.addf %414, %415 : vector<1x128xf32>
    %417 = tpu.iota {dimensions = array<i32: 1>} : vector<1x128xi32>
    %c5_i32 = arith.constant 5 : i32
    %418 = vector.broadcast %c5_i32 : i32 to vector<1x128xi32>
    %419 = arith.cmpi slt, %417, %418 : vector<1x128xi32>
    %cst_199 = arith.constant -1.000000e+30 : f32
    %420 = vector.broadcast %cst_199 : f32 to vector<1x128xf32>
    %421 = arith.select %419, %416, %420 : vector<1x128xi1>, vector<1x128xf32>
    %cst_200 = arith.constant dense<0xFF800000> : vector<1xf32>
    %422 = vector.multi_reduction <maximumf>, %421, %cst_200 [1] : vector<1x128xf32> to vector<1xf32>
    %423 = vector.shape_cast %422 : vector<1xf32> to vector<1x1xf32>
    %424 = vector.broadcast %423 : vector<1x1xf32> to vector<1x128xf32>
    %425 = arith.subf %421, %424 : vector<1x128xf32>
    %426 = math.exp %425 : vector<1x128xf32>
    %cst_201 = arith.constant dense<0.000000e+00> : vector<1xf32>
    %427 = vector.multi_reduction <add>, %426, %cst_201 [1] : vector<1x128xf32> to vector<1xf32>
    %428 = vector.shape_cast %427 : vector<1xf32> to vector<1x1xf32>
    %429 = vector.broadcast %428 : vector<1x1xf32> to vector<1x128xf32>
    %430 = arith.divf %426, %429 : vector<1x128xf32>
    %c0_202 = arith.constant 0 : index
    %c0_203 = arith.constant 0 : index
    %431 = vector.load %arg21[%c0_202, %c0_203] : memref<1x128xf32, #tpu.memory_space<vmem>>, vector<1x128xf32>
    tpu.vector_store %arg21[%c0_202, %c0_203], %430 {strides = array<i32>} : memref<1x128xf32, #tpu.memory_space<vmem>>, vector<1x128xf32>,
    return
  }
  func.func @transform_0(%arg0: i32, %arg1: memref<8xi32, #tpu.memory_space<smem>>) -> (i32, i32, i32) {
    %c0_i32 = arith.constant 0 : i32
    %c0_i32_0 = arith.constant 0 : i32
    %c0_i32_1 = arith.constant 0 : i32
    %c0_i32_2 = arith.constant 0 : i32
    return %c0_i32, %c0_i32_0, %c0_i32_1 : i32, i32, i32
  }
  func.func @transform_1(%arg0: i32, %arg1: memref<8xi32, #tpu.memory_space<smem>>) -> (i32, i32) {
    %c0_i32 = arith.constant 0 : i32
    %c0_i32_0 = arith.constant 0 : i32
    %c0_i32_1 = arith.constant 0 : i32
    return %c0_i32, %c0_i32_0 : i32, i32
  }
  func.func @transform_2(%arg0: i32, %arg1: memref<8xi32, #tpu.memory_space<smem>>) -> (i32, i32) {
    %c0_i32 = arith.constant 0 : i32
    %c0_i32_0 = arith.constant 0 : i32
    %c0_i32_1 = arith.constant 0 : i32
    return %c0_i32, %c0_i32_0 : i32, i32
  }
  func.func @transform_3(%arg0: i32, %arg1: memref<8xi32, #tpu.memory_space<smem>>) -> (i32, i32) {
    %c0_i32 = arith.constant 0 : i32
    %c0_i32_0 = arith.constant 0 : i32
    %c0_i32_1 = arith.constant 0 : i32
    return %c0_i32, %c0_i32_0 : i32, i32
  }
  func.func @transform_4(%arg0: i32, %arg1: memref<8xi32, #tpu.memory_space<smem>>) -> (i32, i32) {
    %c0_i32 = arith.constant 0 : i32
    %c0_i32_0 = arith.constant 0 : i32
    %c0_i32_1 = arith.constant 0 : i32
    return %c0_i32, %c0_i32_0 : i32, i32
  }
  func.func @transform_5(%arg0: i32, %arg1: memref<8xi32, #tpu.memory_space<smem>>) -> (i32, i32, i32) {
    %c0_i32 = arith.constant 0 : i32
    %c0_i32_0 = arith.constant 0 : i32
    %c0_i32_1 = arith.constant 0 : i32
    %c0_i32_2 = arith.constant 0 : i32
    return %c0_i32, %c0_i32_0, %c0_i32_1 : i32, i32, i32
  }
  func.func @transform_6(%arg0: i32, %arg1: memref<8xi32, #tpu.memory_space<smem>>) -> (i32, i32, i32) {
    %c0_i32 = arith.constant 0 : i32
    %c0_i32_0 = arith.constant 0 : i32
    %c0_i32_1 = arith.constant 0 : i32
    %c0_i32_2 = arith.constant 0 : i32
    return %c0_i32, %c0_i32_0, %c0_i32_1 : i32, i32, i32
  }
  func.func @transform_7(%arg0: i32, %arg1: memref<8xi32, #tpu.memory_space<smem>>) -> (i32, i32, i32) {
    %c0_i32 = arith.constant 0 : i32
    %c0_i32_0 = arith.constant 0 : i32
    %c0_i32_1 = arith.constant 0 : i32
    %c0_i32_2 = arith.constant 0 : i32
    return %c0_i32, %c0_i32_0, %c0_i32_1 : i32, i32, i32
  }
  func.func @transform_8(%arg0: i32, %arg1: memref<8xi32, #tpu.memory_space<smem>>) -> (i32, i32, i32) {
    %c0_i32 = arith.constant 0 : i32
    %c0_i32_0 = arith.constant 0 : i32
    %c0_i32_1 = arith.constant 0 : i32
    %c0_i32_2 = arith.constant 0 : i32
    return %c0_i32, %c0_i32_0, %c0_i32_1 : i32, i32, i32
  }
  func.func @transform_9(%arg0: i32, %arg1: memref<8xi32, #tpu.memory_space<smem>>) -> (i32, i32, i32) {
    %c0_i32 = arith.constant 0 : i32
    %c0_i32_0 = arith.constant 0 : i32
    %c0_i32_1 = arith.constant 0 : i32
    %c0_i32_2 = arith.constant 0 : i32
    return %c0_i32, %c0_i32_0, %c0_i32_1 : i32, i32, i32
  }
  func.func @transform_10(%arg0: i32, %arg1: memref<8xi32, #tpu.memory_space<smem>>) -> (i32, i32, i32) {
    %c0_i32 = arith.constant 0 : i32
    %c0_i32_0 = arith.constant 0 : i32
    %c0_i32_1 = arith.constant 0 : i32
    %c0_i32_2 = arith.constant 0 : i32
    return %c0_i32, %c0_i32_0, %c0_i32_1 : i32, i32, i32
  }
  func.func @transform_11(%arg0: i32, %arg1: memref<8xi32, #tpu.memory_space<smem>>) -> (i32, i32, i32) {
    %c0_i32 = arith.constant 0 : i32
    %c0_i32_0 = arith.constant 0 : i32
    %c0_i32_1 = arith.constant 0 : i32
    %c0_i32_2 = arith.constant 0 : i32
    return %c0_i32, %c0_i32_0, %c0_i32_1 : i32, i32, i32
  }
  func.func @transform_12(%arg0: i32, %arg1: memref<8xi32, #tpu.memory_space<smem>>) -> (i32, i32, i32) {
    %c0_i32 = arith.constant 0 : i32
    %c0_i32_0 = arith.constant 0 : i32
    %c0_i32_1 = arith.constant 0 : i32
    %c0_i32_2 = arith.constant 0 : i32
    return %c0_i32, %c0_i32_0, %c0_i32_1 : i32, i32, i32
  }
  func.func @transform_13(%arg0: i32, %arg1: memref<8xi32, #tpu.memory_space<smem>>) -> (i32, i32, i32) {
    %c0_i32 = arith.constant 0 : i32
    %c0_i32_0 = arith.constant 0 : i32
    %c0_i32_1 = arith.constant 0 : i32
    %c0_i32_2 = arith.constant 0 : i32
    return %c0_i32, %c0_i32_0, %c0_i32_1 : i32, i32, i32
  }
  func.func @transform_14(%arg0: i32, %arg1: memref<8xi32, #tpu.memory_space<smem>>) -> (i32, i32, i32) {
    %c0_i32 = arith.constant 0 : i32
    %c0_i32_0 = arith.constant 0 : i32
    %c0_i32_1 = arith.constant 0 : i32
    %c0_i32_2 = arith.constant 0 : i32
    return %c0_i32, %c0_i32_0, %c0_i32_1 : i32, i32, i32
  }
  func.func @transform_15(%arg0: i32, %arg1: memref<8xi32, #tpu.memory_space<smem>>) -> (i32, i32, i32) {
    %c0_i32 = arith.constant 0 : i32
    %c0_i32_0 = arith.constant 0 : i32
    %c0_i32_1 = arith.constant 0 : i32
    %c0_i32_2 = arith.constant 0 : i32
    return %c0_i32, %c0_i32_0, %c0_i32_1 : i32, i32, i32
  }
  func.func @transform_16(%arg0: i32, %arg1: memref<8xi32, #tpu.memory_space<smem>>) -> (i32, i32, i32) {
    %c0_i32 = arith.constant 0 : i32
    %c0_i32_0 = arith.constant 0 : i32
    %c0_i32_1 = arith.constant 0 : i32
    %c0_i32_2 = arith.constant 0 : i32
    return %c0_i32, %c0_i32_0, %c0_i32_1 : i32, i32, i32
  }
  func.func @transform_17(%arg0: i32, %arg1: memref<8xi32, #tpu.memory_space<smem>>) -> (i32, i32) {
    %c0_i32 = arith.constant 0 : i32
    %c0_i32_0 = arith.constant 0 : i32
    %c0_i32_1 = arith.constant 0 : i32
    return %c0_i32, %c0_i32_0 : i32, i32
  }
  func.func @transform_18(%arg0: i32, %arg1: memref<8xi32, #tpu.memory_space<smem>>) -> (i32, i32) {
    %c0_i32 = arith.constant 0 : i32
    %c0_i32_0 = arith.constant 0 : i32
    %c0_i32_1 = arith.constant 0 : i32
    return %c0_i32, %c0_i32_0 : i32, i32
  }
  func.func @transform_19(%arg0: i32, %arg1: memref<8xi32, #tpu.memory_space<smem>>) -> (i32, i32) {
    %c0_i32 = arith.constant 0 : i32
    %c0_i32_0 = arith.constant 0 : i32
    %c0_i32_1 = arith.constant 0 : i32
    return %c0_i32, %c0_i32_0 : i32, i32
  }
}

</mosaic_0001>

<llo_original>
// kernel: inorganic_ion_classifier_forward.1
$region0: #{inorganic_ion_classifier_forward.1}
  #allocation0 [shape = 'u32[]', space=smem, size = 0x4, offset = 0x4, fixed_abs, tag = 'smem constant byte address 0x4 - core index']
  #allocation1 [shape = 'u32[144,128]{1,0:T(1,128)}', space=vmem, size = 0x12000, scoped, tag = 'internal scratch']
  #allocation2 [shape = 'f32[8,32]{1,0:T(8,128)}', space=vmem, size = 0x1000, scoped, tag = 'scratch operand']
  #allocation3 [shape = 's32[1]{0}', space=sflag, size = 0x4, scoped, tag = 'scoped memory for inorganic_ion_classifier_forward.1']
  #allocation4 [shape = 'u8[512]{0}', space=smem, size = 0x200, scoped, tag = 'prefetched SMEM operand 0']
  %s0 = inlined_call_operand.vmem [shape: s32[8], index: 0, kind: input, shape index: {}]
  %s1 = inlined_call_operand.hbm [shape: f32[30,1,32], index: 1, kind: input, shape index: {}]
  %s2 = inlined_call_operand.hbm [shape: f32[8,32], index: 2, kind: input, shape index: {}]
  %s3 = inlined_call_operand.vmem [shape: f32[1,32], index: 3, kind: input, shape index: {}]
  %s4 = inlined_call_operand.hbm [shape: f32[1,32], index: 4, kind: input, shape index: {}]
  %s5 = inlined_call_operand.hbm [shape: f32[1,32], index: 5, kind: input, shape index: {}]
  %s6 = inlined_call_operand.vmem [shape: f32[2,32,96], index: 6, kind: input, shape index: {}]
  %s7 = inlined_call_operand.hbm [shape: f32[2,1,96], index: 7, kind: input, shape index: {}]
  %s8 = inlined_call_operand.vmem [shape: f32[2,32,32], index: 8, kind: input, shape index: {}]
  %s9 = inlined_call_operand.hbm [shape: f32[2,1,32], index: 9, kind: input, shape index: {}]
  %s10 = inlined_call_operand.hbm [shape: f32[2,1,32], index: 10, kind: input, shape index: {}]
  %s11 = inlined_call_operand.hbm [shape: f32[2,1,32], index: 11, kind: input, shape index: {}]
  %s12 = inlined_call_operand.vmem [shape: f32[2,32,64], index: 12, kind: input, shape index: {}]
  %s13 = inlined_call_operand.hbm [shape: f32[2,1,64], index: 13, kind: input, shape index: {}]
  %s14 = inlined_call_operand.vmem [shape: f32[2,64,32], index: 14, kind: input, shape index: {}]
  %s15 = inlined_call_operand.hbm [shape: f32[2,1,32], index: 15, kind: input, shape index: {}]
  %s16 = inlined_call_operand.hbm [shape: f32[2,1,32], index: 16, kind: input, shape index: {}]
  %s17 = inlined_call_operand.hbm [shape: f32[2,1,32], index: 17, kind: input, shape index: {}]
  %s18 = inlined_call_operand.hbm [shape: f32[32,128], index: 18, kind: input, shape index: {}]
  %s19 = inlined_call_operand.hbm [shape: f32[1,128], index: 19, kind: input, shape index: {}]
  %s20 = inlined_call_operand.hbm [shape: f32[1,128], index: 20, kind: output, shape index: {}]
  %s21 = sld [smem:[#allocation0]]
  $region142: #{inorganic_ion_classifier_forward.1} parent=0
    _
  %s23 = ssub.s32 1, %s21
  %s24 = scalar_select 0, %s23, %s21
  %s25 = sshll.u32 %s0, 4
  %s26 = int_to_ptr.vmem [resolvable:$true] %s25
  %28 = dma.vmem_to_smem %s26, 16, [#allocation4], [#allocation3]
  %29 = dma.done [#allocation3], 16
  %30 = sfence
  $region1: #{inorganic_ion_classifier_forward.1} parent=0
    #allocation5 [shape = 'u8[15360]{0}', space=vmem, size = 0x3c00, scoped, tag = 'input window, operand 1, single buffered']
    #allocation6 [shape = 's32[1]{0}', space=sflag, size = 0x4, scoped, tag = 'scoped memory for inorganic_ion_classifier_forward.1']
    #allocation7 [shape = 's32[1]{0}', space=sflag, size = 0x4, scoped, tag = 'scoped memory for inorganic_ion_classifier_forward.1']
    #allocation8 [shape = 'u8[4096]{0}', space=vmem, size = 0x1000, scoped, tag = 'input window, operand 2, single buffered']
    #allocation9 [shape = 's32[1]{0}', space=sflag, size = 0x4, scoped, tag = 'scoped memory for inorganic_ion_classifier_forward.1']
    #allocation10 [shape = 'u8[512]{0}', space=vmem, size = 0x400, scoped, tag = 'input window, operand 4, single buffered']
    #allocation11 [shape = 'u8[512]{0}', space=vmem, size = 0x400, scoped, tag = 'input window, operand 5, single buffered']
    #allocation12 [shape = 's32[1]{0}', space=sflag, size = 0x4, scoped, tag = 'scoped memory for inorganic_ion_classifier_forward.1']
    #allocation13 [shape = 'u8[1024]{0}', space=vmem, size = 0x400, scoped, tag = 'input window, operand 7, single buffered']
    #allocation14 [shape = 'u8[1024]{0}', space=vmem, size = 0x400, scoped, tag = 'input window, operand 9, single buffered']
    #allocation15 [shape = 's32[1]{0}', space=sflag, size = 0x4, scoped, tag = 'scoped memory for inorganic_ion_classifier_forward.1']
    #allocation16 [shape = 'u8[1024]{0}', space=vmem, size = 0x400, scoped, tag = 'input window, operand 10, single buffered']
    #allocation17 [shape = 'u8[1024]{0}', space=vmem, size = 0x400, scoped, tag = 'input window, operand 11, single buffered']
    #allocation18 [shape = 's32[1]{0}', space=sflag, size = 0x4, scoped, tag = 'scoped memory for inorganic_ion_classifier_forward.1']
    #allocation19 [shape = 'u8[1024]{0}', space=vmem, size = 0x400, scoped, tag = 'input window, operand 13, single buffered']
    #allocation20 [shape = 'u8[1024]{0}', space=vmem, size = 0x400, scoped, tag = 'input window, operand 15, single buffered']
    #allocation21 [shape = 's32[1]{0}', space=sflag, size = 0x4, scoped, tag = 'scoped memory for inorganic_ion_classifier_forward.1']
    #allocation22 [shape = 'u8[1024]{0}', space=vmem, size = 0x400, scoped, tag = 'input window, operand 16, single buffered']
    #allocation23 [shape = 'u8[1024]{0}', space=vmem, size = 0x400, scoped, tag = 'input window, operand 17, single buffered']
    #allocation24 [shape = 's32[1]{0}', space=sflag, size = 0x4, scoped, tag = 'scoped memory for inorganic_ion_classifier_forward.1']
    #allocation25 [shape = 'u8[16384]{0}', space=vmem, size = 0x4000, scoped, tag = 'input window, operand 18, single buffered']
    #allocation26 [shape = 'u8[512]{0}', space=vmem, size = 0x400, scoped, tag = 'input window, operand 19, single buffered']
    #allocation27 [shape = 's32[1]{0}', space=sflag, size = 0x4, scoped, tag = 'scoped memory for inorganic_ion_classifier_forward.1']
    #allocation28 [shape = 'u8[512]{0}', space=vmem, size = 0x400, scoped, tag = 'output window, operand 0, single buffered']
    %31 = vsyncpa [#allocation6], 0
    %32 = vsyncpa [#allocation9], 0
    %33 = vsyncpa [#allocation12], 0
    %34 = vsyncpa [#allocation15], 0
    %35 = vsyncpa [#allocation18], 0
    %36 = vsyncpa [#allocation21], 0
    %37 = vsyncpa [#allocation24], 0
    %38 = vsyncpa [#allocation27], 0
    %39 = vsyncpa [#allocation7], 0
    // Predicated region
    $region2: #{inorganic_ion_classifier_forward.1} parent=1 // pred_check
      _
    $region3: #{inorganic_ion_classifier_forward.1} parent=1 // pred_check_branch
      %41 = sbr.rel (0) target = $region5
    $region4: #{inorganic_ion_classifier_forward.1} parent=1 // pred_region
      %s43 = ssub.s32 480, 480
      %44 = vsyncadd [#allocation6], %s43
      %s45 = sshll.u32 [#allocation5], 4
      %s46 = int_to_ptr.vmem [resolvable:$true] %s45
      %51 = dma.hbm_to_vmem [thread:$0]  %s1, 480, %s46, [#allocation6], 16, 16, 1
    $region5: #{inorganic_ion_classifier_forward.1} parent=1 // pred_fallthru
      _
    // Predicated region
    $region6: #{inorganic_ion_classifier_forward.1} parent=1 // pred_check
      _
    $region7: #{inorganic_ion_classifier_forward.1} parent=1 // pred_check_branch
      %53 = sbr.rel (0) target = $region9
    $region8: #{inorganic_ion_classifier_forward.1} parent=1 // pred_region
      %s55 = ssub.s32 128, 128
      %56 = vsyncadd [#allocation9], %s55
      %s58 = sshll.u32 [#allocation8], 4
      %s59 = int_to_ptr.vmem [resolvable:$true] %s58
      %61 = dma.hbm_to_vmem [thread:$0]  %s2, 128, %s59, [#allocation9]
    $region9: #{inorganic_ion_classifier_forward.1} parent=1 // pred_fallthru
      _
    // Predicated region
    $region10: #{inorganic_ion_classifier_forward.1} parent=1 // pred_check
      _
    $region11: #{inorganic_ion_classifier_forward.1} parent=1 // pred_check_branch
      %63 = sbr.rel (0) target = $region13
    $region12: #{inorganic_ion_classifier_forward.1} parent=1 // pred_region
      _
    $region13: #{inorganic_ion_classifier_forward.1} parent=1 // pred_fallthru
      _
    // Predicated region
    $region14: #{inorganic_ion_classifier_forward.1} parent=1 // pred_check
      _
    $region15: #{inorganic_ion_classifier_forward.1} parent=1 // pred_check_branch
      %65 = sbr.rel (0) target = $region17
    $region16: #{inorganic_ion_classifier_forward.1} parent=1 // pred_region
      %s67 = ssub.s32 16, 16
      %68 = vsyncadd [#allocation9], %s67
      %s70 = sshll.u32 [#allocation10], 4
      %s71 = int_to_ptr.vmem [resolvable:$true] %s70
      %73 = dma.hbm_to_vmem [thread:$0]  %s4, 16, %s71, [#allocation9]
    $region17: #{inorganic_ion_classifier_forward.1} parent=1 // pred_fallthru
      _
    // Predicated region
    $region18: #{inorganic_ion_classifier_forward.1} parent=1 // pred_check
      _
    $region19: #{inorganic_ion_classifier_forward.1} parent=1 // pred_check_branch
      %75 = sbr.rel (0) target = $region21
    $region20: #{inorganic_ion_classifier_forward.1} parent=1 // pred_region
      %s77 = ssub.s32 16, 16
      %78 = vsyncadd [#allocation12], %s77
      %s80 = sshll.u32 [#allocation11], 4
      %s81 = int_to_ptr.vmem [resolvable:$true] %s80
      %83 = dma.hbm_to_vmem [thread:$0]  %s5, 16, %s81, [#allocation12]
    $region21: #{inorganic_ion_classifier_forward.1} parent=1 // pred_fallthru
      _
    // Predicated region
    $region22: #{inorganic_ion_classifier_forward.1} parent=1 // pred_check
      _
    $region23: #{inorganic_ion_classifier_forward.1} parent=1 // pred_check_branch
      %85 = sbr.rel (0) target = $region25
    $region24: #{inorganic_ion_classifier_forward.1} parent=1 // pred_region
      _
    $region25: #{inorganic_ion_classifier_forward.1} parent=1 // pred_fallthru
      _
    // Predicated region
    $region26: #{inorganic_ion_classifier_forward.1} parent=1 // pred_check
      _
    $region27: #{inorganic_ion_classifier_forward.1} parent=1 // pred_check_branch
      %87 = sbr.rel (0) target = $region29
    $region28: #{inorganic_ion_classifier_forward.1} parent=1 // pred_region
      %s89 = ssub.s32 32, 32
      %90 = vsyncadd [#allocation12], %s89
      %s91 = sshll.u32 [#allocation13], 4
      %s92 = int_to_ptr.vmem [resolvable:$true] %s91
      %97 = dma.hbm_to_vmem [thread:$0]  %s7, 32, %s92, [#allocation12], 16, 16, 1
    $region29: #{inorganic_ion_classifier_forward.1} parent=1 // pred_fallthru
      _
    // Predicated region
    $region30: #{inorganic_ion_classifier_forward.1} parent=1 // pred_check
      _
    $region31: #{inorganic_ion_classifier_forward.1} parent=1 // pred_check_branch
      %99 = sbr.rel (0) target = $region33
    $region32: #{inorganic_ion_classifier_forward.1} parent=1 // pred_region
      _
    $region33: #{inorganic_ion_classifier_forward.1} parent=1 // pred_fallthru
      _
    // Predicated region
    $region34: #{inorganic_ion_classifier_forward.1} parent=1 // pred_check
      _
    $region35: #{inorganic_ion_classifier_forward.1} parent=1 // pred_check_branch
      %101 = sbr.rel (0) target = $region37
    $region36: #{inorganic_ion_classifier_forward.1} parent=1 // pred_region
      %s103 = ssub.s32 32, 32
      %104 = vsyncadd [#allocation15], %s103
      %s105 = sshll.u32 [#allocation14], 4
      %s106 = int_to_ptr.vmem [resolvable:$true] %s105
      %111 = dma.hbm_to_vmem [thread:$0]  %s9, 32, %s106, [#allocation15], 16, 16, 1
    $region37: #{inorganic_ion_classifier_forward.1} parent=1 // pred_fallthru
      _
    // Predicated region
    $region38: #{inorganic_ion_classifier_forward.1} parent=1 // pred_check
      _
    $region39: #{inorganic_ion_classifier_forward.1} parent=1 // pred_check_branch
      %113 = sbr.rel (0) target = $region41
    $region40: #{inorganic_ion_classifier_forward.1} parent=1 // pred_region
      %s115 = ssub.s32 32, 32
      %116 = vsyncadd [#allocation15], %s115
      %s117 = sshll.u32 [#allocation16], 4
      %s118 = int_to_ptr.vmem [resolvable:$true] %s117
      %123 = dma.hbm_to_vmem [thread:$0]  %s10, 32, %s118, [#allocation15], 16, 16, 1
    $region41: #{inorganic_ion_classifier_forward.1} parent=1 // pred_fallthru
      _
    // Predicated region
    $region42: #{inorganic_ion_classifier_forward.1} parent=1 // pred_check
      _
    $region43: #{inorganic_ion_classifier_forward.1} parent=1 // pred_check_branch
      %125 = sbr.rel (0) target = $region45
    $region44: #{inorganic_ion_classifier_forward.1} parent=1 // pred_region
      %s127 = ssub.s32 32, 32
      %128 = vsyncadd [#allocation18], %s127
      %s129 = sshll.u32 [#allocation17], 4
      %s130 = int_to_ptr.vmem [resolvable:$true] %s129
      %135 = dma.hbm_to_vmem [thread:$0]  %s11, 32, %s130, [#allocation18], 16, 16, 1
    $region45: #{inorganic_ion_classifier_forward.1} parent=1 // pred_fallthru
      _
    // Predicated region
    $region46: #{inorganic_ion_classifier_forward.1} parent=1 // pred_check
      _
    $region47: #{inorganic_ion_classifier_forward.1} parent=1 // pred_check_branch
      %137 = sbr.rel (0) target = $region49
    $region48: #{inorganic_ion_classifier_forward.1} parent=1 // pred_region
      _
    $region49: #{inorganic_ion_classifier_forward.1} parent=1 // pred_fallthru
      _
    // Predicated region
    $region50: #{inorganic_ion_classifier_forward.1} parent=1 // pred_check
      _
    $region51: #{inorganic_ion_classifier_forward.1} parent=1 // pred_check_branch
      %139 = sbr.rel (0) target = $region53
    $region52: #{inorganic_ion_classifier_forward.1} parent=1 // pred_region
      %s141 = ssub.s32 32, 32
      %142 = vsyncadd [#allocation18], %s141
      %s143 = sshll.u32 [#allocation19], 4
      %s144 = int_to_ptr.vmem [resolvable:$true] %s143
      %149 = dma.hbm_to_vmem [thread:$0]  %s13, 32, %s144, [#allocation18], 16, 16, 1
    $region53: #{inorganic_ion_classifier_forward.1} parent=1 // pred_fallthru
      _
    // Predicated region
    $region54: #{inorganic_ion_classifier_forward.1} parent=1 // pred_check
      _
    $region55: #{inorganic_ion_classifier_forward.1} parent=1 // pred_check_branch
      %151 = sbr.rel (0) target = $region57
    $region56: #{inorganic_ion_classifier_forward.1} parent=1 // pred_region
      _
    $region57: #{inorganic_ion_classifier_forward.1} parent=1 // pred_fallthru
      _
    // Predicated region
    $region58: #{inorganic_ion_classifier_forward.1} parent=1 // pred_check
      _
    $region59: #{inorganic_ion_classifier_forward.1} parent=1 // pred_check_branch
      %153 = sbr.rel (0) target = $region61
    $region60: #{inorganic_ion_classifier_forward.1} parent=1 // pred_region
      %s155 = ssub.s32 32, 32
      %156 = vsyncadd [#allocation21], %s155
      %s157 = sshll.u32 [#allocation20], 4
      %s158 = int_to_ptr.vmem [resolvable:$true] %s157
      %163 = dma.hbm_to_vmem [thread:$0]  %s15, 32, %s158, [#allocation21], 16, 16, 1
    $region61: #{inorganic_ion_classifier_forward.1} parent=1 // pred_fallthru
      _
    // Predicated region
    $region62: #{inorganic_ion_classifier_forward.1} parent=1 // pred_check
      _
    $region63: #{inorganic_ion_classifier_forward.1} parent=1 // pred_check_branch
      %165 = sbr.rel (0) target = $region65
    $region64: #{inorganic_ion_classifier_forward.1} parent=1 // pred_region
      %s167 = ssub.s32 32, 32
      %168 = vsyncadd [#allocation21], %s167
      %s169 = sshll.u32 [#allocation22], 4
      %s170 = int_to_ptr.vmem [resolvable:$true] %s169
      %175 = dma.hbm_to_vmem [thread:$0]  %s16, 32, %s170, [#allocation21], 16, 16, 1
    $region65: #{inorganic_ion_classifier_forward.1} parent=1 // pred_fallthru
      _
    // Predicated region
    $region66: #{inorganic_ion_classifier_forward.1} parent=1 // pred_check
      _
    $region67: #{inorganic_ion_classifier_forward.1} parent=1 // pred_check_branch
      %177 = sbr.rel (0) target = $region69
    $region68: #{inorganic_ion_classifier_forward.1} parent=1 // pred_region
      %s179 = ssub.s32 32, 32
      %180 = vsyncadd [#allocation24], %s179
      %s181 = sshll.u32 [#allocation23], 4
      %s182 = int_to_ptr.vmem [resolvable:$true] %s181
      %187 = dma.hbm_to_vmem [thread:$0]  %s17, 32, %s182, [#allocation24], 16, 16, 1
    $region69: #{inorganic_ion_classifier_forward.1} parent=1 // pred_fallthru
      _
    // Predicated region
    $region70: #{inorganic_ion_classifier_forward.1} parent=1 // pred_check
      _
    $region71: #{inorganic_ion_classifier_forward.1} parent=1 // pred_check_branch
      %189 = sbr.rel (0) target = $region73
    $region72: #{inorganic_ion_classifier_forward.1} parent=1 // pred_region
      %s191 = ssub.s32 512, 512
      %192 = vsyncadd [#allocation24], %s191
      %s193 = sshll.u32 [#allocation25], 4
      %s194 = int_to_ptr.vmem [resolvable:$true] %s193
      %199 = dma.hbm_to_vmem [thread:$0]  %s18, 512, %s194, [#allocation24], 128, 128, 8
    $region73: #{inorganic_ion_classifier_forward.1} parent=1 // pred_fallthru
      _
    // Predicated region
    $region74: #{inorganic_ion_classifier_forward.1} parent=1 // pred_check
      _
    $region75: #{inorganic_ion_classifier_forward.1} parent=1 // pred_check_branch
      %201 = sbr.rel (0) target = $region77
    $region76: #{inorganic_ion_classifier_forward.1} parent=1 // pred_region
      %s203 = ssub.s32 16, 16
      %204 = vsyncadd [#allocation27], %s203
      %s206 = sshll.u32 [#allocation26], 4
      %s207 = int_to_ptr.vmem [resolvable:$true] %s206
      %209 = dma.hbm_to_vmem [thread:$0]  %s19, 16, %s207, [#allocation27]
    $region77: #{inorganic_ion_classifier_forward.1} parent=1 // pred_fallthru
      _
    // Predicated region
    $region78: #{inorganic_ion_classifier_forward.1} parent=1 // pred_check
      _
    $region79: #{inorganic_ion_classifier_forward.1} parent=1 // pred_check_branch
      %211 = sbr.rel (0) target = $region81
    $region80: #{inorganic_ion_classifier_forward.1} parent=1 // pred_region
      %212 = dma.done [#allocation6], 480
    $region81: #{inorganic_ion_classifier_forward.1} parent=1 // pred_fallthru
      _
    // Predicated region
    $region82: #{inorganic_ion_classifier_forward.1} parent=1 // pred_check
      _
    $region83: #{inorganic_ion_classifier_forward.1} parent=1 // pred_check_branch
      %214 = sbr.rel (0) target = $region85
    $region84: #{inorganic_ion_classifier_forward.1} parent=1 // pred_region
      %215 = dma.done [#allocation9], 128
    $region85: #{inorganic_ion_classifier_forward.1} parent=1 // pred_fallthru
      _
    // Predicated region
    $region86: #{inorganic_ion_classifier_forward.1} parent=1 // pred_check
      _
    $region87: #{inorganic_ion_classifier_forward.1} parent=1 // pred_check_branch
      %217 = sbr.rel (0) target = $region89
    $region88: #{inorganic_ion_classifier_forward.1} parent=1 // pred_region
      %218 = dma.done [#allocation9], 16
    $region89: #{inorganic_ion_classifier_forward.1} parent=1 // pred_fallthru
      _
    // Predicated region
    $region90: #{inorganic_ion_classifier_forward.1} parent=1 // pred_check
      _
    $region91: #{inorganic_ion_classifier_forward.1} parent=1 // pred_check_branch
      %220 = sbr.rel (0) target = $region93
    $region92: #{inorganic_ion_classifier_forward.1} parent=1 // pred_region
      %221 = dma.done [#allocation12], 16
    $region93: #{inorganic_ion_classifier_forward.1} parent=1 // pred_fallthru
      _
    // Predicated region
    $region94: #{inorganic_ion_classifier_forward.1} parent=1 // pred_check
      _
    $region95: #{inorganic_ion_classifier_forward.1} parent=1 // pred_check_branch
      %223 = sbr.rel (0) target = $region97
    $region96: #{inorganic_ion_classifier_forward.1} parent=1 // pred_region
      %224 = dma.done [#allocation12], 32
    $region97: #{inorganic_ion_classifier_forward.1} parent=1 // pred_fallthru
      _
    // Predicated region
    $region98: #{inorganic_ion_classifier_forward.1} parent=1 // pred_check
      _
    $region99: #{inorganic_ion_classifier_forward.1} parent=1 // pred_check_branch
      %226 = sbr.rel (0) target = $region101
    $region100: #{inorganic_ion_classifier_forward.1} parent=1 // pred_region
      %227 = dma.done [#allocation15], 32
    $region101: #{inorganic_ion_classifier_forward.1} parent=1 // pred_fallthru
      _
    // Predicated region
    $region102: #{inorganic_ion_classifier_forward.1} parent=1 // pred_check
      _
    $region103: #{inorganic_ion_classifier_forward.1} parent=1 // pred_check_branch
      %229 = sbr.rel (0) target = $region105
    $region104: #{inorganic_ion_classifier_forward.1} parent=1 // pred_region
      %230 = dma.done [#allocation15], 32
    $region105: #{inorganic_ion_classifier_forward.1} parent=1 // pred_fallthru
      _
    // Predicated region
    $region106: #{inorganic_ion_classifier_forward.1} parent=1 // pred_check
      _
    $region107: #{inorganic_ion_classifier_forward.1} parent=1 // pred_check_branch
      %232 = sbr.rel (0) target = $region109
    $region108: #{inorganic_ion_classifier_forward.1} parent=1 // pred_region
      %233 = dma.done [#allocation18], 32
    $region109: #{inorganic_ion_classifier_forward.1} parent=1 // pred_fallthru
      _
    // Predicated region
    $region110: #{inorganic_ion_classifier_forward.1} parent=1 // pred_check
      _
    $region111: #{inorganic_ion_classifier_forward.1} parent=1 // pred_check_branch
      %235 = sbr.rel (0) target = $region113
    $region112: #{inorganic_ion_classifier_forward.1} parent=1 // pred_region
      %236 = dma.done [#allocation18], 32
    $region113: #{inorganic_ion_classifier_forward.1} parent=1 // pred_fallthru
      _
    // Predicated region
    $region114: #{inorganic_ion_classifier_forward.1} parent=1 // pred_check
      _
    $region115: #{inorganic_ion_classifier_forward.1} parent=1 // pred_check_branch
      %238 = sbr.rel (0) target = $region117
    $region116: #{inorganic_ion_classifier_forward.1} parent=1 // pred_region
      %239 = dma.done [#allocation21], 32
    $region117: #{inorganic_ion_classifier_forward.1} parent=1 // pred_fallthru
      _
    // Predicated region
    $region118: #{inorganic_ion_classifier_forward.1} parent=1 // pred_check
      _
    $region119: #{inorganic_ion_classifier_forward.1} parent=1 // pred_check_branch
      %241 = sbr.rel (0) target = $region121
    $region120: #{inorganic_ion_classifier_forward.1} parent=1 // pred_region
      %242 = dma.done [#allocation21], 32
    $region121: #{inorganic_ion_classifier_forward.1} parent=1 // pred_fallthru
      _
    // Predicated region
    $region122: #{inorganic_ion_classifier_forward.1} parent=1 // pred_check
      _
    $region123: #{inorganic_ion_classifier_forward.1} parent=1 // pred_check_branch
      %244 = sbr.rel (0) target = $region125
    $region124: #{inorganic_ion_classifier_forward.1} parent=1 // pred_region
      %245 = dma.done [#allocation24], 32
    $region125: #{inorganic_ion_classifier_forward.1} parent=1 // pred_fallthru
      _
    // Predicated region
    $region126: #{inorganic_ion_classifier_forward.1} parent=1 // pred_check
      _
    $region127: #{inorganic_ion_classifier_forward.1} parent=1 // pred_check_branch
      %247 = sbr.rel (0) target = $region129
    $region128: #{inorganic_ion_classifier_forward.1} parent=1 // pred_region
      %248 = dma.done [#allocation24], 512
    $region129: #{inorganic_ion_classifier_forward.1} parent=1 // pred_fallthru
      _
    // Predicated region
    $region130: #{inorganic_ion_classifier_forward.1} parent=1 // pred_check
      _
    $region131: #{inorganic_ion_classifier_forward.1} parent=1 // pred_check_branch
      %250 = sbr.rel (0) target = $region133
    $region132: #{inorganic_ion_classifier_forward.1} parent=1 // pred_region
      %251 = dma.done [#allocation27], 16
    $region133: #{inorganic_ion_classifier_forward.1} parent=1 // pred_fallthru
      _
    %s252 = sld [smem:[#allocation4]]
    %s253 = scalar_lea.vmem [#allocation5], %s252
    %v254 = vld [vmem:[%s253] sm:$0x1]
    %vm255 = vcmask 253952
    %256 = vst.msk [vmem:[#allocation2] sm:$0x1] %vm255, %v254
    %s257 = sld [smem:[#allocation4 + $0x1]]
    %s258 = scalar_lea.vmem [#allocation5], %s257
    %v259 = vld [vmem:[%s258] sm:$0x1]
    %260 = vst.msk [vmem:[#allocation2 + $0x1] sm:$0x1] %vm255, %v259
    %s261 = sld [smem:[#allocation4 + $0x2]]
    %s262 = scalar_lea.vmem [#allocation5], %s261
    %v263 = vld [vmem:[%s262] sm:$0x1]
    %264 = vst.msk [vmem:[#allocation2 + $0x2] sm:$0x1] %vm255, %v263
    %s265 = sld [smem:[#allocation4 + $0x3]]
    %s266 = scalar_lea.vmem [#allocation5], %s265
    %v267 = vld [vmem:[%s266] sm:$0x1]
    %268 = vst.msk [vmem:[#allocation2 + $0x3] sm:$0x1] %vm255, %v267
    %s269 = sld [smem:[#allocation4 + $0x4]]
    %s270 = scalar_lea.vmem [#allocation5], %s269
    %v271 = vld [vmem:[%s270] sm:$0x1]
    %272 = vst.msk [vmem:[#allocation2 + $0x4] sm:$0x1] %vm255, %v271
    %s273 = sld [smem:[#allocation4 + $0x5]]
    %s274 = scalar_lea.vmem [#allocation5], %s273
    %v275 = vld [vmem:[%s274] sm:$0x1]
    %276 = vst.msk [vmem:[#allocation2 + $0x5] sm:$0x1] %vm255, %v275
    %s277 = sld [smem:[#allocation4 + $0x6]]
    %s278 = scalar_lea.vmem [#allocation5], %s277
    %v279 = vld [vmem:[%s278] sm:$0x1]
    %280 = vst.msk [vmem:[#allocation2 + $0x6] sm:$0x1] %vm255, %v279
    %s281 = sld [smem:[#allocation4 + $0x7]]
    %s282 = scalar_lea.vmem [#allocation5], %s281
    %v283 = vld [vmem:[%s282] sm:$0x1]
    %284 = vst.msk [vmem:[#allocation2 + $0x7] sm:$0x1] %vm255, %v283
    %v285 = vld [vmem:[#allocation2] sm:$0xff]
    %v286 = vld [vmem:[#allocation8] sm:$0xff]
    %v287 = vadd.f32 %v285, %v286
    %v288 = vld [vmem:[%s3] sm:$0x1]
    %v290 = vlaneseq
    %v291 = vshrl.u32 %v290, 7
    %v292 = vsub.s32 0, %v291
    %v293 = vrot.slane %v288, %v292
    %v295 = vadd.f32 %v287, %v293
    %v296 = vld [vmem:[#allocation10] sm:$0x1]
    %v297 = vld [vmem:[#allocation11] sm:$0x1]
    %vm298 = vcmask 261120
    %v299 = vsel %vm298, %v295, 0.0
    %300 = vadd.xlane.f32.xlu0 %v299
    %v301 = vpop.xlane.xlu0 %300
    %v302 = vrcp.pop 32.0
    %v303 = vmul.f32 %v301, %v302
    %v304 = vsub.f32 %v295, %v303
    %v305 = vmul.f32 %v304, %v304
    %v306 = vsel %vm298, %v305, 0.0
    %307 = vadd.xlane.f32.xlu0 %v306
    %v308 = vpop.xlane.xlu0 %307
    %v309 = vmul.f32 %v308, %v302
    %v310 = vadd.f32 %v309, 1e-12
    %v311 = vrsqrt.pop %v310
    %v312 = vmul.f32 %v304, %v311
    %v314 = vlaneseq
    %v315 = vshrl.u32 %v314, 7
    %v316 = vsub.s32 0, %v315
    %v317 = vrot.slane %v296, %v316
    %v319 = vmul.f32 %v312, %v317
    %v321 = vlaneseq
    %v322 = vshrl.u32 %v321, 7
    %v323 = vsub.s32 0, %v322
    %v324 = vrot.slane %v297, %v323
    %v326 = vadd.f32 %v319, %v324
    %v327 = vld [vmem:[%s6] sm:$0xff]
    %v328 = vld [vmem:[%s6 + $0x8] sm:$0xff]
    %v329 = vld [vmem:[%s6 + $0x10] sm:$0xff]
    %v330 = vld [vmem:[%s6 + $0x18] sm:$0xff]
    %v331 = vld [vmem:[#allocation13] sm:$0x1]
    %v333 = vlaneseq
    %v334 = vshrl.u32 %v333, 7
    %v335 = vsub.s32 0, %v334
    %v336 = vrot.slane %v331, %v335
    %v339 = vsel %vm298, %v326, 0
    %341 = vmatprep.subr.mxu0 0.0
    %342 = vmatpush1.msra.mxu0 %v327
    %343 = vmatprep.subr.mxu0 0.0
    %344 = vmatpush1.msra.mxu0 %v328
    %345 = vmatprep.subr.mxu0 0.0
    %346 = vmatpush1.msra.mxu0 %v329
    %347 = vmatprep.subr.mxu0 0.0
    %348 = vmatpush1.msra.mxu0 %v330
    %349 = vmatprep.subr.mxu0 0.0
    %350 = vmatpush1.msra.mxu0 0.0
    %351 = vmatprep.subr.mxu0 0.0
    %352 = vmatpush1.msra.mxu0 0.0
    %353 = vmatprep.subr.mxu0 0.0
    %354 = vmatpush1.msra.mxu0 0.0
    %355 = vmatprep.subr.mxu0 0.0
    %356 = vmatpush1.msra.mxu0 0.0
    %357 = vmatprep.subr.mxu0 0.0
    %358 = vmatpush1.msra.mxu0 0.0
    %359 = vmatprep.subr.mxu0 0.0
    %360 = vmatpush1.msra.mxu0 0.0
    %361 = vmatprep.subr.mxu0 0.0
    %362 = vmatpush1.msra.mxu0 0.0
    %363 = vmatprep.subr.mxu0 0.0
    %364 = vmatpush1.msra.mxu0 0.0
    %365 = vmatprep.subr.mxu0 0.0
    %366 = vmatpush1.msra.mxu0 0.0
    %367 = vmatprep.subr.mxu0 0.0
    %368 = vmatpush1.msra.mxu0 0.0
    %369 = vmatprep.subr.mxu0 0.0
    %370 = vmatpush1.msra.mxu0 0.0
    %371 = vmatprep.subr.mxu0 0.0
    %372 = vmatpush1.msra.mxu0 0.0
    %373 = vmatprep.subr.mxu0 0.0
    %374 = vmatpush1.msra.mxu0 0.0
    %375 = vmatprep.subr.mxu0 0.0
    %376 = vmatpush1.msra.mxu0 0.0
    %377 = vmatprep.subr.mxu0 0.0
    %378 = vmatpush1.msra.mxu0 0.0
    %379 = vmatprep.subr.mxu0 0.0
    %380 = vmatpush1.msra.mxu0 0.0
    %381 = vmatprep.subr.mxu0 0.0
    %382 = vmatpush1.msra.mxu0 0.0
    %383 = vmatprep.subr.mxu0 0.0
    %384 = vmatpush1.msra.mxu0 0.0
    %385 = vmatprep.subr.mxu0 0.0
    %386 = vmatpush1.msra.mxu0 0.0
    %387 = vmatprep.subr.mxu0 0.0
    %388 = vmatpush1.msra.mxu0 0.0
    %389 = vmatprep.subr.mxu0 0.0
    %390 = vmatpush1.msra.mxu0 0.0
    %391 = vmatprep.subr.mxu0 0.0
    %392 = vmatpush1.msra.mxu0 0.0
    %393 = vmatprep.subr.mxu0 0.0
    %394 = vmatpush1.msra.mxu0 0.0
    %395 = vmatprep.subr.mxu0 0.0
    %396 = vmatpush1.msra.mxu0 0.0
    %397 = vmatprep.subr.mxu0 0.0
    %398 = vmatpush1.msra.mxu0 0.0
    %399 = vmatprep.subr.mxu0 0.0
    %400 = vmatpush1.msra.mxu0 0.0
    %401 = vmatprep.subr.mxu0 0.0
    %402 = vmatpush1.msra.mxu0 0.0
    %403 = vmatprep.subr.mxu0 0.0
    %404 = vmatpush1.msra.mxu0 0.0
    %405 = vmatprep.mubr.f32.mxu0 0.0
    %406 = vmatmul.mubr.f32.gmra.mrb[0].mxu0 %v339
    %v407 = vpop.f32.mrb[0].mxu0
    %v408 = vadd.f32 %v336, %v407
    %v409 = vpop.f32.mrb[0].mxu0
    %410 = vdwg.mxu0
    %412 = vrot.lane.b32.xlu0 %v408, 96
    %v413 = vpop.permute.xlu0 %412
    %vm414 = vcmask 64512
    %v415 = vsel %vm414, %v408, 0
    %v417 = vsel %vm414, %v413, 0
    %419 = vmatprep.subr.mxu0 0.0
    %420 = vmatpush1.xpose.msra.mxu0 %v417
    %421 = vmatprep.subr.mxu0 0.0
    %422 = vmatpush1.xpose.msra.mxu0 0.0
    %423 = vmatprep.subr.mxu0 0.0
    %424 = vmatpush1.xpose.msra.mxu0 0.0
    %425 = vmatprep.subr.mxu0 0.0
    %426 = vmatpush1.xpose.msra.mxu0 0.0
    %427 = vmatprep.subr.mxu0 0.0
    %428 = vmatpush1.xpose.msra.mxu0 0.0
    %429 = vmatprep.subr.mxu0 0.0
    %430 = vmatpush1.xpose.msra.mxu0 0.0
    %431 = vmatprep.subr.mxu0 0.0
    %432 = vmatpush1.xpose.msra.mxu0 0.0
    %433 = vmatprep.subr.mxu0 0.0
    %434 = vmatpush1.xpose.msra.mxu0 0.0
    %435 = vmatprep.subr.mxu0 0.0
    %436 = vmatpush1.xpose.msra.mxu0 0.0
    %437 = vmatprep.subr.mxu0 0.0
    %438 = vmatpush1.xpose.msra.mxu0 0.0
    %439 = vmatprep.subr.mxu0 0.0
    %440 = vmatpush1.xpose.msra.mxu0 0.0
    %441 = vmatprep.subr.mxu0 0.0
    %442 = vmatpush1.xpose.msra.mxu0 0.0
    %443 = vmatprep.subr.mxu0 0.0
    %444 = vmatpush1.xpose.msra.mxu0 0.0
    %445 = vmatprep.subr.mxu0 0.0
    %446 = vmatpush1.xpose.msra.mxu0 0.0
    %447 = vmatprep.subr.mxu0 0.0
    %448 = vmatpush1.xpose.msra.mxu0 0.0
    %449 = vmatprep.subr.mxu0 0.0
    %450 = vmatpush1.xpose.msra.mxu0 0.0
    %451 = vmatprep.subr.mxu0 0.0
    %452 = vmatpush1.xpose.msra.mxu0 0.0
    %453 = vmatprep.subr.mxu0 0.0
    %454 = vmatpush1.xpose.msra.mxu0 0.0
    %455 = vmatprep.subr.mxu0 0.0
    %456 = vmatpush1.xpose.msra.mxu0 0.0
    %457 = vmatprep.subr.mxu0 0.0
    %458 = vmatpush1.xpose.msra.mxu0 0.0
    %459 = vmatprep.subr.mxu0 0.0
    %460 = vmatpush1.xpose.msra.mxu0 0.0
    %461 = vmatprep.subr.mxu0 0.0
    %462 = vmatpush1.xpose.msra.mxu0 0.0
    %463 = vmatprep.subr.mxu0 0.0
    %464 = vmatpush1.xpose.msra.mxu0 0.0
    %465 = vmatprep.subr.mxu0 0.0
    %466 = vmatpush1.xpose.msra.mxu0 0.0
    %467 = vmatprep.subr.mxu0 0.0
    %468 = vmatpush1.xpose.msra.mxu0 0.0
    %469 = vmatprep.subr.mxu0 0.0
    %470 = vmatpush1.xpose.msra.mxu0 0.0
    %471 = vmatprep.subr.mxu0 0.0
    %472 = vmatpush1.xpose.msra.mxu0 0.0
    %473 = vmatprep.subr.mxu0 0.0
    %474 = vmatpush1.xpose.msra.mxu0 0.0
    %475 = vmatprep.subr.mxu0 0.0
    %476 = vmatpush1.xpose.msra.mxu0 0.0
    %477 = vmatprep.subr.mxu0 0.0
    %478 = vmatpush1.xpose.msra.mxu0 0.0
    %479 = vmatprep.subr.mxu0 0.0
    %480 = vmatpush1.xpose.msra.mxu0 0.0
    %481 = vmatprep.subr.mxu0 0.0
    %482 = vmatpush1.xpose.msra.mxu0 0.0
    %483 = vmatprep.mubr.f32.mxu0 0.0
    %484 = vmatmul.mubr.f32.gmra.mrb[0].mxu0 %v415
    %v485 = vpop.f32.mrb[0].mxu0
    %v486 = vadd.f32 0.0, %v485
    %v487 = vpop.f32.mrb[0].mxu0
    %488 = vdwg.mxu0
    %v489 = vmul.f32 %v486, 0.35355338
    %v490 = vsel %vm414, %v489, -inf
    %491 = vmax.xlane.f32.xlu0 %v490
    %v492 = vpop.xlane.xlu0 %491
    %v493 = vsub.f32 %v489, %v492
    %v494 = vmul.f32 %v493, 1.442695
    %v495 = vpow.pop %v494
    %v496 = vsel %vm414, %v495, 0.0
    %497 = vadd.xlane.f32.xlu0 %v496
    %v498 = vpop.xlane.xlu0 %497
    %v499 = vrcp.pop %v498
    %v500 = vmul.f32 %v495, %v499
    %501 = vrot.lane.b32.xlu0 %v408, 64
    %v502 = vpop.permute.xlu0 %501
    %v505 = vsel %vm414, %v500, 0
    %507 = vmatprep.subr.mxu0 0.0
    %508 = vmatpush1.msra.mxu0 %v502
    %509 = vmatprep.subr.mxu0 0.0
    %510 = vmatpush1.msra.mxu0 0.0
    %511 = vmatprep.subr.mxu0 0.0
    %512 = vmatpush1.msra.mxu0 0.0
    %513 = vmatprep.subr.mxu0 0.0
    %514 = vmatpush1.msra.mxu0 0.0
    %515 = vmatprep.subr.mxu0 0.0
    %516 = vmatpush1.msra.mxu0 0.0
    %517 = vmatprep.subr.mxu0 0.0
    %518 = vmatpush1.msra.mxu0 0.0
    %519 = vmatprep.subr.mxu0 0.0
    %520 = vmatpush1.msra.mxu0 0.0
    %521 = vmatprep.subr.mxu0 0.0
    %522 = vmatpush1.msra.mxu0 0.0
    %523 = vmatprep.subr.mxu0 0.0
    %524 = vmatpush1.msra.mxu0 0.0
    %525 = vmatprep.subr.mxu0 0.0
    %526 = vmatpush1.msra.mxu0 0.0
    %527 = vmatprep.subr.mxu0 0.0
    %528 = vmatpush1.msra.mxu0 0.0
    %529 = vmatprep.subr.mxu0 0.0
    %530 = vmatpush1.msra.mxu0 0.0
    %531 = vmatprep.subr.mxu0 0.0
    %532 = vmatpush1.msra.mxu0 0.0
    %533 = vmatprep.subr.mxu0 0.0
    %534 = vmatpush1.msra.mxu0 0.0
    %535 = vmatprep.subr.mxu0 0.0
    %536 = vmatpush1.msra.mxu0 0.0
    %537 = vmatprep.subr.mxu0 0.0
    %538 = vmatpush1.msra.mxu0 0.0
    %539 = vmatprep.subr.mxu0 0.0
    %540 = vmatpush1.msra.mxu0 0.0
    %541 = vmatprep.subr.mxu0 0.0
    %542 = vmatpush1.msra.mxu0 0.0
    %543 = vmatprep.subr.mxu0 0.0
    %544 = vmatpush1.msra.mxu0 0.0
    %545 = vmatprep.subr.mxu0 0.0
    %546 = vmatpush1.msra.mxu0 0.0
    %547 = vmatprep.subr.mxu0 0.0
    %548 = vmatpush1.msra.mxu0 0.0
    %549 = vmatprep.subr.mxu0 0.0
    %550 = vmatpush1.msra.mxu0 0.0
    %551 = vmatprep.subr.mxu0 0.0
    %552 = vmatpush1.msra.mxu0 0.0
    %553 = vmatprep.subr.mxu0 0.0
    %554 = vmatpush1.msra.mxu0 0.0
    %555 = vmatprep.subr.mxu0 0.0
    %556 = vmatpush1.msra.mxu0 0.0
    %557 = vmatprep.subr.mxu0 0.0
    %558 = vmatpush1.msra.mxu0 0.0
    %559 = vmatprep.subr.mxu0 0.0
    %560 = vmatpush1.msra.mxu0 0.0
    %561 = vmatprep.subr.mxu0 0.0
    %562 = vmatpush1.msra.mxu0 0.0
    %563 = vmatprep.subr.mxu0 0.0
    %564 = vmatpush1.msra.mxu0 0.0
    %565 = vmatprep.subr.mxu0 0.0
    %566 = vmatpush1.msra.mxu0 0.0
    %567 = vmatprep.subr.mxu0 0.0
    %568 = vmatpush1.msra.mxu0 0.0
    %569 = vmatprep.subr.mxu0 0.0
    %570 = vmatpush1.msra.mxu0 0.0
    %571 = vmatprep.mubr.f32.mxu0 0.0
    %572 = vmatmul.mubr.f32.gmra.mrb[0].mxu0 %v505
    %v573 = vpop.f32.mrb[0].mxu0
    %v574 = vadd.f32 0.0, %v573
    %v575 = vpop.f32.mrb[0].mxu0
    %576 = vdwg.mxu0
    %577 = vrot.lane.b32.xlu0 %v408, 120
    %v578 = vpop.permute.xlu0 %577
    %579 = vrot.lane.b32.xlu0 %v408, 88
    %v580 = vpop.permute.xlu0 %579
    %v581 = vsel %vm414, %v578, 0
    %v583 = vsel %vm414, %v580, 0
    %585 = vmatprep.subr.mxu0 0.0
    %586 = vmatpush1.xpose.msra.mxu0 %v583
    %587 = vmatprep.subr.mxu0 0.0
    %588 = vmatpush1.xpose.msra.mxu0 0.0
    %589 = vmatprep.subr.mxu0 0.0
    %590 = vmatpush1.xpose.msra.mxu0 0.0
    %591 = vmatprep.subr.mxu0 0.0
    %592 = vmatpush1.xpose.msra.mxu0 0.0
    %593 = vmatprep.subr.mxu0 0.0
    %594 = vmatpush1.xpose.msra.mxu0 0.0
    %595 = vmatprep.subr.mxu0 0.0
    %596 = vmatpush1.xpose.msra.mxu0 0.0
    %597 = vmatprep.subr.mxu0 0.0
    %598 = vmatpush1.xpose.msra.mxu0 0.0
    %599 = vmatprep.subr.mxu0 0.0
    %600 = vmatpush1.xpose.msra.mxu0 0.0
    %601 = vmatprep.subr.mxu0 0.0
    %602 = vmatpush1.xpose.msra.mxu0 0.0
    %603 = vmatprep.subr.mxu0 0.0
    %604 = vmatpush1.xpose.msra.mxu0 0.0
    %605 = vmatprep.subr.mxu0 0.0
    %606 = vmatpush1.xpose.msra.mxu0 0.0
    %607 = vmatprep.subr.mxu0 0.0
    %608 = vmatpush1.xpose.msra.mxu0 0.0
    %609 = vmatprep.subr.mxu0 0.0
    %610 = vmatpush1.xpose.msra.mxu0 0.0
    %611 = vmatprep.subr.mxu0 0.0
    %612 = vmatpush1.xpose.msra.mxu0 0.0
    %613 = vmatprep.subr.mxu0 0.0
    %614 = vmatpush1.xpose.msra.mxu0 0.0
    %615 = vmatprep.subr.mxu0 0.0
    %616 = vmatpush1.xpose.msra.mxu0 0.0
    %617 = vmatprep.subr.mxu0 0.0
    %618 = vmatpush1.xpose.msra.mxu0 0.0
    %619 = vmatprep.subr.mxu0 0.0
    %620 = vmatpush1.xpose.msra.mxu0 0.0
    %621 = vmatprep.subr.mxu0 0.0
    %622 = vmatpush1.xpose.msra.mxu0 0.0
    %623 = vmatprep.subr.mxu0 0.0
    %624 = vmatpush1.xpose.msra.mxu0 0.0
    %625 = vmatprep.subr.mxu0 0.0
    %626 = vmatpush1.xpose.msra.mxu0 0.0
    %627 = vmatprep.subr.mxu0 0.0
    %628 = vmatpush1.xpose.msra.mxu0 0.0
    %629 = vmatprep.subr.mxu0 0.0
    %630 = vmatpush1.xpose.msra.mxu0 0.0
    %631 = vmatprep.subr.mxu0 0.0
    %632 = vmatpush1.xpose.msra.mxu0 0.0
    %633 = vmatprep.subr.mxu0 0.0
    %634 = vmatpush1.xpose.msra.mxu0 0.0
    %635 = vmatprep.subr.mxu0 0.0
    %636 = vmatpush1.xpose.msra.mxu0 0.0
    %637 = vmatprep.subr.mxu0 0.0
    %638 = vmatpush1.xpose.msra.mxu0 0.0
    %639 = vmatprep.subr.mxu0 0.0
    %640 = vmatpush1.xpose.msra.mxu0 0.0
    %641 = vmatprep.subr.mxu0 0.0
    %642 = vmatpush1.xpose.msra.mxu0 0.0
    %643 = vmatprep.subr.mxu0 0.0
    %644 = vmatpush1.xpose.msra.mxu0 0.0
    %645 = vmatprep.subr.mxu0 0.0
    %646 = vmatpush1.xpose.msra.mxu0 0.0
    %647 = vmatprep.subr.mxu0 0.0
    %648 = vmatpush1.xpose.msra.mxu0 0.0
    %649 = vmatprep.mubr.f32.mxu0 0.0
    %650 = vmatmul.mubr.f32.gmra.mrb[0].mxu0 %v581
    %v651 = vpop.f32.mrb[0].mxu0
    %v652 = vadd.f32 0.0, %v651
    %v653 = vpop.f32.mrb[0].mxu0
    %654 = vdwg.mxu0
    %v655 = vmul.f32 %v652, 0.35355338
    %v656 = vsel %vm414, %v655, -inf
    %657 = vmax.xlane.f32.xlu0 %v656
    %v658 = vpop.xlane.xlu0 %657
    %v659 = vsub.f32 %v655, %v658
    %v660 = vmul.f32 %v659, 1.442695
    %v661 = vpow.pop %v660
    %v662 = vsel %vm414, %v661, 0.0
    %663 = vadd.xlane.f32.xlu0 %v662
    %v664 = vpop.xlane.xlu0 %663
    %v665 = vrcp.pop %v664
    %v666 = vmul.f32 %v661, %v665
    %667 = vrot.lane.b32.xlu0 %v408, 56
    %v668 = vpop.permute.xlu0 %667
    %v671 = vsel %vm414, %v666, 0
    %673 = vmatprep.subr.mxu0 0.0
    %674 = vmatpush1.msra.mxu0 %v668
    %675 = vmatprep.subr.mxu0 0.0
    %676 = vmatpush1.msra.mxu0 0.0
    %677 = vmatprep.subr.mxu0 0.0
    %678 = vmatpush1.msra.mxu0 0.0
    %679 = vmatprep.subr.mxu0 0.0
    %680 = vmatpush1.msra.mxu0 0.0
    %681 = vmatprep.subr.mxu0 0.0
    %682 = vmatpush1.msra.mxu0 0.0
    %683 = vmatprep.subr.mxu0 0.0
    %684 = vmatpush1.msra.mxu0 0.0
    %685 = vmatprep.subr.mxu0 0.0
    %686 = vmatpush1.msra.mxu0 0.0
    %687 = vmatprep.subr.mxu0 0.0
    %688 = vmatpush1.msra.mxu0 0.0
    %689 = vmatprep.subr.mxu0 0.0
    %690 = vmatpush1.msra.mxu0 0.0
    %691 = vmatprep.subr.mxu0 0.0
    %692 = vmatpush1.msra.mxu0 0.0
    %693 = vmatprep.subr.mxu0 0.0
    %694 = vmatpush1.msra.mxu0 0.0
    %695 = vmatprep.subr.mxu0 0.0
    %696 = vmatpush1.msra.mxu0 0.0
    %697 = vmatprep.subr.mxu0 0.0
    %698 = vmatpush1.msra.mxu0 0.0
    %699 = vmatprep.subr.mxu0 0.0
    %700 = vmatpush1.msra.mxu0 0.0
    %701 = vmatprep.subr.mxu0 0.0
    %702 = vmatpush1.msra.mxu0 0.0
    %703 = vmatprep.subr.mxu0 0.0
    %704 = vmatpush1.msra.mxu0 0.0
    %705 = vmatprep.subr.mxu0 0.0
    %706 = vmatpush1.msra.mxu0 0.0
    %707 = vmatprep.subr.mxu0 0.0
    %708 = vmatpush1.msra.mxu0 0.0
    %709 = vmatprep.subr.mxu0 0.0
    %710 = vmatpush1.msra.mxu0 0.0
    %711 = vmatprep.subr.mxu0 0.0
    %712 = vmatpush1.msra.mxu0 0.0
    %713 = vmatprep.subr.mxu0 0.0
    %714 = vmatpush1.msra.mxu0 0.0
    %715 = vmatprep.subr.mxu0 0.0
    %716 = vmatpush1.msra.mxu0 0.0
    %717 = vmatprep.subr.mxu0 0.0
    %718 = vmatpush1.msra.mxu0 0.0
    %719 = vmatprep.subr.mxu0 0.0
    %720 = vmatpush1.msra.mxu0 0.0
    %721 = vmatprep.subr.mxu0 0.0
    %722 = vmatpush1.msra.mxu0 0.0
    %723 = vmatprep.subr.mxu0 0.0
    %724 = vmatpush1.msra.mxu0 0.0
    %725 = vmatprep.subr.mxu0 0.0
    %726 = vmatpush1.msra.mxu0 0.0
    %727 = vmatprep.subr.mxu0 0.0
    %728 = vmatpush1.msra.mxu0 0.0
    %729 = vmatprep.subr.mxu0 0.0
    %730 = vmatpush1.msra.mxu0 0.0
    %731 = vmatprep.subr.mxu0 0.0
    %732 = vmatpush1.msra.mxu0 0.0
    %733 = vmatprep.subr.mxu0 0.0
    %734 = vmatpush1.msra.mxu0 0.0
    %735 = vmatprep.subr.mxu0 0.0
    %736 = vmatpush1.msra.mxu0 0.0
    %737 = vmatprep.mubr.f32.mxu0 0.0
    %738 = vmatmul.mubr.f32.gmra.mrb[0].mxu0 %v671
    %v739 = vpop.f32.mrb[0].mxu0
    %v740 = vadd.f32 0.0, %v739
    %v741 = vpop.f32.mrb[0].mxu0
    %742 = vdwg.mxu0
    %743 = vrot.lane.b32.xlu0 %v408, 112
    %v744 = vpop.permute.xlu0 %743
    %745 = vrot.lane.b32.xlu0 %v408, 80
    %v746 = vpop.permute.xlu0 %745
    %v747 = vsel %vm414, %v744, 0
    %v749 = vsel %vm414, %v746, 0
    %751 = vmatprep.subr.mxu0 0.0
    %752 = vmatpush1.xpose.msra.mxu0 %v749
    %753 = vmatprep.subr.mxu0 0.0
    %754 = vmatpush1.xpose.msra.mxu0 0.0
    %755 = vmatprep.subr.mxu0 0.0
    %756 = vmatpush1.xpose.msra.mxu0 0.0
    %757 = vmatprep.subr.mxu0 0.0
    %758 = vmatpush1.xpose.msra.mxu0 0.0
    %759 = vmatprep.subr.mxu0 0.0
    %760 = vmatpush1.xpose.msra.mxu0 0.0
    %761 = vmatprep.subr.mxu0 0.0
    %762 = vmatpush1.xpose.msra.mxu0 0.0
    %763 = vmatprep.subr.mxu0 0.0
    %764 = vmatpush1.xpose.msra.mxu0 0.0
    %765 = vmatprep.subr.mxu0 0.0
    %766 = vmatpush1.xpose.msra.mxu0 0.0
    %767 = vmatprep.subr.mxu0 0.0
    %768 = vmatpush1.xpose.msra.mxu0 0.0
    %769 = vmatprep.subr.mxu0 0.0
    %770 = vmatpush1.xpose.msra.mxu0 0.0
    %771 = vmatprep.subr.mxu0 0.0
    %772 = vmatpush1.xpose.msra.mxu0 0.0
    %773 = vmatprep.subr.mxu0 0.0
    %774 = vmatpush1.xpose.msra.mxu0 0.0
    %775 = vmatprep.subr.mxu0 0.0
    %776 = vmatpush1.xpose.msra.mxu0 0.0
    %777 = vmatprep.subr.mxu0 0.0
    %778 = vmatpush1.xpose.msra.mxu0 0.0
    %779 = vmatprep.subr.mxu0 0.0
    %780 = vmatpush1.xpose.msra.mxu0 0.0
    %781 = vmatprep.subr.mxu0 0.0
    %782 = vmatpush1.xpose.msra.mxu0 0.0
    %783 = vmatprep.subr.mxu0 0.0
    %784 = vmatpush1.xpose.msra.mxu0 0.0
    %785 = vmatprep.subr.mxu0 0.0
    %786 = vmatpush1.xpose.msra.mxu0 0.0
    %787 = vmatprep.subr.mxu0 0.0
    %788 = vmatpush1.xpose.msra.mxu0 0.0
    %789 = vmatprep.subr.mxu0 0.0
    %790 = vmatpush1.xpose.msra.mxu0 0.0
    %791 = vmatprep.subr.mxu0 0.0
    %792 = vmatpush1.xpose.msra.mxu0 0.0
    %793 = vmatprep.subr.mxu0 0.0
    %794 = vmatpush1.xpose.msra.mxu0 0.0
    %795 = vmatprep.subr.mxu0 0.0
    %796 = vmatpush1.xpose.msra.mxu0 0.0
    %797 = vmatprep.subr.mxu0 0.0
    %798 = vmatpush1.xpose.msra.mxu0 0.0
    %799 = vmatprep.subr.mxu0 0.0
    %800 = vmatpush1.xpose.msra.mxu0 0.0
    %801 = vmatprep.subr.mxu0 0.0
    %802 = vmatpush1.xpose.msra.mxu0 0.0
    %803 = vmatprep.subr.mxu0 0.0
    %804 = vmatpush1.xpose.msra.mxu0 0.0
    %805 = vmatprep.subr.mxu0 0.0
    %806 = vmatpush1.xpose.msra.mxu0 0.0
    %807 = vmatprep.subr.mxu0 0.0
    %808 = vmatpush1.xpose.msra.mxu0 0.0
    %809 = vmatprep.subr.mxu0 0.0
    %810 = vmatpush1.xpose.msra.mxu0 0.0
    %811 = vmatprep.subr.mxu0 0.0
    %812 = vmatpush1.xpose.msra.mxu0 0.0
    %813 = vmatprep.subr.mxu0 0.0
    %814 = vmatpush1.xpose.msra.mxu0 0.0
    %815 = vmatprep.mubr.f32.mxu0 0.0
    %816 = vmatmul.mubr.f32.gmra.mrb[0].mxu0 %v747
    %v817 = vpop.f32.mrb[0].mxu0
    %v818 = vadd.f32 0.0, %v817
    %v819 = vpop.f32.mrb[0].mxu0
    %820 = vdwg.mxu0
    %v821 = vmul.f32 %v818, 0.35355338
    %v822 = vsel %vm414, %v821, -inf
    %823 = vmax.xlane.f32.xlu0 %v822
    %v824 = vpop.xlane.xlu0 %823
    %v825 = vsub.f32 %v821, %v824
    %v826 = vmul.f32 %v825, 1.442695
    %v827 = vpow.pop %v826
    %v828 = vsel %vm414, %v827, 0.0
    %829 = vadd.xlane.f32.xlu0 %v828
    %v830 = vpop.xlane.xlu0 %829
    %v831 = vrcp.pop %v830
    %v832 = vmul.f32 %v827, %v831
    %833 = vrot.lane.b32.xlu0 %v408, 48
    %v834 = vpop.permute.xlu0 %833
    %v837 = vsel %vm414, %v832, 0
    %839 = vmatprep.subr.mxu0 0.0
    %840 = vmatpush1.msra.mxu0 %v834
    %841 = vmatprep.subr.mxu0 0.0
    %842 = vmatpush1.msra.mxu0 0.0
    %843 = vmatprep.subr.mxu0 0.0
    %844 = vmatpush1.msra.mxu0 0.0
    %845 = vmatprep.subr.mxu0 0.0
    %846 = vmatpush1.msra.mxu0 0.0
    %847 = vmatprep.subr.mxu0 0.0
    %848 = vmatpush1.msra.mxu0 0.0
    %849 = vmatprep.subr.mxu0 0.0
    %850 = vmatpush1.msra.mxu0 0.0
    %851 = vmatprep.subr.mxu0 0.0
    %852 = vmatpush1.msra.mxu0 0.0
    %853 = vmatprep.subr.mxu0 0.0
    %854 = vmatpush1.msra.mxu0 0.0
    %855 = vmatprep.subr.mxu0 0.0
    %856 = vmatpush1.msra.mxu0 0.0
    %857 = vmatprep.subr.mxu0 0.0
    %858 = vmatpush1.msra.mxu0 0.0
    %859 = vmatprep.subr.mxu0 0.0
    %860 = vmatpush1.msra.mxu0 0.0
    %861 = vmatprep.subr.mxu0 0.0
    %862 = vmatpush1.msra.mxu0 0.0
    %863 = vmatprep.subr.mxu0 0.0
    %864 = vmatpush1.msra.mxu0 0.0
    %865 = vmatprep.subr.mxu0 0.0
    %866 = vmatpush1.msra.mxu0 0.0
    %867 = vmatprep.subr.mxu0 0.0
    %868 = vmatpush1.msra.mxu0 0.0
    %869 = vmatprep.subr.mxu0 0.0
    %870 = vmatpush1.msra.mxu0 0.0
    %871 = vmatprep.subr.mxu0 0.0
    %872 = vmatpush1.msra.mxu0 0.0
    %873 = vmatprep.subr.mxu0 0.0
    %874 = vmatpush1.msra.mxu0 0.0
    %875 = vmatprep.subr.mxu0 0.0
    %876 = vmatpush1.msra.mxu0 0.0
    %877 = vmatprep.subr.mxu0 0.0
    %878 = vmatpush1.msra.mxu0 0.0
    %879 = vmatprep.subr.mxu0 0.0
    %880 = vmatpush1.msra.mxu0 0.0
    %881 = vmatprep.subr.mxu0 0.0
    %882 = vmatpush1.msra.mxu0 0.0
    %883 = vmatprep.subr.mxu0 0.0
    %884 = vmatpush1.msra.mxu0 0.0
    %885 = vmatprep.subr.mxu0 0.0
    %886 = vmatpush1.msra.mxu0 0.0
    %887 = vmatprep.subr.mxu0 0.0
    %888 = vmatpush1.msra.mxu0 0.0
    %889 = vmatprep.subr.mxu0 0.0
    %890 = vmatpush1.msra.mxu0 0.0
    %891 = vmatprep.subr.mxu0 0.0
    %892 = vmatpush1.msra.mxu0 0.0
    %893 = vmatprep.subr.mxu0 0.0
    %894 = vmatpush1.msra.mxu0 0.0
    %895 = vmatprep.subr.mxu0 0.0
    %896 = vmatpush1.msra.mxu0 0.0
    %897 = vmatprep.subr.mxu0 0.0
    %898 = vmatpush1.msra.mxu0 0.0
    %899 = vmatprep.subr.mxu0 0.0
    %900 = vmatpush1.msra.mxu0 0.0
    %901 = vmatprep.subr.mxu0 0.0
    %902 = vmatpush1.msra.mxu0 0.0
    %903 = vmatprep.mubr.f32.mxu0 0.0
    %904 = vmatmul.mubr.f32.gmra.mrb[0].mxu0 %v837
    %v905 = vpop.f32.mrb[0].mxu0
    %v906 = vadd.f32 0.0, %v905
    %v907 = vpop.f32.mrb[0].mxu0
    %908 = vdwg.mxu0
    %909 = vrot.lane.b32.xlu0 %v408, 104
    %v910 = vpop.permute.xlu0 %909
    %911 = vrot.lane.b32.xlu0 %v408, 72
    %v912 = vpop.permute.xlu0 %911
    %v913 = vsel %vm414, %v910, 0
    %v915 = vsel %vm414, %v912, 0
    %917 = vmatprep.subr.mxu0 0.0
    %918 = vmatpush1.xpose.msra.mxu0 %v915
    %919 = vmatprep.subr.mxu0 0.0
    %920 = vmatpush1.xpose.msra.mxu0 0.0
    %921 = vmatprep.subr.mxu0 0.0
    %922 = vmatpush1.xpose.msra.mxu0 0.0
    %923 = vmatprep.subr.mxu0 0.0
    %924 = vmatpush1.xpose.msra.mxu0 0.0
    %925 = vmatprep.subr.mxu0 0.0
    %926 = vmatpush1.xpose.msra.mxu0 0.0
    %927 = vmatprep.subr.mxu0 0.0
    %928 = vmatpush1.xpose.msra.mxu0 0.0
    %929 = vmatprep.subr.mxu0 0.0
    %930 = vmatpush1.xpose.msra.mxu0 0.0
    %931 = vmatprep.subr.mxu0 0.0
    %932 = vmatpush1.xpose.msra.mxu0 0.0
    %933 = vmatprep.subr.mxu0 0.0
    %934 = vmatpush1.xpose.msra.mxu0 0.0
    %935 = vmatprep.subr.mxu0 0.0
    %936 = vmatpush1.xpose.msra.mxu0 0.0
    %937 = vmatprep.subr.mxu0 0.0
    %938 = vmatpush1.xpose.msra.mxu0 0.0
    %939 = vmatprep.subr.mxu0 0.0
    %940 = vmatpush1.xpose.msra.mxu0 0.0
    %941 = vmatprep.subr.mxu0 0.0
    %942 = vmatpush1.xpose.msra.mxu0 0.0
    %943 = vmatprep.subr.mxu0 0.0
    %944 = vmatpush1.xpose.msra.mxu0 0.0
    %945 = vmatprep.subr.mxu0 0.0
    %946 = vmatpush1.xpose.msra.mxu0 0.0
    %947 = vmatprep.subr.mxu0 0.0
    %948 = vmatpush1.xpose.msra.mxu0 0.0
    %949 = vmatprep.subr.mxu0 0.0
    %950 = vmatpush1.xpose.msra.mxu0 0.0
    %951 = vmatprep.subr.mxu0 0.0
    %952 = vmatpush1.xpose.msra.mxu0 0.0
    %953 = vmatprep.subr.mxu0 0.0
    %954 = vmatpush1.xpose.msra.mxu0 0.0
    %955 = vmatprep.subr.mxu0 0.0
    %956 = vmatpush1.xpose.msra.mxu0 0.0
    %957 = vmatprep.subr.mxu0 0.0
    %958 = vmatpush1.xpose.msra.mxu0 0.0
    %959 = vmatprep.subr.mxu0 0.0
    %960 = vmatpush1.xpose.msra.mxu0 0.0
    %961 = vmatprep.subr.mxu0 0.0
    %962 = vmatpush1.xpose.msra.mxu0 0.0
    %963 = vmatprep.subr.mxu0 0.0
    %964 = vmatpush1.xpose.msra.mxu0 0.0
    %965 = vmatprep.subr.mxu0 0.0
    %966 = vmatpush1.xpose.msra.mxu0 0.0
    %967 = vmatprep.subr.mxu0 0.0
    %968 = vmatpush1.xpose.msra.mxu0 0.0
    %969 = vmatprep.subr.mxu0 0.0
    %970 = vmatpush1.xpose.msra.mxu0 0.0
    %971 = vmatprep.subr.mxu0 0.0
    %972 = vmatpush1.xpose.msra.mxu0 0.0
    %973 = vmatprep.subr.mxu0 0.0
    %974 = vmatpush1.xpose.msra.mxu0 0.0
    %975 = vmatprep.subr.mxu0 0.0
    %976 = vmatpush1.xpose.msra.mxu0 0.0
    %977 = vmatprep.subr.mxu0 0.0
    %978 = vmatpush1.xpose.msra.mxu0 0.0
    %979 = vmatprep.subr.mxu0 0.0
    %980 = vmatpush1.xpose.msra.mxu0 0.0
    %981 = vmatprep.mubr.f32.mxu0 0.0
    %982 = vmatmul.mubr.f32.gmra.mrb[0].mxu0 %v913
    %v983 = vpop.f32.mrb[0].mxu0
    %v984 = vadd.f32 0.0, %v983
    %v985 = vpop.f32.mrb[0].mxu0
    %986 = vdwg.mxu0
    %v987 = vmul.f32 %v984, 0.35355338
    %v988 = vsel %vm414, %v987, -inf
    %989 = vmax.xlane.f32.xlu0 %v988
    %v990 = vpop.xlane.xlu0 %989
    %v991 = vsub.f32 %v987, %v990
    %v992 = vmul.f32 %v991, 1.442695
    %v993 = vpow.pop %v992
    %v994 = vsel %vm414, %v993, 0.0
    %995 = vadd.xlane.f32.xlu0 %v994
    %v996 = vpop.xlane.xlu0 %995
    %v997 = vrcp.pop %v996
    %v998 = vmul.f32 %v993, %v997
    %999 = vrot.lane.b32.xlu0 %v408, 40
    %v1000 = vpop.permute.xlu0 %999
    %v1003 = vsel %vm414, %v998, 0
    %1005 = vmatprep.subr.mxu0 0.0
    %1006 = vmatpush1.msra.mxu0 %v1000
    %1007 = vmatprep.subr.mxu0 0.0
    %1008 = vmatpush1.msra.mxu0 0.0
    %1009 = vmatprep.subr.mxu0 0.0
    %1010 = vmatpush1.msra.mxu0 0.0
    %1011 = vmatprep.subr.mxu0 0.0
    %1012 = vmatpush1.msra.mxu0 0.0
    %1013 = vmatprep.subr.mxu0 0.0
    %1014 = vmatpush1.msra.mxu0 0.0
    %1015 = vmatprep.subr.mxu0 0.0
    %1016 = vmatpush1.msra.mxu0 0.0
    %1017 = vmatprep.subr.mxu0 0.0
    %1018 = vmatpush1.msra.mxu0 0.0
    %1019 = vmatprep.subr.mxu0 0.0
    %1020 = vmatpush1.msra.mxu0 0.0
    %1021 = vmatprep.subr.mxu0 0.0
    %1022 = vmatpush1.msra.mxu0 0.0
    %1023 = vmatprep.subr.mxu0 0.0
    %1024 = vmatpush1.msra.mxu0 0.0
    %1025 = vmatprep.subr.mxu0 0.0
    %1026 = vmatpush1.msra.mxu0 0.0
    %1027 = vmatprep.subr.mxu0 0.0
    %1028 = vmatpush1.msra.mxu0 0.0
    %1029 = vmatprep.subr.mxu0 0.0
    %1030 = vmatpush1.msra.mxu0 0.0
    %1031 = vmatprep.subr.mxu0 0.0
    %1032 = vmatpush1.msra.mxu0 0.0
    %1033 = vmatprep.subr.mxu0 0.0
    %1034 = vmatpush1.msra.mxu0 0.0
    %1035 = vmatprep.subr.mxu0 0.0
    %1036 = vmatpush1.msra.mxu0 0.0
    %1037 = vmatprep.subr.mxu0 0.0
    %1038 = vmatpush1.msra.mxu0 0.0
    %1039 = vmatprep.subr.mxu0 0.0
    %1040 = vmatpush1.msra.mxu0 0.0
    %1041 = vmatprep.subr.mxu0 0.0
    %1042 = vmatpush1.msra.mxu0 0.0
    %1043 = vmatprep.subr.mxu0 0.0
    %1044 = vmatpush1.msra.mxu0 0.0
    %1045 = vmatprep.subr.mxu0 0.0
    %1046 = vmatpush1.msra.mxu0 0.0
    %1047 = vmatprep.subr.mxu0 0.0
    %1048 = vmatpush1.msra.mxu0 0.0
    %1049 = vmatprep.subr.mxu0 0.0
    %1050 = vmatpush1.msra.mxu0 0.0
    %1051 = vmatprep.subr.mxu0 0.0
    %1052 = vmatpush1.msra.mxu0 0.0
    %1053 = vmatprep.subr.mxu0 0.0
    %1054 = vmatpush1.msra.mxu0 0.0
    %1055 = vmatprep.subr.mxu0 0.0
    %1056 = vmatpush1.msra.mxu0 0.0
    %1057 = vmatprep.subr.mxu0 0.0
    %1058 = vmatpush1.msra.mxu0 0.0
    %1059 = vmatprep.subr.mxu0 0.0
    %1060 = vmatpush1.msra.mxu0 0.0
    %1061 = vmatprep.subr.mxu0 0.0
    %1062 = vmatpush1.msra.mxu0 0.0
    %1063 = vmatprep.subr.mxu0 0.0
    %1064 = vmatpush1.msra.mxu0 0.0
    %1065 = vmatprep.subr.mxu0 0.0
    %1066 = vmatpush1.msra.mxu0 0.0
    %1067 = vmatprep.subr.mxu0 0.0
    %1068 = vmatpush1.msra.mxu0 0.0
    %1069 = vmatprep.mubr.f32.mxu0 0.0
    %1070 = vmatmul.mubr.f32.gmra.mrb[0].mxu0 %v1003
    %v1071 = vpop.f32.mrb[0].mxu0
    %v1072 = vadd.f32 0.0, %v1071
    %v1073 = vpop.f32.mrb[0].mxu0
    %1074 = vdwg.mxu0
    %1076 = vrot.lane.b32.xlu0 %v740, 8
    %v1077 = vpop.permute.xlu0 %1076
    %1080 = vrot.lane.b32.xlu0 %v906, 16
    %v1081 = vpop.permute.xlu0 %1080
    %1084 = vrot.lane.b32.xlu0 %v1072, 24
    %v1085 = vpop.permute.xlu0 %1084
    %v1087 = vsel %vm414, %v574, %v1077
    %vm1088 = vcmask 130048
    %v1089 = vsel %vm1088, %v1087, %v1081
    %vm1090 = vcmask 195584
    %v1091 = vsel %vm1090, %v1089, %v1085
    %v1092 = vld [vmem:[%s8] sm:$0xff]
    %v1093 = vld [vmem:[%s8 + $0x8] sm:$0xff]
    %v1094 = vld [vmem:[%s8 + $0x10] sm:$0xff]
    %v1095 = vld [vmem:[%s8 + $0x18] sm:$0xff]
    %v1096 = vld [vmem:[#allocation14] sm:$0x1]
    %v1098 = vlaneseq
    %v1099 = vshrl.u32 %v1098, 7
    %v1100 = vsub.s32 0, %v1099
    %v1101 = vrot.slane %v1096, %v1100
    %v1104 = vsel %vm298, %v1091, 0
    %1106 = vmatprep.subr.mxu0 0.0
    %1107 = vmatpush1.msra.mxu0 %v1092
    %1108 = vmatprep.subr.mxu0 0.0
    %1109 = vmatpush1.msra.mxu0 %v1093
    %1110 = vmatprep.subr.mxu0 0.0
    %1111 = vmatpush1.msra.mxu0 %v1094
    %1112 = vmatprep.subr.mxu0 0.0
    %1113 = vmatpush1.msra.mxu0 %v1095
    %1114 = vmatprep.subr.mxu0 0.0
    %1115 = vmatpush1.msra.mxu0 0.0
    %1116 = vmatprep.subr.mxu0 0.0
    %1117 = vmatpush1.msra.mxu0 0.0
    %1118 = vmatprep.subr.mxu0 0.0
    %1119 = vmatpush1.msra.mxu0 0.0
    %1120 = vmatprep.subr.mxu0 0.0
    %1121 = vmatpush1.msra.mxu0 0.0
    %1122 = vmatprep.subr.mxu0 0.0
    %1123 = vmatpush1.msra.mxu0 0.0
    %1124 = vmatprep.subr.mxu0 0.0
    %1125 = vmatpush1.msra.mxu0 0.0
    %1126 = vmatprep.subr.mxu0 0.0
    %1127 = vmatpush1.msra.mxu0 0.0
    %1128 = vmatprep.subr.mxu0 0.0
    %1129 = vmatpush1.msra.mxu0 0.0
    %1130 = vmatprep.subr.mxu0 0.0
    %1131 = vmatpush1.msra.mxu0 0.0
    %1132 = vmatprep.subr.mxu0 0.0
    %1133 = vmatpush1.msra.mxu0 0.0
    %1134 = vmatprep.subr.mxu0 0.0
    %1135 = vmatpush1.msra.mxu0 0.0
    %1136 = vmatprep.subr.mxu0 0.0
    %1137 = vmatpush1.msra.mxu0 0.0
    %1138 = vmatprep.subr.mxu0 0.0
    %1139 = vmatpush1.msra.mxu0 0.0
    %1140 = vmatprep.subr.mxu0 0.0
    %1141 = vmatpush1.msra.mxu0 0.0
    %1142 = vmatprep.subr.mxu0 0.0
    %1143 = vmatpush1.msra.mxu0 0.0
    %1144 = vmatprep.subr.mxu0 0.0
    %1145 = vmatpush1.msra.mxu0 0.0
    %1146 = vmatprep.subr.mxu0 0.0
    %1147 = vmatpush1.msra.mxu0 0.0
    %1148 = vmatprep.subr.mxu0 0.0
    %1149 = vmatpush1.msra.mxu0 0.0
    %1150 = vmatprep.subr.mxu0 0.0
    %1151 = vmatpush1.msra.mxu0 0.0
    %1152 = vmatprep.subr.mxu0 0.0
    %1153 = vmatpush1.msra.mxu0 0.0
    %1154 = vmatprep.subr.mxu0 0.0
    %1155 = vmatpush1.msra.mxu0 0.0
    %1156 = vmatprep.subr.mxu0 0.0
    %1157 = vmatpush1.msra.mxu0 0.0
    %1158 = vmatprep.subr.mxu0 0.0
    %1159 = vmatpush1.msra.mxu0 0.0
    %1160 = vmatprep.subr.mxu0 0.0
    %1161 = vmatpush1.msra.mxu0 0.0
    %1162 = vmatprep.subr.mxu0 0.0
    %1163 = vmatpush1.msra.mxu0 0.0
    %1164 = vmatprep.subr.mxu0 0.0
    %1165 = vmatpush1.msra.mxu0 0.0
    %1166 = vmatprep.subr.mxu0 0.0
    %1167 = vmatpush1.msra.mxu0 0.0
    %1168 = vmatprep.subr.mxu0 0.0
    %1169 = vmatpush1.msra.mxu0 0.0
    %1170 = vmatprep.mubr.f32.mxu0 0.0
    %1171 = vmatmul.mubr.f32.gmra.mrb[0].mxu0 %v1104
    %v1172 = vpop.f32.mrb[0].mxu0
    %v1173 = vadd.f32 %v1101, %v1172
    %v1174 = vpop.f32.mrb[0].mxu0
    %1175 = vdwg.mxu0
    %v1176 = vadd.f32 %v1173, %v326
    %v1177 = vld [vmem:[#allocation16] sm:$0x1]
    %v1178 = vld [vmem:[#allocation17] sm:$0x1]
    %v1179 = vsel %vm298, %v1176, 0.0
    %1180 = vadd.xlane.f32.xlu0 %v1179
    %v1181 = vpop.xlane.xlu0 %1180
    %v1182 = vmul.f32 %v1181, %v302
    %v1183 = vsub.f32 %v1176, %v1182
    %v1184 = vmul.f32 %v1183, %v1183
    %v1185 = vsel %vm298, %v1184, 0.0
    %1186 = vadd.xlane.f32.xlu0 %v1185
    %v1187 = vpop.xlane.xlu0 %1186
    %v1188 = vmul.f32 %v1187, %v302
    %v1189 = vadd.f32 %v1188, 1e-12
    %v1190 = vrsqrt.pop %v1189
    %v1191 = vmul.f32 %v1183, %v1190
    %v1193 = vlaneseq
    %v1194 = vshrl.u32 %v1193, 7
    %v1195 = vsub.s32 0, %v1194
    %v1196 = vrot.slane %v1177, %v1195
    %v1198 = vmul.f32 %v1191, %v1196
    %v1200 = vlaneseq
    %v1201 = vshrl.u32 %v1200, 7
    %v1202 = vsub.s32 0, %v1201
    %v1203 = vrot.slane %v1178, %v1202
    %v1205 = vadd.f32 %v1198, %v1203
    %v1206 = vld [vmem:[%s12] sm:$0xff]
    %v1207 = vld [vmem:[%s12 + $0x8] sm:$0xff]
    %v1208 = vld [vmem:[%s12 + $0x10] sm:$0xff]
    %v1209 = vld [vmem:[%s12 + $0x18] sm:$0xff]
    %v1210 = vld [vmem:[#allocation19] sm:$0x1]
    %v1212 = vlaneseq
    %v1213 = vshrl.u32 %v1212, 7
    %v1214 = vsub.s32 0, %v1213
    %v1215 = vrot.slane %v1210, %v1214
    %v1218 = vsel %vm298, %v1205, 0
    %1220 = vmatprep.subr.mxu0 0.0
    %1221 = vmatpush1.msra.mxu0 %v1206
    %1222 = vmatprep.subr.mxu0 0.0
    %1223 = vmatpush1.msra.mxu0 %v1207
    %1224 = vmatprep.subr.mxu0 0.0
    %1225 = vmatpush1.msra.mxu0 %v1208
    %1226 = vmatprep.subr.mxu0 0.0
    %1227 = vmatpush1.msra.mxu0 %v1209
    %1228 = vmatprep.subr.mxu0 0.0
    %1229 = vmatpush1.msra.mxu0 0.0
    %1230 = vmatprep.subr.mxu0 0.0
    %1231 = vmatpush1.msra.mxu0 0.0
    %1232 = vmatprep.subr.mxu0 0.0
    %1233 = vmatpush1.msra.mxu0 0.0
    %1234 = vmatprep.subr.mxu0 0.0
    %1235 = vmatpush1.msra.mxu0 0.0
    %1236 = vmatprep.subr.mxu0 0.0
    %1237 = vmatpush1.msra.mxu0 0.0
    %1238 = vmatprep.subr.mxu0 0.0
    %1239 = vmatpush1.msra.mxu0 0.0
    %1240 = vmatprep.subr.mxu0 0.0
    %1241 = vmatpush1.msra.mxu0 0.0
    %1242 = vmatprep.subr.mxu0 0.0
    %1243 = vmatpush1.msra.mxu0 0.0
    %1244 = vmatprep.subr.mxu0 0.0
    %1245 = vmatpush1.msra.mxu0 0.0
    %1246 = vmatprep.subr.mxu0 0.0
    %1247 = vmatpush1.msra.mxu0 0.0
    %1248 = vmatprep.subr.mxu0 0.0
    %1249 = vmatpush1.msra.mxu0 0.0
    %1250 = vmatprep.subr.mxu0 0.0
    %1251 = vmatpush1.msra.mxu0 0.0
    %1252 = vmatprep.subr.mxu0 0.0
    %1253 = vmatpush1.msra.mxu0 0.0
    %1254 = vmatprep.subr.mxu0 0.0
    %1255 = vmatpush1.msra.mxu0 0.0
    %1256 = vmatprep.subr.mxu0 0.0
    %1257 = vmatpush1.msra.mxu0 0.0
    %1258 = vmatprep.subr.mxu0 0.0
    %1259 = vmatpush1.msra.mxu0 0.0
    %1260 = vmatprep.subr.mxu0 0.0
    %1261 = vmatpush1.msra.mxu0 0.0
    %1262 = vmatprep.subr.mxu0 0.0
    %1263 = vmatpush1.msra.mxu0 0.0
    %1264 = vmatprep.subr.mxu0 0.0
    %1265 = vmatpush1.msra.mxu0 0.0
    %1266 = vmatprep.subr.mxu0 0.0
    %1267 = vmatpush1.msra.mxu0 0.0
    %1268 = vmatprep.subr.mxu0 0.0
    %1269 = vmatpush1.msra.mxu0 0.0
    %1270 = vmatprep.subr.mxu0 0.0
    %1271 = vmatpush1.msra.mxu0 0.0
    %1272 = vmatprep.subr.mxu0 0.0
    %1273 = vmatpush1.msra.mxu0 0.0
    %1274 = vmatprep.subr.mxu0 0.0
    %1275 = vmatpush1.msra.mxu0 0.0
    %1276 = vmatprep.subr.mxu0 0.0
    %1277 = vmatpush1.msra.mxu0 0.0
    %1278 = vmatprep.subr.mxu0 0.0
    %1279 = vmatpush1.msra.mxu0 0.0
    %1280 = vmatprep.subr.mxu0 0.0
    %1281 = vmatpush1.msra.mxu0 0.0
    %1282 = vmatprep.subr.mxu0 0.0
    %1283 = vmatpush1.msra.mxu0 0.0
    %1284 = vmatprep.mubr.f32.mxu0 0.0
    %1285 = vmatmul.mubr.f32.gmra.mrb[0].mxu0 %v1218
    %v1286 = vpop.f32.mrb[0].mxu0
    %v1287 = vadd.f32 %v1215, %v1286
    %v1288 = vpop.f32.mrb[0].mxu0
    %1289 = vdwg.mxu0
    %v1290 = vmul.f32 %v1287, %v1287
    %v1291 = vmul.f32 %v1287, %v1290
    %v1292 = vmul.f32 %v1291, 0.044715
    %v1293 = vadd.f32 %v1287, %v1292
    %v1294 = vmul.f32 %v1293, 0.7978846
    %v1295 = vtanh.pop %v1294
    %v1296 = vadd.f32 %v1295, 1.0
    %v1297 = vmul.f32 %v1296, 0.5
    %v1298 = vmul.f32 %v1287, %v1297
    %v1299 = vld [vmem:[%s14] sm:$0xff]
    %v1300 = vld [vmem:[%s14 + $0x8] sm:$0xff]
    %v1301 = vld [vmem:[%s14 + $0x10] sm:$0xff]
    %v1302 = vld [vmem:[%s14 + $0x18] sm:$0xff]
    %v1303 = vld [vmem:[%s14 + $0x20] sm:$0xff]
    %v1304 = vld [vmem:[%s14 + $0x28] sm:$0xff]
    %v1305 = vld [vmem:[%s14 + $0x30] sm:$0xff]
    %v1306 = vld [vmem:[%s14 + $0x38] sm:$0xff]
    %v1307 = vld [vmem:[#allocation20] sm:$0x1]
    %v1309 = vlaneseq
    %v1310 = vshrl.u32 %v1309, 7
    %v1311 = vsub.s32 0, %v1310
    %v1312 = vrot.slane %v1307, %v1311
    %vm1314 = vcmask 523264
    %v1316 = vsel %vm1314, %v1298, 0
    %1318 = vmatprep.subr.mxu0 0.0
    %1319 = vmatpush1.msra.mxu0 %v1299
    %1320 = vmatprep.subr.mxu0 0.0
    %1321 = vmatpush1.msra.mxu0 %v1300
    %1322 = vmatprep.subr.mxu0 0.0
    %1323 = vmatpush1.msra.mxu0 %v1301
    %1324 = vmatprep.subr.mxu0 0.0
    %1325 = vmatpush1.msra.mxu0 %v1302
    %1326 = vmatprep.subr.mxu0 0.0
    %1327 = vmatpush1.msra.mxu0 %v1303
    %1328 = vmatprep.subr.mxu0 0.0
    %1329 = vmatpush1.msra.mxu0 %v1304
    %1330 = vmatprep.subr.mxu0 0.0
    %1331 = vmatpush1.msra.mxu0 %v1305
    %1332 = vmatprep.subr.mxu0 0.0
    %1333 = vmatpush1.msra.mxu0 %v1306
    %1334 = vmatprep.subr.mxu0 0.0
    %1335 = vmatpush1.msra.mxu0 0.0
    %1336 = vmatprep.subr.mxu0 0.0
    %1337 = vmatpush1.msra.mxu0 0.0
    %1338 = vmatprep.subr.mxu0 0.0
    %1339 = vmatpush1.msra.mxu0 0.0
    %1340 = vmatprep.subr.mxu0 0.0
    %1341 = vmatpush1.msra.mxu0 0.0
    %1342 = vmatprep.subr.mxu0 0.0
    %1343 = vmatpush1.msra.mxu0 0.0
    %1344 = vmatprep.subr.mxu0 0.0
    %1345 = vmatpush1.msra.mxu0 0.0
    %1346 = vmatprep.subr.mxu0 0.0
    %1347 = vmatpush1.msra.mxu0 0.0
    %1348 = vmatprep.subr.mxu0 0.0
    %1349 = vmatpush1.msra.mxu0 0.0
    %1350 = vmatprep.subr.mxu0 0.0
    %1351 = vmatpush1.msra.mxu0 0.0
    %1352 = vmatprep.subr.mxu0 0.0
    %1353 = vmatpush1.msra.mxu0 0.0
    %1354 = vmatprep.subr.mxu0 0.0
    %1355 = vmatpush1.msra.mxu0 0.0
    %1356 = vmatprep.subr.mxu0 0.0
    %1357 = vmatpush1.msra.mxu0 0.0
    %1358 = vmatprep.subr.mxu0 0.0
    %1359 = vmatpush1.msra.mxu0 0.0
    %1360 = vmatprep.subr.mxu0 0.0
    %1361 = vmatpush1.msra.mxu0 0.0
    %1362 = vmatprep.subr.mxu0 0.0
    %1363 = vmatpush1.msra.mxu0 0.0
    %1364 = vmatprep.subr.mxu0 0.0
    %1365 = vmatpush1.msra.mxu0 0.0
    %1366 = vmatprep.subr.mxu0 0.0
    %1367 = vmatpush1.msra.mxu0 0.0
    %1368 = vmatprep.subr.mxu0 0.0
    %1369 = vmatpush1.msra.mxu0 0.0
    %1370 = vmatprep.subr.mxu0 0.0
    %1371 = vmatpush1.msra.mxu0 0.0
    %1372 = vmatprep.subr.mxu0 0.0
    %1373 = vmatpush1.msra.mxu0 0.0
    %1374 = vmatprep.subr.mxu0 0.0
    %1375 = vmatpush1.msra.mxu0 0.0
    %1376 = vmatprep.subr.mxu0 0.0
    %1377 = vmatpush1.msra.mxu0 0.0
    %1378 = vmatprep.subr.mxu0 0.0
    %1379 = vmatpush1.msra.mxu0 0.0
    %1380 = vmatprep.subr.mxu0 0.0
    %1381 = vmatpush1.msra.mxu0 0.0
    %1382 = vmatprep.mubr.f32.mxu0 0.0
    %1383 = vmatmul.mubr.f32.gmra.mrb[0].mxu0 %v1316
    %v1384 = vpop.f32.mrb[0].mxu0
    %v1385 = vadd.f32 %v1312, %v1384
    %v1386 = vpop.f32.mrb[0].mxu0
    %1387 = vdwg.mxu0
    %v1388 = vadd.f32 %v1385, %v1205
    %v1389 = vld [vmem:[#allocation22] sm:$0x1]
    %v1390 = vld [vmem:[#allocation23] sm:$0x1]
    %v1391 = vsel %vm298, %v1388, 0.0
    %1392 = vadd.xlane.f32.xlu0 %v1391
    %v1393 = vpop.xlane.xlu0 %1392
    %v1394 = vmul.f32 %v1393, %v302
    %v1395 = vsub.f32 %v1388, %v1394
    %v1396 = vmul.f32 %v1395, %v1395
    %v1397 = vsel %vm298, %v1396, 0.0
    %1398 = vadd.xlane.f32.xlu0 %v1397
    %v1399 = vpop.xlane.xlu0 %1398
    %v1400 = vmul.f32 %v1399, %v302
    %v1401 = vadd.f32 %v1400, 1e-12
    %v1402 = vrsqrt.pop %v1401
    %v1403 = vmul.f32 %v1395, %v1402
    %v1405 = vlaneseq
    %v1406 = vshrl.u32 %v1405, 7
    %v1407 = vsub.s32 0, %v1406
    %v1408 = vrot.slane %v1389, %v1407
    %v1410 = vmul.f32 %v1403, %v1408
    %v1412 = vlaneseq
    %v1413 = vshrl.u32 %v1412, 7
    %v1414 = vsub.s32 0, %v1413
    %v1415 = vrot.slane %v1390, %v1414
    %v1417 = vadd.f32 %v1410, %v1415
    %s1418 = scalar_lea.vmem %s6, 32
    %v1419 = vld [vmem:[%s1418] sm:$0xff]
    %v1420 = vld [vmem:[%s1418 + $0x8] sm:$0xff]
    %v1421 = vld [vmem:[%s1418 + $0x10] sm:$0xff]
    %v1422 = vld [vmem:[%s1418 + $0x18] sm:$0xff]
    %s1423 = scalar_lea.vmem [#allocation13], 1
    %v1424 = vld [vmem:[%s1423] sm:$0x1]
    %v1426 = vlaneseq
    %v1427 = vshrl.u32 %v1426, 7
    %v1428 = vsub.s32 0, %v1427
    %v1429 = vrot.slane %v1424, %v1428
    %v1432 = vsel %vm298, %v1417, 0
    %1434 = vmatprep.subr.mxu0 0.0
    %1435 = vmatpush1.msra.mxu0 %v1419
    %1436 = vmatprep.subr.mxu0 0.0
    %1437 = vmatpush1.msra.mxu0 %v1420
    %1438 = vmatprep.subr.mxu0 0.0
    %1439 = vmatpush1.msra.mxu0 %v1421
    %1440 = vmatprep.subr.mxu0 0.0
    %1441 = vmatpush1.msra.mxu0 %v1422
    %1442 = vmatprep.subr.mxu0 0.0
    %1443 = vmatpush1.msra.mxu0 0.0
    %1444 = vmatprep.subr.mxu0 0.0
    %1445 = vmatpush1.msra.mxu0 0.0
    %1446 = vmatprep.subr.mxu0 0.0
    %1447 = vmatpush1.msra.mxu0 0.0
    %1448 = vmatprep.subr.mxu0 0.0
    %1449 = vmatpush1.msra.mxu0 0.0
    %1450 = vmatprep.subr.mxu0 0.0
    %1451 = vmatpush1.msra.mxu0 0.0
    %1452 = vmatprep.subr.mxu0 0.0
    %1453 = vmatpush1.msra.mxu0 0.0
    %1454 = vmatprep.subr.mxu0 0.0
    %1455 = vmatpush1.msra.mxu0 0.0
    %1456 = vmatprep.subr.mxu0 0.0
    %1457 = vmatpush1.msra.mxu0 0.0
    %1458 = vmatprep.subr.mxu0 0.0
    %1459 = vmatpush1.msra.mxu0 0.0
    %1460 = vmatprep.subr.mxu0 0.0
    %1461 = vmatpush1.msra.mxu0 0.0
    %1462 = vmatprep.subr.mxu0 0.0
    %1463 = vmatpush1.msra.mxu0 0.0
    %1464 = vmatprep.subr.mxu0 0.0
    %1465 = vmatpush1.msra.mxu0 0.0
    %1466 = vmatprep.subr.mxu0 0.0
    %1467 = vmatpush1.msra.mxu0 0.0
    %1468 = vmatprep.subr.mxu0 0.0
    %1469 = vmatpush1.msra.mxu0 0.0
    %1470 = vmatprep.subr.mxu0 0.0
    %1471 = vmatpush1.msra.mxu0 0.0
    %1472 = vmatprep.subr.mxu0 0.0
    %1473 = vmatpush1.msra.mxu0 0.0
    %1474 = vmatprep.subr.mxu0 0.0
    %1475 = vmatpush1.msra.mxu0 0.0
    %1476 = vmatprep.subr.mxu0 0.0
    %1477 = vmatpush1.msra.mxu0 0.0
    %1478 = vmatprep.subr.mxu0 0.0
    %1479 = vmatpush1.msra.mxu0 0.0
    %1480 = vmatprep.subr.mxu0 0.0
    %1481 = vmatpush1.msra.mxu0 0.0
    %1482 = vmatprep.subr.mxu0 0.0
    %1483 = vmatpush1.msra.mxu0 0.0
    %1484 = vmatprep.subr.mxu0 0.0
    %1485 = vmatpush1.msra.mxu0 0.0
    %1486 = vmatprep.subr.mxu0 0.0
    %1487 = vmatpush1.msra.mxu0 0.0
    %1488 = vmatprep.subr.mxu0 0.0
    %1489 = vmatpush1.msra.mxu0 0.0
    %1490 = vmatprep.subr.mxu0 0.0
    %1491 = vmatpush1.msra.mxu0 0.0
    %1492 = vmatprep.subr.mxu0 0.0
    %1493 = vmatpush1.msra.mxu0 0.0
    %1494 = vmatprep.subr.mxu0 0.0
    %1495 = vmatpush1.msra.mxu0 0.0
    %1496 = vmatprep.subr.mxu0 0.0
    %1497 = vmatpush1.msra.mxu0 0.0
    %1498 = vmatprep.mubr.f32.mxu0 0.0
    %1499 = vmatmul.mubr.f32.gmra.mrb[0].mxu0 %v1432
    %v1500 = vpop.f32.mrb[0].mxu0
    %v1501 = vadd.f32 %v1429, %v1500
    %v1502 = vpop.f32.mrb[0].mxu0
    %1503 = vdwg.mxu0
    %1505 = vrot.lane.b32.xlu0 %v1501, 96
    %v1506 = vpop.permute.xlu0 %1505
    %v1507 = vsel %vm414, %v1501, 0
    %v1509 = vsel %vm414, %v1506, 0
    %1511 = vmatprep.subr.mxu0 0.0
    %1512 = vmatpush1.xpose.msra.mxu0 %v1509
    %1513 = vmatprep.subr.mxu0 0.0
    %1514 = vmatpush1.xpose.msra.mxu0 0.0
    %1515 = vmatprep.subr.mxu0 0.0
    %1516 = vmatpush1.xpose.msra.mxu0 0.0
    %1517 = vmatprep.subr.mxu0 0.0
    %1518 = vmatpush1.xpose.msra.mxu0 0.0
    %1519 = vmatprep.subr.mxu0 0.0
    %1520 = vmatpush1.xpose.msra.mxu0 0.0
    %1521 = vmatprep.subr.mxu0 0.0
    %1522 = vmatpush1.xpose.msra.mxu0 0.0
    %1523 = vmatprep.subr.mxu0 0.0
    %1524 = vmatpush1.xpose.msra.mxu0 0.0
    %1525 = vmatprep.subr.mxu0 0.0
    %1526 = vmatpush1.xpose.msra.mxu0 0.0
    %1527 = vmatprep.subr.mxu0 0.0
    %1528 = vmatpush1.xpose.msra.mxu0 0.0
    %1529 = vmatprep.subr.mxu0 0.0
    %1530 = vmatpush1.xpose.msra.mxu0 0.0
    %1531 = vmatprep.subr.mxu0 0.0
    %1532 = vmatpush1.xpose.msra.mxu0 0.0
    %1533 = vmatprep.subr.mxu0 0.0
    %1534 = vmatpush1.xpose.msra.mxu0 0.0
    %1535 = vmatprep.subr.mxu0 0.0
    %1536 = vmatpush1.xpose.msra.mxu0 0.0
    %1537 = vmatprep.subr.mxu0 0.0
    %1538 = vmatpush1.xpose.msra.mxu0 0.0
    %1539 = vmatprep.subr.mxu0 0.0
    %1540 = vmatpush1.xpose.msra.mxu0 0.0
    %1541 = vmatprep.subr.mxu0 0.0
    %1542 = vmatpush1.xpose.msra.mxu0 0.0
    %1543 = vmatprep.subr.mxu0 0.0
    %1544 = vmatpush1.xpose.msra.mxu0 0.0
    %1545 = vmatprep.subr.mxu0 0.0
    %1546 = vmatpush1.xpose.msra.mxu0 0.0
    %1547 = vmatprep.subr.mxu0 0.0
    %1548 = vmatpush1.xpose.msra.mxu0 0.0
    %1549 = vmatprep.subr.mxu0 0.0
    %1550 = vmatpush1.xpose.msra.mxu0 0.0
    %1551 = vmatprep.subr.mxu0 0.0
    %1552 = vmatpush1.xpose.msra.mxu0 0.0
    %1553 = vmatprep.subr.mxu0 0.0
    %1554 = vmatpush1.xpose.msra.mxu0 0.0
    %1555 = vmatprep.subr.mxu0 0.0
    %1556 = vmatpush1.xpose.msra.mxu0 0.0
    %1557 = vmatprep.subr.mxu0 0.0
    %1558 = vmatpush1.xpose.msra.mxu0 0.0
    %1559 = vmatprep.subr.mxu0 0.0
    %1560 = vmatpush1.xpose.msra.mxu0 0.0
    %1561 = vmatprep.subr.mxu0 0.0
    %1562 = vmatpush1.xpose.msra.mxu0 0.0
    %1563 = vmatprep.subr.mxu0 0.0
    %1564 = vmatpush1.xpose.msra.mxu0 0.0
    %1565 = vmatprep.subr.mxu0 0.0
    %1566 = vmatpush1.xpose.msra.mxu0 0.0
    %1567 = vmatprep.subr.mxu0 0.0
    %1568 = vmatpush1.xpose.msra.mxu0 0.0
    %1569 = vmatprep.subr.mxu0 0.0
    %1570 = vmatpush1.xpose.msra.mxu0 0.0
    %1571 = vmatprep.subr.mxu0 0.0
    %1572 = vmatpush1.xpose.msra.mxu0 0.0
    %1573 = vmatprep.subr.mxu0 0.0
    %1574 = vmatpush1.xpose.msra.mxu0 0.0
    %1575 = vmatprep.mubr.f32.mxu0 0.0
    %1576 = vmatmul.mubr.f32.gmra.mrb[0].mxu0 %v1507
    %v1577 = vpop.f32.mrb[0].mxu0
    %v1578 = vadd.f32 0.0, %v1577
    %v1579 = vpop.f32.mrb[0].mxu0
    %1580 = vdwg.mxu0
    %v1581 = vmul.f32 %v1578, 0.35355338
    %v1582 = vsel %vm414, %v1581, -inf
    %1583 = vmax.xlane.f32.xlu0 %v1582
    %v1584 = vpop.xlane.xlu0 %1583
    %v1585 = vsub.f32 %v1581, %v1584
    %v1586 = vmul.f32 %v1585, 1.442695
    %v1587 = vpow.pop %v1586
    %v1588 = vsel %vm414, %v1587, 0.0
    %1589 = vadd.xlane.f32.xlu0 %v1588
    %v1590 = vpop.xlane.xlu0 %1589
    %v1591 = vrcp.pop %v1590
    %v1592 = vmul.f32 %v1587, %v1591
    %1593 = vrot.lane.b32.xlu0 %v1501, 64
    %v1594 = vpop.permute.xlu0 %1593
    %v1597 = vsel %vm414, %v1592, 0
    %1599 = vmatprep.subr.mxu0 0.0
    %1600 = vmatpush1.msra.mxu0 %v1594
    %1601 = vmatprep.subr.mxu0 0.0
    %1602 = vmatpush1.msra.mxu0 0.0
    %1603 = vmatprep.subr.mxu0 0.0
    %1604 = vmatpush1.msra.mxu0 0.0
    %1605 = vmatprep.subr.mxu0 0.0
    %1606 = vmatpush1.msra.mxu0 0.0
    %1607 = vmatprep.subr.mxu0 0.0
    %1608 = vmatpush1.msra.mxu0 0.0
    %1609 = vmatprep.subr.mxu0 0.0
    %1610 = vmatpush1.msra.mxu0 0.0
    %1611 = vmatprep.subr.mxu0 0.0
    %1612 = vmatpush1.msra.mxu0 0.0
    %1613 = vmatprep.subr.mxu0 0.0
    %1614 = vmatpush1.msra.mxu0 0.0
    %1615 = vmatprep.subr.mxu0 0.0
    %1616 = vmatpush1.msra.mxu0 0.0
    %1617 = vmatprep.subr.mxu0 0.0
    %1618 = vmatpush1.msra.mxu0 0.0
    %1619 = vmatprep.subr.mxu0 0.0
    %1620 = vmatpush1.msra.mxu0 0.0
    %1621 = vmatprep.subr.mxu0 0.0
    %1622 = vmatpush1.msra.mxu0 0.0
    %1623 = vmatprep.subr.mxu0 0.0
    %1624 = vmatpush1.msra.mxu0 0.0
    %1625 = vmatprep.subr.mxu0 0.0
    %1626 = vmatpush1.msra.mxu0 0.0
    %1627 = vmatprep.subr.mxu0 0.0
    %1628 = vmatpush1.msra.mxu0 0.0
    %1629 = vmatprep.subr.mxu0 0.0
    %1630 = vmatpush1.msra.mxu0 0.0
    %1631 = vmatprep.subr.mxu0 0.0
    %1632 = vmatpush1.msra.mxu0 0.0
    %1633 = vmatprep.subr.mxu0 0.0
    %1634 = vmatpush1.msra.mxu0 0.0
    %1635 = vmatprep.subr.mxu0 0.0
    %1636 = vmatpush1.msra.mxu0 0.0
    %1637 = vmatprep.subr.mxu0 0.0
    %1638 = vmatpush1.msra.mxu0 0.0
    %1639 = vmatprep.subr.mxu0 0.0
    %1640 = vmatpush1.msra.mxu0 0.0
    %1641 = vmatprep.subr.mxu0 0.0
    %1642 = vmatpush1.msra.mxu0 0.0
    %1643 = vmatprep.subr.mxu0 0.0
    %1644 = vmatpush1.msra.mxu0 0.0
    %1645 = vmatprep.subr.mxu0 0.0
    %1646 = vmatpush1.msra.mxu0 0.0
    %1647 = vmatprep.subr.mxu0 0.0
    %1648 = vmatpush1.msra.mxu0 0.0
    %1649 = vmatprep.subr.mxu0 0.0
    %1650 = vmatpush1.msra.mxu0 0.0
    %1651 = vmatprep.subr.mxu0 0.0
    %1652 = vmatpush1.msra.mxu0 0.0
    %1653 = vmatprep.subr.mxu0 0.0
    %1654 = vmatpush1.msra.mxu0 0.0
    %1655 = vmatprep.subr.mxu0 0.0
    %1656 = vmatpush1.msra.mxu0 0.0
    %1657 = vmatprep.subr.mxu0 0.0
    %1658 = vmatpush1.msra.mxu0 0.0
    %1659 = vmatprep.subr.mxu0 0.0
    %1660 = vmatpush1.msra.mxu0 0.0
    %1661 = vmatprep.subr.mxu0 0.0
    %1662 = vmatpush1.msra.mxu0 0.0
    %1663 = vmatprep.mubr.f32.mxu0 0.0
    %1664 = vmatmul.mubr.f32.gmra.mrb[0].mxu0 %v1597
    %v1665 = vpop.f32.mrb[0].mxu0
    %v1666 = vadd.f32 0.0, %v1665
    %v1667 = vpop.f32.mrb[0].mxu0
    %1668 = vdwg.mxu0
    %1669 = vrot.lane.b32.xlu0 %v1501, 120
    %v1670 = vpop.permute.xlu0 %1669
    %1671 = vrot.lane.b32.xlu0 %v1501, 88
    %v1672 = vpop.permute.xlu0 %1671
    %v1673 = vsel %vm414, %v1670, 0
    %v1675 = vsel %vm414, %v1672, 0
    %1677 = vmatprep.subr.mxu0 0.0
    %1678 = vmatpush1.xpose.msra.mxu0 %v1675
    %1679 = vmatprep.subr.mxu0 0.0
    %1680 = vmatpush1.xpose.msra.mxu0 0.0
    %1681 = vmatprep.subr.mxu0 0.0
    %1682 = vmatpush1.xpose.msra.mxu0 0.0
    %1683 = vmatprep.subr.mxu0 0.0
    %1684 = vmatpush1.xpose.msra.mxu0 0.0
    %1685 = vmatprep.subr.mxu0 0.0
    %1686 = vmatpush1.xpose.msra.mxu0 0.0
    %1687 = vmatprep.subr.mxu0 0.0
    %1688 = vmatpush1.xpose.msra.mxu0 0.0
    %1689 = vmatprep.subr.mxu0 0.0
    %1690 = vmatpush1.xpose.msra.mxu0 0.0
    %1691 = vmatprep.subr.mxu0 0.0
    %1692 = vmatpush1.xpose.msra.mxu0 0.0
    %1693 = vmatprep.subr.mxu0 0.0
    %1694 = vmatpush1.xpose.msra.mxu0 0.0
    %1695 = vmatprep.subr.mxu0 0.0
    %1696 = vmatpush1.xpose.msra.mxu0 0.0
    %1697 = vmatprep.subr.mxu0 0.0
    %1698 = vmatpush1.xpose.msra.mxu0 0.0
    %1699 = vmatprep.subr.mxu0 0.0
    %1700 = vmatpush1.xpose.msra.mxu0 0.0
    %1701 = vmatprep.subr.mxu0 0.0
    %1702 = vmatpush1.xpose.msra.mxu0 0.0
    %1703 = vmatprep.subr.mxu0 0.0
    %1704 = vmatpush1.xpose.msra.mxu0 0.0
    %1705 = vmatprep.subr.mxu0 0.0
    %1706 = vmatpush1.xpose.msra.mxu0 0.0
    %1707 = vmatprep.subr.mxu0 0.0
    %1708 = vmatpush1.xpose.msra.mxu0 0.0
    %1709 = vmatprep.subr.mxu0 0.0
    %1710 = vmatpush1.xpose.msra.mxu0 0.0
    %1711 = vmatprep.subr.mxu0 0.0
    %1712 = vmatpush1.xpose.msra.mxu0 0.0
    %1713 = vmatprep.subr.mxu0 0.0
    %1714 = vmatpush1.xpose.msra.mxu0 0.0
    %1715 = vmatprep.subr.mxu0 0.0
    %1716 = vmatpush1.xpose.msra.mxu0 0.0
    %1717 = vmatprep.subr.mxu0 0.0
    %1718 = vmatpush1.xpose.msra.mxu0 0.0
    %1719 = vmatprep.subr.mxu0 0.0
    %1720 = vmatpush1.xpose.msra.mxu0 0.0
    %1721 = vmatprep.subr.mxu0 0.0
    %1722 = vmatpush1.xpose.msra.mxu0 0.0
    %1723 = vmatprep.subr.mxu0 0.0
    %1724 = vmatpush1.xpose.msra.mxu0 0.0
    %1725 = vmatprep.subr.mxu0 0.0
    %1726 = vmatpush1.xpose.msra.mxu0 0.0
    %1727 = vmatprep.subr.mxu0 0.0
    %1728 = vmatpush1.xpose.msra.mxu0 0.0
    %1729 = vmatprep.subr.mxu0 0.0
    %1730 = vmatpush1.xpose.msra.mxu0 0.0
    %1731 = vmatprep.subr.mxu0 0.0
    %1732 = vmatpush1.xpose.msra.mxu0 0.0
    %1733 = vmatprep.subr.mxu0 0.0
    %1734 = vmatpush1.xpose.msra.mxu0 0.0
    %1735 = vmatprep.subr.mxu0 0.0
    %1736 = vmatpush1.xpose.msra.mxu0 0.0
    %1737 = vmatprep.subr.mxu0 0.0
    %1738 = vmatpush1.xpose.msra.mxu0 0.0
    %1739 = vmatprep.subr.mxu0 0.0
    %1740 = vmatpush1.xpose.msra.mxu0 0.0
    %1741 = vmatprep.mubr.f32.mxu0 0.0
    %1742 = vmatmul.mubr.f32.gmra.mrb[0].mxu0 %v1673
    %v1743 = vpop.f32.mrb[0].mxu0
    %v1744 = vadd.f32 0.0, %v1743
    %v1745 = vpop.f32.mrb[0].mxu0
    %1746 = vdwg.mxu0
    %v1747 = vmul.f32 %v1744, 0.35355338
    %v1748 = vsel %vm414, %v1747, -inf
    %1749 = vmax.xlane.f32.xlu0 %v1748
    %v1750 = vpop.xlane.xlu0 %1749
    %v1751 = vsub.f32 %v1747, %v1750
    %v1752 = vmul.f32 %v1751, 1.442695
    %v1753 = vpow.pop %v1752
    %v1754 = vsel %vm414, %v1753, 0.0
    %1755 = vadd.xlane.f32.xlu0 %v1754
    %v1756 = vpop.xlane.xlu0 %1755
    %v1757 = vrcp.pop %v1756
    %v1758 = vmul.f32 %v1753, %v1757
    %1759 = vrot.lane.b32.xlu0 %v1501, 56
    %v1760 = vpop.permute.xlu0 %1759
    %v1763 = vsel %vm414, %v1758, 0
    %1765 = vmatprep.subr.mxu0 0.0
    %1766 = vmatpush1.msra.mxu0 %v1760
    %1767 = vmatprep.subr.mxu0 0.0
    %1768 = vmatpush1.msra.mxu0 0.0
    %1769 = vmatprep.subr.mxu0 0.0
    %1770 = vmatpush1.msra.mxu0 0.0
    %1771 = vmatprep.subr.mxu0 0.0
    %1772 = vmatpush1.msra.mxu0 0.0
    %1773 = vmatprep.subr.mxu0 0.0
    %1774 = vmatpush1.msra.mxu0 0.0
    %1775 = vmatprep.subr.mxu0 0.0
    %1776 = vmatpush1.msra.mxu0 0.0
    %1777 = vmatprep.subr.mxu0 0.0
    %1778 = vmatpush1.msra.mxu0 0.0
    %1779 = vmatprep.subr.mxu0 0.0
    %1780 = vmatpush1.msra.mxu0 0.0
    %1781 = vmatprep.subr.mxu0 0.0
    %1782 = vmatpush1.msra.mxu0 0.0
    %1783 = vmatprep.subr.mxu0 0.0
    %1784 = vmatpush1.msra.mxu0 0.0
    %1785 = vmatprep.subr.mxu0 0.0
    %1786 = vmatpush1.msra.mxu0 0.0
    %1787 = vmatprep.subr.mxu0 0.0
    %1788 = vmatpush1.msra.mxu0 0.0
    %1789 = vmatprep.subr.mxu0 0.0
    %1790 = vmatpush1.msra.mxu0 0.0
    %1791 = vmatprep.subr.mxu0 0.0
    %1792 = vmatpush1.msra.mxu0 0.0
    %1793 = vmatprep.subr.mxu0 0.0
    %1794 = vmatpush1.msra.mxu0 0.0
    %1795 = vmatprep.subr.mxu0 0.0
    %1796 = vmatpush1.msra.mxu0 0.0
    %1797 = vmatprep.subr.mxu0 0.0
    %1798 = vmatpush1.msra.mxu0 0.0
    %1799 = vmatprep.subr.mxu0 0.0
    %1800 = vmatpush1.msra.mxu0 0.0
    %1801 = vmatprep.subr.mxu0 0.0
    %1802 = vmatpush1.msra.mxu0 0.0
    %1803 = vmatprep.subr.mxu0 0.0
    %1804 = vmatpush1.msra.mxu0 0.0
    %1805 = vmatprep.subr.mxu0 0.0
    %1806 = vmatpush1.msra.mxu0 0.0
    %1807 = vmatprep.subr.mxu0 0.0
    %1808 = vmatpush1.msra.mxu0 0.0
    %1809 = vmatprep.subr.mxu0 0.0
    %1810 = vmatpush1.msra.mxu0 0.0
    %1811 = vmatprep.subr.mxu0 0.0
    %1812 = vmatpush1.msra.mxu0 0.0
    %1813 = vmatprep.subr.mxu0 0.0
    %1814 = vmatpush1.msra.mxu0 0.0
    %1815 = vmatprep.subr.mxu0 0.0
    %1816 = vmatpush1.msra.mxu0 0.0
    %1817 = vmatprep.subr.mxu0 0.0
    %1818 = vmatpush1.msra.mxu0 0.0
    %1819 = vmatprep.subr.mxu0 0.0
    %1820 = vmatpush1.msra.mxu0 0.0
    %1821 = vmatprep.subr.mxu0 0.0
    %1822 = vmatpush1.msra.mxu0 0.0
    %1823 = vmatprep.subr.mxu0 0.0
    %1824 = vmatpush1.msra.mxu0 0.0
    %1825 = vmatprep.subr.mxu0 0.0
    %1826 = vmatpush1.msra.mxu0 0.0
    %1827 = vmatprep.subr.mxu0 0.0
    %1828 = vmatpush1.msra.mxu0 0.0
    %1829 = vmatprep.mubr.f32.mxu0 0.0
    %1830 = vmatmul.mubr.f32.gmra.mrb[0].mxu0 %v1763
    %v1831 = vpop.f32.mrb[0].mxu0
    %v1832 = vadd.f32 0.0, %v1831
    %v1833 = vpop.f32.mrb[0].mxu0
    %1834 = vdwg.mxu0
    %1835 = vrot.lane.b32.xlu0 %v1501, 112
    %v1836 = vpop.permute.xlu0 %1835
    %1837 = vrot.lane.b32.xlu0 %v1501, 80
    %v1838 = vpop.permute.xlu0 %1837
    %v1839 = vsel %vm414, %v1836, 0
    %v1841 = vsel %vm414, %v1838, 0
    %1843 = vmatprep.subr.mxu0 0.0
    %1844 = vmatpush1.xpose.msra.mxu0 %v1841
    %1845 = vmatprep.subr.mxu0 0.0
    %1846 = vmatpush1.xpose.msra.mxu0 0.0
    %1847 = vmatprep.subr.mxu0 0.0
    %1848 = vmatpush1.xpose.msra.mxu0 0.0
    %1849 = vmatprep.subr.mxu0 0.0
    %1850 = vmatpush1.xpose.msra.mxu0 0.0
    %1851 = vmatprep.subr.mxu0 0.0
    %1852 = vmatpush1.xpose.msra.mxu0 0.0
    %1853 = vmatprep.subr.mxu0 0.0
    %1854 = vmatpush1.xpose.msra.mxu0 0.0
    %1855 = vmatprep.subr.mxu0 0.0
    %1856 = vmatpush1.xpose.msra.mxu0 0.0
    %1857 = vmatprep.subr.mxu0 0.0
    %1858 = vmatpush1.xpose.msra.mxu0 0.0
    %1859 = vmatprep.subr.mxu0 0.0
    %1860 = vmatpush1.xpose.msra.mxu0 0.0
    %1861 = vmatprep.subr.mxu0 0.0
    %1862 = vmatpush1.xpose.msra.mxu0 0.0
    %1863 = vmatprep.subr.mxu0 0.0
    %1864 = vmatpush1.xpose.msra.mxu0 0.0
    %1865 = vmatprep.subr.mxu0 0.0
    %1866 = vmatpush1.xpose.msra.mxu0 0.0
    %1867 = vmatprep.subr.mxu0 0.0
    %1868 = vmatpush1.xpose.msra.mxu0 0.0
    %1869 = vmatprep.subr.mxu0 0.0
    %1870 = vmatpush1.xpose.msra.mxu0 0.0
    %1871 = vmatprep.subr.mxu0 0.0
    %1872 = vmatpush1.xpose.msra.mxu0 0.0
    %1873 = vmatprep.subr.mxu0 0.0
    %1874 = vmatpush1.xpose.msra.mxu0 0.0
    %1875 = vmatprep.subr.mxu0 0.0
    %1876 = vmatpush1.xpose.msra.mxu0 0.0
    %1877 = vmatprep.subr.mxu0 0.0
    %1878 = vmatpush1.xpose.msra.mxu0 0.0
    %1879 = vmatprep.subr.mxu0 0.0
    %1880 = vmatpush1.xpose.msra.mxu0 0.0
    %1881 = vmatprep.subr.mxu0 0.0
    %1882 = vmatpush1.xpose.msra.mxu0 0.0
    %1883 = vmatprep.subr.mxu0 0.0
    %1884 = vmatpush1.xpose.msra.mxu0 0.0
    %1885 = vmatprep.subr.mxu0 0.0
    %1886 = vmatpush1.xpose.msra.mxu0 0.0
    %1887 = vmatprep.subr.mxu0 0.0
    %1888 = vmatpush1.xpose.msra.mxu0 0.0
    %1889 = vmatprep.subr.mxu0 0.0
    %1890 = vmatpush1.xpose.msra.mxu0 0.0
    %1891 = vmatprep.subr.mxu0 0.0
    %1892 = vmatpush1.xpose.msra.mxu0 0.0
    %1893 = vmatprep.subr.mxu0 0.0
    %1894 = vmatpush1.xpose.msra.mxu0 0.0
    %1895 = vmatprep.subr.mxu0 0.0
    %1896 = vmatpush1.xpose.msra.mxu0 0.0
    %1897 = vmatprep.subr.mxu0 0.0
    %1898 = vmatpush1.xpose.msra.mxu0 0.0
    %1899 = vmatprep.subr.mxu0 0.0
    %1900 = vmatpush1.xpose.msra.mxu0 0.0
    %1901 = vmatprep.subr.mxu0 0.0
    %1902 = vmatpush1.xpose.msra.mxu0 0.0
    %1903 = vmatprep.subr.mxu0 0.0
    %1904 = vmatpush1.xpose.msra.mxu0 0.0
    %1905 = vmatprep.subr.mxu0 0.0
    %1906 = vmatpush1.xpose.msra.mxu0 0.0
    %1907 = vmatprep.mubr.f32.mxu0 0.0
    %1908 = vmatmul.mubr.f32.gmra.mrb[0].mxu0 %v1839
    %v1909 = vpop.f32.mrb[0].mxu0
    %v1910 = vadd.f32 0.0, %v1909
    %v1911 = vpop.f32.mrb[0].mxu0
    %1912 = vdwg.mxu0
    %v1913 = vmul.f32 %v1910, 0.35355338
    %v1914 = vsel %vm414, %v1913, -inf
    %1915 = vmax.xlane.f32.xlu0 %v1914
    %v1916 = vpop.xlane.xlu0 %1915
    %v1917 = vsub.f32 %v1913, %v1916
    %v1918 = vmul.f32 %v1917, 1.442695
    %v1919 = vpow.pop %v1918
    %v1920 = vsel %vm414, %v1919, 0.0
    %1921 = vadd.xlane.f32.xlu0 %v1920
    %v1922 = vpop.xlane.xlu0 %1921
    %v1923 = vrcp.pop %v1922
    %v1924 = vmul.f32 %v1919, %v1923
    %1925 = vrot.lane.b32.xlu0 %v1501, 48
    %v1926 = vpop.permute.xlu0 %1925
    %v1929 = vsel %vm414, %v1924, 0
    %1931 = vmatprep.subr.mxu0 0.0
    %1932 = vmatpush1.msra.mxu0 %v1926
    %1933 = vmatprep.subr.mxu0 0.0
    %1934 = vmatpush1.msra.mxu0 0.0
    %1935 = vmatprep.subr.mxu0 0.0
    %1936 = vmatpush1.msra.mxu0 0.0
    %1937 = vmatprep.subr.mxu0 0.0
    %1938 = vmatpush1.msra.mxu0 0.0
    %1939 = vmatprep.subr.mxu0 0.0
    %1940 = vmatpush1.msra.mxu0 0.0
    %1941 = vmatprep.subr.mxu0 0.0
    %1942 = vmatpush1.msra.mxu0 0.0
    %1943 = vmatprep.subr.mxu0 0.0
    %1944 = vmatpush1.msra.mxu0 0.0
    %1945 = vmatprep.subr.mxu0 0.0
    %1946 = vmatpush1.msra.mxu0 0.0
    %1947 = vmatprep.subr.mxu0 0.0
    %1948 = vmatpush1.msra.mxu0 0.0
    %1949 = vmatprep.subr.mxu0 0.0
    %1950 = vmatpush1.msra.mxu0 0.0
    %1951 = vmatprep.subr.mxu0 0.0
    %1952 = vmatpush1.msra.mxu0 0.0
    %1953 = vmatprep.subr.mxu0 0.0
    %1954 = vmatpush1.msra.mxu0 0.0
    %1955 = vmatprep.subr.mxu0 0.0
    %1956 = vmatpush1.msra.mxu0 0.0
    %1957 = vmatprep.subr.mxu0 0.0
    %1958 = vmatpush1.msra.mxu0 0.0
    %1959 = vmatprep.subr.mxu0 0.0
    %1960 = vmatpush1.msra.mxu0 0.0
    %1961 = vmatprep.subr.mxu0 0.0
    %1962 = vmatpush1.msra.mxu0 0.0
    %1963 = vmatprep.subr.mxu0 0.0
    %1964 = vmatpush1.msra.mxu0 0.0
    %1965 = vmatprep.subr.mxu0 0.0
    %1966 = vmatpush1.msra.mxu0 0.0
    %1967 = vmatprep.subr.mxu0 0.0
    %1968 = vmatpush1.msra.mxu0 0.0
    %1969 = vmatprep.subr.mxu0 0.0
    %1970 = vmatpush1.msra.mxu0 0.0
    %1971 = vmatprep.subr.mxu0 0.0
    %1972 = vmatpush1.msra.mxu0 0.0
    %1973 = vmatprep.subr.mxu0 0.0
    %1974 = vmatpush1.msra.mxu0 0.0
    %1975 = vmatprep.subr.mxu0 0.0
    %1976 = vmatpush1.msra.mxu0 0.0
    %1977 = vmatprep.subr.mxu0 0.0
    %1978 = vmatpush1.msra.mxu0 0.0
    %1979 = vmatprep.subr.mxu0 0.0
    %1980 = vmatpush1.msra.mxu0 0.0
    %1981 = vmatprep.subr.mxu0 0.0
    %1982 = vmatpush1.msra.mxu0 0.0
    %1983 = vmatprep.subr.mxu0 0.0
    %1984 = vmatpush1.msra.mxu0 0.0
    %1985 = vmatprep.subr.mxu0 0.0
    %1986 = vmatpush1.msra.mxu0 0.0
    %1987 = vmatprep.subr.mxu0 0.0
    %1988 = vmatpush1.msra.mxu0 0.0
    %1989 = vmatprep.subr.mxu0 0.0
    %1990 = vmatpush1.msra.mxu0 0.0
    %1991 = vmatprep.subr.mxu0 0.0
    %1992 = vmatpush1.msra.mxu0 0.0
    %1993 = vmatprep.subr.mxu0 0.0
    %1994 = vmatpush1.msra.mxu0 0.0
    %1995 = vmatprep.mubr.f32.mxu0 0.0
    %1996 = vmatmul.mubr.f32.gmra.mrb[0].mxu0 %v1929
    %v1997 = vpop.f32.mrb[0].mxu0
    %v1998 = vadd.f32 0.0, %v1997
    %v1999 = vpop.f32.mrb[0].mxu0
    %2000 = vdwg.mxu0
    %2001 = vrot.lane.b32.xlu0 %v1501, 104
    %v2002 = vpop.permute.xlu0 %2001
    %2003 = vrot.lane.b32.xlu0 %v1501, 72
    %v2004 = vpop.permute.xlu0 %2003
    %v2005 = vsel %vm414, %v2002, 0
    %v2007 = vsel %vm414, %v2004, 0
    %2009 = vmatprep.subr.mxu0 0.0
    %2010 = vmatpush1.xpose.msra.mxu0 %v2007
    %2011 = vmatprep.subr.mxu0 0.0
    %2012 = vmatpush1.xpose.msra.mxu0 0.0
    %2013 = vmatprep.subr.mxu0 0.0
    %2014 = vmatpush1.xpose.msra.mxu0 0.0
    %2015 = vmatprep.subr.mxu0 0.0
    %2016 = vmatpush1.xpose.msra.mxu0 0.0
    %2017 = vmatprep.subr.mxu0 0.0
    %2018 = vmatpush1.xpose.msra.mxu0 0.0
    %2019 = vmatprep.subr.mxu0 0.0
    %2020 = vmatpush1.xpose.msra.mxu0 0.0
    %2021 = vmatprep.subr.mxu0 0.0
    %2022 = vmatpush1.xpose.msra.mxu0 0.0
    %2023 = vmatprep.subr.mxu0 0.0
    %2024 = vmatpush1.xpose.msra.mxu0 0.0
    %2025 = vmatprep.subr.mxu0 0.0
    %2026 = vmatpush1.xpose.msra.mxu0 0.0
    %2027 = vmatprep.subr.mxu0 0.0
    %2028 = vmatpush1.xpose.msra.mxu0 0.0
    %2029 = vmatprep.subr.mxu0 0.0
    %2030 = vmatpush1.xpose.msra.mxu0 0.0
    %2031 = vmatprep.subr.mxu0 0.0
    %2032 = vmatpush1.xpose.msra.mxu0 0.0
    %2033 = vmatprep.subr.mxu0 0.0
    %2034 = vmatpush1.xpose.msra.mxu0 0.0
    %2035 = vmatprep.subr.mxu0 0.0
    %2036 = vmatpush1.xpose.msra.mxu0 0.0
    %2037 = vmatprep.subr.mxu0 0.0
    %2038 = vmatpush1.xpose.msra.mxu0 0.0
    %2039 = vmatprep.subr.mxu0 0.0
    %2040 = vmatpush1.xpose.msra.mxu0 0.0
    %2041 = vmatprep.subr.mxu0 0.0
    %2042 = vmatpush1.xpose.msra.mxu0 0.0
    %2043 = vmatprep.subr.mxu0 0.0
    %2044 = vmatpush1.xpose.msra.mxu0 0.0
    %2045 = vmatprep.subr.mxu0 0.0
    %2046 = vmatpush1.xpose.msra.mxu0 0.0
    %2047 = vmatprep.subr.mxu0 0.0
    %2048 = vmatpush1.xpose.msra.mxu0 0.0
    %2049 = vmatprep.subr.mxu0 0.0
    %2050 = vmatpush1.xpose.msra.mxu0 0.0
    %2051 = vmatprep.subr.mxu0 0.0
    %2052 = vmatpush1.xpose.msra.mxu0 0.0
    %2053 = vmatprep.subr.mxu0 0.0
    %2054 = vmatpush1.xpose.msra.mxu0 0.0
    %2055 = vmatprep.subr.mxu0 0.0
    %2056 = vmatpush1.xpose.msra.mxu0 0.0
    %2057 = vmatprep.subr.mxu0 0.0
    %2058 = vmatpush1.xpose.msra.mxu0 0.0
    %2059 = vmatprep.subr.mxu0 0.0
    %2060 = vmatpush1.xpose.msra.mxu0 0.0
    %2061 = vmatprep.subr.mxu0 0.0
    %2062 = vmatpush1.xpose.msra.mxu0 0.0
    %2063 = vmatprep.subr.mxu0 0.0
    %2064 = vmatpush1.xpose.msra.mxu0 0.0
    %2065 = vmatprep.subr.mxu0 0.0
    %2066 = vmatpush1.xpose.msra.mxu0 0.0
    %2067 = vmatprep.subr.mxu0 0.0
    %2068 = vmatpush1.xpose.msra.mxu0 0.0
    %2069 = vmatprep.subr.mxu0 0.0
    %2070 = vmatpush1.xpose.msra.mxu0 0.0
    %2071 = vmatprep.subr.mxu0 0.0
    %2072 = vmatpush1.xpose.msra.mxu0 0.0
    %2073 = vmatprep.mubr.f32.mxu0 0.0
    %2074 = vmatmul.mubr.f32.gmra.mrb[0].mxu0 %v2005
    %v2075 = vpop.f32.mrb[0].mxu0
    %v2076 = vadd.f32 0.0, %v2075
    %v2077 = vpop.f32.mrb[0].mxu0
    %2078 = vdwg.mxu0
    %v2079 = vmul.f32 %v2076, 0.35355338
    %v2080 = vsel %vm414, %v2079, -inf
    %2081 = vmax.xlane.f32.xlu0 %v2080
    %v2082 = vpop.xlane.xlu0 %2081
    %v2083 = vsub.f32 %v2079, %v2082
    %v2084 = vmul.f32 %v2083, 1.442695
    %v2085 = vpow.pop %v2084
    %v2086 = vsel %vm414, %v2085, 0.0
    %2087 = vadd.xlane.f32.xlu0 %v2086
    %v2088 = vpop.xlane.xlu0 %2087
    %v2089 = vrcp.pop %v2088
    %v2090 = vmul.f32 %v2085, %v2089
    %2091 = vrot.lane.b32.xlu0 %v1501, 40
    %v2092 = vpop.permute.xlu0 %2091
    %v2095 = vsel %vm414, %v2090, 0
    %2097 = vmatprep.subr.mxu0 0.0
    %2098 = vmatpush1.msra.mxu0 %v2092
    %2099 = vmatprep.subr.mxu0 0.0
    %2100 = vmatpush1.msra.mxu0 0.0
    %2101 = vmatprep.subr.mxu0 0.0
    %2102 = vmatpush1.msra.mxu0 0.0
    %2103 = vmatprep.subr.mxu0 0.0
    %2104 = vmatpush1.msra.mxu0 0.0
    %2105 = vmatprep.subr.mxu0 0.0
    %2106 = vmatpush1.msra.mxu0 0.0
    %2107 = vmatprep.subr.mxu0 0.0
    %2108 = vmatpush1.msra.mxu0 0.0
    %2109 = vmatprep.subr.mxu0 0.0
    %2110 = vmatpush1.msra.mxu0 0.0
    %2111 = vmatprep.subr.mxu0 0.0
    %2112 = vmatpush1.msra.mxu0 0.0
    %2113 = vmatprep.subr.mxu0 0.0
    %2114 = vmatpush1.msra.mxu0 0.0
    %2115 = vmatprep.subr.mxu0 0.0
    %2116 = vmatpush1.msra.mxu0 0.0
    %2117 = vmatprep.subr.mxu0 0.0
    %2118 = vmatpush1.msra.mxu0 0.0
    %2119 = vmatprep.subr.mxu0 0.0
    %2120 = vmatpush1.msra.mxu0 0.0
    %2121 = vmatprep.subr.mxu0 0.0
    %2122 = vmatpush1.msra.mxu0 0.0
    %2123 = vmatprep.subr.mxu0 0.0
    %2124 = vmatpush1.msra.mxu0 0.0
    %2125 = vmatprep.subr.mxu0 0.0
    %2126 = vmatpush1.msra.mxu0 0.0
    %2127 = vmatprep.subr.mxu0 0.0
    %2128 = vmatpush1.msra.mxu0 0.0
    %2129 = vmatprep.subr.mxu0 0.0
    %2130 = vmatpush1.msra.mxu0 0.0
    %2131 = vmatprep.subr.mxu0 0.0
    %2132 = vmatpush1.msra.mxu0 0.0
    %2133 = vmatprep.subr.mxu0 0.0
    %2134 = vmatpush1.msra.mxu0 0.0
    %2135 = vmatprep.subr.mxu0 0.0
    %2136 = vmatpush1.msra.mxu0 0.0
    %2137 = vmatprep.subr.mxu0 0.0
    %2138 = vmatpush1.msra.mxu0 0.0
    %2139 = vmatprep.subr.mxu0 0.0
    %2140 = vmatpush1.msra.mxu0 0.0
    %2141 = vmatprep.subr.mxu0 0.0
    %2142 = vmatpush1.msra.mxu0 0.0
    %2143 = vmatprep.subr.mxu0 0.0
    %2144 = vmatpush1.msra.mxu0 0.0
    %2145 = vmatprep.subr.mxu0 0.0
    %2146 = vmatpush1.msra.mxu0 0.0
    %2147 = vmatprep.subr.mxu0 0.0
    %2148 = vmatpush1.msra.mxu0 0.0
    %2149 = vmatprep.subr.mxu0 0.0
    %2150 = vmatpush1.msra.mxu0 0.0
    %2151 = vmatprep.subr.mxu0 0.0
    %2152 = vmatpush1.msra.mxu0 0.0
    %2153 = vmatprep.subr.mxu0 0.0
    %2154 = vmatpush1.msra.mxu0 0.0
    %2155 = vmatprep.subr.mxu0 0.0
    %2156 = vmatpush1.msra.mxu0 0.0
    %2157 = vmatprep.subr.mxu0 0.0
    %2158 = vmatpush1.msra.mxu0 0.0
    %2159 = vmatprep.subr.mxu0 0.0
    %2160 = vmatpush1.msra.mxu0 0.0
    %2161 = vmatprep.mubr.f32.mxu0 0.0
    %2162 = vmatmul.mubr.f32.gmra.mrb[0].mxu0 %v2095
    %v2163 = vpop.f32.mrb[0].mxu0
    %v2164 = vadd.f32 0.0, %v2163
    %v2165 = vpop.f32.mrb[0].mxu0
    %2166 = vdwg.mxu0
    %2168 = vrot.lane.b32.xlu0 %v1832, 8
    %v2169 = vpop.permute.xlu0 %2168
    %2172 = vrot.lane.b32.xlu0 %v1998, 16
    %v2173 = vpop.permute.xlu0 %2172
    %2176 = vrot.lane.b32.xlu0 %v2164, 24
    %v2177 = vpop.permute.xlu0 %2176
    %v2179 = vsel %vm414, %v1666, %v2169
    %v2180 = vsel %vm1088, %v2179, %v2173
    %v2181 = vsel %vm1090, %v2180, %v2177
    %s2182 = scalar_lea.vmem %s8, 32
    %v2183 = vld [vmem:[%s2182] sm:$0xff]
    %v2184 = vld [vmem:[%s2182 + $0x8] sm:$0xff]
    %v2185 = vld [vmem:[%s2182 + $0x10] sm:$0xff]
    %v2186 = vld [vmem:[%s2182 + $0x18] sm:$0xff]
    %s2187 = scalar_lea.vmem [#allocation14], 1
    %v2188 = vld [vmem:[%s2187] sm:$0x1]
    %v2190 = vlaneseq
    %v2191 = vshrl.u32 %v2190, 7
    %v2192 = vsub.s32 0, %v2191
    %v2193 = vrot.slane %v2188, %v2192
    %v2196 = vsel %vm298, %v2181, 0
    %2198 = vmatprep.subr.mxu0 0.0
    %2199 = vmatpush1.msra.mxu0 %v2183
    %2200 = vmatprep.subr.mxu0 0.0
    %2201 = vmatpush1.msra.mxu0 %v2184
    %2202 = vmatprep.subr.mxu0 0.0
    %2203 = vmatpush1.msra.mxu0 %v2185
    %2204 = vmatprep.subr.mxu0 0.0
    %2205 = vmatpush1.msra.mxu0 %v2186
    %2206 = vmatprep.subr.mxu0 0.0
    %2207 = vmatpush1.msra.mxu0 0.0
    %2208 = vmatprep.subr.mxu0 0.0
    %2209 = vmatpush1.msra.mxu0 0.0
    %2210 = vmatprep.subr.mxu0 0.0
    %2211 = vmatpush1.msra.mxu0 0.0
    %2212 = vmatprep.subr.mxu0 0.0
    %2213 = vmatpush1.msra.mxu0 0.0
    %2214 = vmatprep.subr.mxu0 0.0
    %2215 = vmatpush1.msra.mxu0 0.0
    %2216 = vmatprep.subr.mxu0 0.0
    %2217 = vmatpush1.msra.mxu0 0.0
    %2218 = vmatprep.subr.mxu0 0.0
    %2219 = vmatpush1.msra.mxu0 0.0
    %2220 = vmatprep.subr.mxu0 0.0
    %2221 = vmatpush1.msra.mxu0 0.0
    %2222 = vmatprep.subr.mxu0 0.0
    %2223 = vmatpush1.msra.mxu0 0.0
    %2224 = vmatprep.subr.mxu0 0.0
    %2225 = vmatpush1.msra.mxu0 0.0
    %2226 = vmatprep.subr.mxu0 0.0
    %2227 = vmatpush1.msra.mxu0 0.0
    %2228 = vmatprep.subr.mxu0 0.0
    %2229 = vmatpush1.msra.mxu0 0.0
    %2230 = vmatprep.subr.mxu0 0.0
    %2231 = vmatpush1.msra.mxu0 0.0
    %2232 = vmatprep.subr.mxu0 0.0
    %2233 = vmatpush1.msra.mxu0 0.0
    %2234 = vmatprep.subr.mxu0 0.0
    %2235 = vmatpush1.msra.mxu0 0.0
    %2236 = vmatprep.subr.mxu0 0.0
    %2237 = vmatpush1.msra.mxu0 0.0
    %2238 = vmatprep.subr.mxu0 0.0
    %2239 = vmatpush1.msra.mxu0 0.0
    %2240 = vmatprep.subr.mxu0 0.0
    %2241 = vmatpush1.msra.mxu0 0.0
    %2242 = vmatprep.subr.mxu0 0.0
    %2243 = vmatpush1.msra.mxu0 0.0
    %2244 = vmatprep.subr.mxu0 0.0
    %2245 = vmatpush1.msra.mxu0 0.0
    %2246 = vmatprep.subr.mxu0 0.0
    %2247 = vmatpush1.msra.mxu0 0.0
    %2248 = vmatprep.subr.mxu0 0.0
    %2249 = vmatpush1.msra.mxu0 0.0
    %2250 = vmatprep.subr.mxu0 0.0
    %2251 = vmatpush1.msra.mxu0 0.0
    %2252 = vmatprep.subr.mxu0 0.0
    %2253 = vmatpush1.msra.mxu0 0.0
    %2254 = vmatprep.subr.mxu0 0.0
    %2255 = vmatpush1.msra.mxu0 0.0
    %2256 = vmatprep.subr.mxu0 0.0
    %2257 = vmatpush1.msra.mxu0 0.0
    %2258 = vmatprep.subr.mxu0 0.0
    %2259 = vmatpush1.msra.mxu0 0.0
    %2260 = vmatprep.subr.mxu0 0.0
    %2261 = vmatpush1.msra.mxu0 0.0
    %2262 = vmatprep.mubr.f32.mxu0 0.0
    %2263 = vmatmul.mubr.f32.gmra.mrb[0].mxu0 %v2196
    %v2264 = vpop.f32.mrb[0].mxu0
    %v2265 = vadd.f32 %v2193, %v2264
    %v2266 = vpop.f32.mrb[0].mxu0
    %2267 = vdwg.mxu0
    %v2268 = vadd.f32 %v2265, %v1417
    %s2269 = scalar_lea.vmem [#allocation16], 1
    %v2270 = vld [vmem:[%s2269] sm:$0x1]
    %s2271 = scalar_lea.vmem [#allocation17], 1
    %v2272 = vld [vmem:[%s2271] sm:$0x1]
    %v2273 = vsel %vm298, %v2268, 0.0
    %2274 = vadd.xlane.f32.xlu0 %v2273
    %v2275 = vpop.xlane.xlu0 %2274
    %v2276 = vmul.f32 %v2275, %v302
    %v2277 = vsub.f32 %v2268, %v2276
    %v2278 = vmul.f32 %v2277, %v2277
    %v2279 = vsel %vm298, %v2278, 0.0
    %2280 = vadd.xlane.f32.xlu0 %v2279
    %v2281 = vpop.xlane.xlu0 %2280
    %v2282 = vmul.f32 %v2281, %v302
    %v2283 = vadd.f32 %v2282, 1e-12
    %v2284 = vrsqrt.pop %v2283
    %v2285 = vmul.f32 %v2277, %v2284
    %v2287 = vlaneseq
    %v2288 = vshrl.u32 %v2287, 7
    %v2289 = vsub.s32 0, %v2288
    %v2290 = vrot.slane %v2270, %v2289
    %v2292 = vmul.f32 %v2285, %v2290
    %v2294 = vlaneseq
    %v2295 = vshrl.u32 %v2294, 7
    %v2296 = vsub.s32 0, %v2295
    %v2297 = vrot.slane %v2272, %v2296
    %v2299 = vadd.f32 %v2292, %v2297
    %s2300 = scalar_lea.vmem %s12, 32
    %v2301 = vld [vmem:[%s2300] sm:$0xff]
    %v2302 = vld [vmem:[%s2300 + $0x8] sm:$0xff]
    %v2303 = vld [vmem:[%s2300 + $0x10] sm:$0xff]
    %v2304 = vld [vmem:[%s2300 + $0x18] sm:$0xff]
    %s2305 = scalar_lea.vmem [#allocation19], 1
    %v2306 = vld [vmem:[%s2305] sm:$0x1]
    %v2308 = vlaneseq
    %v2309 = vshrl.u32 %v2308, 7
    %v2310 = vsub.s32 0, %v2309
    %v2311 = vrot.slane %v2306, %v2310
    %v2314 = vsel %vm298, %v2299, 0
    %2316 = vmatprep.subr.mxu0 0.0
    %2317 = vmatpush1.msra.mxu0 %v2301
    %2318 = vmatprep.subr.mxu0 0.0
    %2319 = vmatpush1.msra.mxu0 %v2302
    %2320 = vmatprep.subr.mxu0 0.0
    %2321 = vmatpush1.msra.mxu0 %v2303
    %2322 = vmatprep.subr.mxu0 0.0
    %2323 = vmatpush1.msra.mxu0 %v2304
    %2324 = vmatprep.subr.mxu0 0.0
    %2325 = vmatpush1.msra.mxu0 0.0
    %2326 = vmatprep.subr.mxu0 0.0
    %2327 = vmatpush1.msra.mxu0 0.0
    %2328 = vmatprep.subr.mxu0 0.0
    %2329 = vmatpush1.msra.mxu0 0.0
    %2330 = vmatprep.subr.mxu0 0.0
    %2331 = vmatpush1.msra.mxu0 0.0
    %2332 = vmatprep.subr.mxu0 0.0
    %2333 = vmatpush1.msra.mxu0 0.0
    %2334 = vmatprep.subr.mxu0 0.0
    %2335 = vmatpush1.msra.mxu0 0.0
    %2336 = vmatprep.subr.mxu0 0.0
    %2337 = vmatpush1.msra.mxu0 0.0
    %2338 = vmatprep.subr.mxu0 0.0
    %2339 = vmatpush1.msra.mxu0 0.0
    %2340 = vmatprep.subr.mxu0 0.0
    %2341 = vmatpush1.msra.mxu0 0.0
    %2342 = vmatprep.subr.mxu0 0.0
    %2343 = vmatpush1.msra.mxu0 0.0
    %2344 = vmatprep.subr.mxu0 0.0
    %2345 = vmatpush1.msra.mxu0 0.0
    %2346 = vmatprep.subr.mxu0 0.0
    %2347 = vmatpush1.msra.mxu0 0.0
    %2348 = vmatprep.subr.mxu0 0.0
    %2349 = vmatpush1.msra.mxu0 0.0
    %2350 = vmatprep.subr.mxu0 0.0
    %2351 = vmatpush1.msra.mxu0 0.0
    %2352 = vmatprep.subr.mxu0 0.0
    %2353 = vmatpush1.msra.mxu0 0.0
    %2354 = vmatprep.subr.mxu0 0.0
    %2355 = vmatpush1.msra.mxu0 0.0
    %2356 = vmatprep.subr.mxu0 0.0
    %2357 = vmatpush1.msra.mxu0 0.0
    %2358 = vmatprep.subr.mxu0 0.0
    %2359 = vmatpush1.msra.mxu0 0.0
    %2360 = vmatprep.subr.mxu0 0.0
    %2361 = vmatpush1.msra.mxu0 0.0
    %2362 = vmatprep.subr.mxu0 0.0
    %2363 = vmatpush1.msra.mxu0 0.0
    %2364 = vmatprep.subr.mxu0 0.0
    %2365 = vmatpush1.msra.mxu0 0.0
    %2366 = vmatprep.subr.mxu0 0.0
    %2367 = vmatpush1.msra.mxu0 0.0
    %2368 = vmatprep.subr.mxu0 0.0
    %2369 = vmatpush1.msra.mxu0 0.0
    %2370 = vmatprep.subr.mxu0 0.0
    %2371 = vmatpush1.msra.mxu0 0.0
    %2372 = vmatprep.subr.mxu0 0.0
    %2373 = vmatpush1.msra.mxu0 0.0
    %2374 = vmatprep.subr.mxu0 0.0
    %2375 = vmatpush1.msra.mxu0 0.0
    %2376 = vmatprep.subr.mxu0 0.0
    %2377 = vmatpush1.msra.mxu0 0.0
    %2378 = vmatprep.subr.mxu0 0.0
    %2379 = vmatpush1.msra.mxu0 0.0
    %2380 = vmatprep.mubr.f32.mxu0 0.0
    %2381 = vmatmul.mubr.f32.gmra.mrb[0].mxu0 %v2314
    %v2382 = vpop.f32.mrb[0].mxu0
    %v2383 = vadd.f32 %v2311, %v2382
    %v2384 = vpop.f32.mrb[0].mxu0
    %2385 = vdwg.mxu0
    %v2386 = vmul.f32 %v2383, %v2383
    %v2387 = vmul.f32 %v2383, %v2386
    %v2388 = vmul.f32 %v2387, 0.044715
    %v2389 = vadd.f32 %v2383, %v2388
    %v2390 = vmul.f32 %v2389, 0.7978846
    %v2391 = vtanh.pop %v2390
    %v2392 = vadd.f32 %v2391, 1.0
    %v2393 = vmul.f32 %v2392, 0.5
    %v2394 = vmul.f32 %v2383, %v2393
    %s2395 = scalar_lea.vmem %s14, 64
    %v2396 = vld [vmem:[%s2395] sm:$0xff]
    %v2397 = vld [vmem:[%s2395 + $0x8] sm:$0xff]
    %v2398 = vld [vmem:[%s2395 + $0x10] sm:$0xff]
    %v2399 = vld [vmem:[%s2395 + $0x18] sm:$0xff]
    %v2400 = vld [vmem:[%s2395 + $0x20] sm:$0xff]
    %v2401 = vld [vmem:[%s2395 + $0x28] sm:$0xff]
    %v2402 = vld [vmem:[%s2395 + $0x30] sm:$0xff]
    %v2403 = vld [vmem:[%s2395 + $0x38] sm:$0xff]
    %s2404 = scalar_lea.vmem [#allocation20], 1
    %v2405 = vld [vmem:[%s2404] sm:$0x1]
    %v2407 = vlaneseq
    %v2408 = vshrl.u32 %v2407, 7
    %v2409 = vsub.s32 0, %v2408
    %v2410 = vrot.slane %v2405, %v2409
    %v2413 = vsel %vm1314, %v2394, 0
    %2415 = vmatprep.subr.mxu0 0.0
    %2416 = vmatpush1.msra.mxu0 %v2396
    %2417 = vmatprep.subr.mxu0 0.0
    %2418 = vmatpush1.msra.mxu0 %v2397
    %2419 = vmatprep.subr.mxu0 0.0
    %2420 = vmatpush1.msra.mxu0 %v2398
    %2421 = vmatprep.subr.mxu0 0.0
    %2422 = vmatpush1.msra.mxu0 %v2399
    %2423 = vmatprep.subr.mxu0 0.0
    %2424 = vmatpush1.msra.mxu0 %v2400
    %2425 = vmatprep.subr.mxu0 0.0
    %2426 = vmatpush1.msra.mxu0 %v2401
    %2427 = vmatprep.subr.mxu0 0.0
    %2428 = vmatpush1.msra.mxu0 %v2402
    %2429 = vmatprep.subr.mxu0 0.0
    %2430 = vmatpush1.msra.mxu0 %v2403
    %2431 = vmatprep.subr.mxu0 0.0
    %2432 = vmatpush1.msra.mxu0 0.0
    %2433 = vmatprep.subr.mxu0 0.0
    %2434 = vmatpush1.msra.mxu0 0.0
    %2435 = vmatprep.subr.mxu0 0.0
    %2436 = vmatpush1.msra.mxu0 0.0
    %2437 = vmatprep.subr.mxu0 0.0
    %2438 = vmatpush1.msra.mxu0 0.0
    %2439 = vmatprep.subr.mxu0 0.0
    %2440 = vmatpush1.msra.mxu0 0.0
    %2441 = vmatprep.subr.mxu0 0.0
    %2442 = vmatpush1.msra.mxu0 0.0
    %2443 = vmatprep.subr.mxu0 0.0
    %2444 = vmatpush1.msra.mxu0 0.0
    %2445 = vmatprep.subr.mxu0 0.0
    %2446 = vmatpush1.msra.mxu0 0.0
    %2447 = vmatprep.subr.mxu0 0.0
    %2448 = vmatpush1.msra.mxu0 0.0
    %2449 = vmatprep.subr.mxu0 0.0
    %2450 = vmatpush1.msra.mxu0 0.0
    %2451 = vmatprep.subr.mxu0 0.0
    %2452 = vmatpush1.msra.mxu0 0.0
    %2453 = vmatprep.subr.mxu0 0.0
    %2454 = vmatpush1.msra.mxu0 0.0
    %2455 = vmatprep.subr.mxu0 0.0
    %2456 = vmatpush1.msra.mxu0 0.0
    %2457 = vmatprep.subr.mxu0 0.0
    %2458 = vmatpush1.msra.mxu0 0.0
    %2459 = vmatprep.subr.mxu0 0.0
    %2460 = vmatpush1.msra.mxu0 0.0
    %2461 = vmatprep.subr.mxu0 0.0
    %2462 = vmatpush1.msra.mxu0 0.0
    %2463 = vmatprep.subr.mxu0 0.0
    %2464 = vmatpush1.msra.mxu0 0.0
    %2465 = vmatprep.subr.mxu0 0.0
    %2466 = vmatpush1.msra.mxu0 0.0
    %2467 = vmatprep.subr.mxu0 0.0
    %2468 = vmatpush1.msra.mxu0 0.0
    %2469 = vmatprep.subr.mxu0 0.0
    %2470 = vmatpush1.msra.mxu0 0.0
    %2471 = vmatprep.subr.mxu0 0.0
    %2472 = vmatpush1.msra.mxu0 0.0
    %2473 = vmatprep.subr.mxu0 0.0
    %2474 = vmatpush1.msra.mxu0 0.0
    %2475 = vmatprep.subr.mxu0 0.0
    %2476 = vmatpush1.msra.mxu0 0.0
    %2477 = vmatprep.subr.mxu0 0.0
    %2478 = vmatpush1.msra.mxu0 0.0
    %2479 = vmatprep.mubr.f32.mxu0 0.0
    %2480 = vmatmul.mubr.f32.gmra.mrb[0].mxu0 %v2413
    %v2481 = vpop.f32.mrb[0].mxu0
    %v2482 = vadd.f32 %v2410, %v2481
    %v2483 = vpop.f32.mrb[0].mxu0
    %2484 = vdwg.mxu0
    %v2485 = vadd.f32 %v2482, %v2299
    %s2486 = scalar_lea.vmem [#allocation22], 1
    %v2487 = vld [vmem:[%s2486] sm:$0x1]
    %s2488 = scalar_lea.vmem [#allocation23], 1
    %v2489 = vld [vmem:[%s2488] sm:$0x1]
    %v2490 = vsel %vm298, %v2485, 0.0
    %2491 = vadd.xlane.f32.xlu0 %v2490
    %v2492 = vpop.xlane.xlu0 %2491
    %v2493 = vmul.f32 %v2492, %v302
    %v2494 = vsub.f32 %v2485, %v2493
    %v2495 = vmul.f32 %v2494, %v2494
    %v2496 = vsel %vm298, %v2495, 0.0
    %2497 = vadd.xlane.f32.xlu0 %v2496
    %v2498 = vpop.xlane.xlu0 %2497
    %v2499 = vmul.f32 %v2498, %v302
    %v2500 = vadd.f32 %v2499, 1e-12
    %v2501 = vrsqrt.pop %v2500
    %v2502 = vmul.f32 %v2494, %v2501
    %v2504 = vlaneseq
    %v2505 = vshrl.u32 %v2504, 7
    %v2506 = vsub.s32 0, %v2505
    %v2507 = vrot.slane %v2487, %v2506
    %v2509 = vmul.f32 %v2502, %v2507
    %v2511 = vlaneseq
    %v2512 = vshrl.u32 %v2511, 7
    %v2513 = vsub.s32 0, %v2512
    %v2514 = vrot.slane %v2489, %v2513
    %v2516 = vadd.f32 %v2509, %v2514
    %v2517 = vld [vmem:[#allocation25] sm:$0xff]
    %v2518 = vld [vmem:[#allocation25 + $0x8] sm:$0xff]
    %v2519 = vld [vmem:[#allocation25 + $0x10] sm:$0xff]
    %v2520 = vld [vmem:[#allocation25 + $0x18] sm:$0xff]
    %v2521 = vld [vmem:[#allocation26] sm:$0x1]
    %v2523 = vsel %vm298, %v2516, 0
    %2525 = vmatprep.subr.mxu0 0.0
    %2526 = vmatpush1.msra.mxu0 %v2517
    %2527 = vmatprep.subr.mxu0 0.0
    %2528 = vmatpush1.msra.mxu0 %v2518
    %2529 = vmatprep.subr.mxu0 0.0
    %2530 = vmatpush1.msra.mxu0 %v2519
    %2531 = vmatprep.subr.mxu0 0.0
    %2532 = vmatpush1.msra.mxu0 %v2520
    %2533 = vmatprep.subr.mxu0 0.0
    %2534 = vmatpush1.msra.mxu0 0.0
    %2535 = vmatprep.subr.mxu0 0.0
    %2536 = vmatpush1.msra.mxu0 0.0
    %2537 = vmatprep.subr.mxu0 0.0
    %2538 = vmatpush1.msra.mxu0 0.0
    %2539 = vmatprep.subr.mxu0 0.0
    %2540 = vmatpush1.msra.mxu0 0.0
    %2541 = vmatprep.subr.mxu0 0.0
    %2542 = vmatpush1.msra.mxu0 0.0
    %2543 = vmatprep.subr.mxu0 0.0
    %2544 = vmatpush1.msra.mxu0 0.0
    %2545 = vmatprep.subr.mxu0 0.0
    %2546 = vmatpush1.msra.mxu0 0.0
    %2547 = vmatprep.subr.mxu0 0.0
    %2548 = vmatpush1.msra.mxu0 0.0
    %2549 = vmatprep.subr.mxu0 0.0
    %2550 = vmatpush1.msra.mxu0 0.0
    %2551 = vmatprep.subr.mxu0 0.0
    %2552 = vmatpush1.msra.mxu0 0.0
    %2553 = vmatprep.subr.mxu0 0.0
    %2554 = vmatpush1.msra.mxu0 0.0
    %2555 = vmatprep.subr.mxu0 0.0
    %2556 = vmatpush1.msra.mxu0 0.0
    %2557 = vmatprep.subr.mxu0 0.0
    %2558 = vmatpush1.msra.mxu0 0.0
    %2559 = vmatprep.subr.mxu0 0.0
    %2560 = vmatpush1.msra.mxu0 0.0
    %2561 = vmatprep.subr.mxu0 0.0
    %2562 = vmatpush1.msra.mxu0 0.0
    %2563 = vmatprep.subr.mxu0 0.0
    %2564 = vmatpush1.msra.mxu0 0.0
    %2565 = vmatprep.subr.mxu0 0.0
    %2566 = vmatpush1.msra.mxu0 0.0
    %2567 = vmatprep.subr.mxu0 0.0
    %2568 = vmatpush1.msra.mxu0 0.0
    %2569 = vmatprep.subr.mxu0 0.0
    %2570 = vmatpush1.msra.mxu0 0.0
    %2571 = vmatprep.subr.mxu0 0.0
    %2572 = vmatpush1.msra.mxu0 0.0
    %2573 = vmatprep.subr.mxu0 0.0
    %2574 = vmatpush1.msra.mxu0 0.0
    %2575 = vmatprep.subr.mxu0 0.0
    %2576 = vmatpush1.msra.mxu0 0.0
    %2577 = vmatprep.subr.mxu0 0.0
    %2578 = vmatpush1.msra.mxu0 0.0
    %2579 = vmatprep.subr.mxu0 0.0
    %2580 = vmatpush1.msra.mxu0 0.0
    %2581 = vmatprep.subr.mxu0 0.0
    %2582 = vmatpush1.msra.mxu0 0.0
    %2583 = vmatprep.subr.mxu0 0.0
    %2584 = vmatpush1.msra.mxu0 0.0
    %2585 = vmatprep.subr.mxu0 0.0
    %2586 = vmatpush1.msra.mxu0 0.0
    %2587 = vmatprep.subr.mxu0 0.0
    %2588 = vmatpush1.msra.mxu0 0.0
    %2589 = vmatprep.mubr.f32.mxu0 0.0
    %2590 = vmatmul.mubr.f32.gmra.mrb[0].mxu0 %v2523
    %v2591 = vpop.f32.mrb[0].mxu0
    %v2592 = vadd.f32 %v2521, %v2591
    %v2593 = vpop.f32.mrb[0].mxu0
    %2594 = vdwg.mxu0
    %v2595 = vlaneseq
    %v2596 = vand.u32 %v2595, 127
    %vm2597 = vcmp.lt.s32.totalorder %v2596, 5
    %v2598 = vsel %vm2597, %v2592, -1e+30
    %vm2599 = vcmask 1040384
    %v2600 = vsel %vm2599, %v2598, -inf
    %2601 = vmax.xlane.f32.xlu0 %v2600
    %v2602 = vpop.xlane.xlu0 %2601
    %v2603 = vsub.f32 %v2598, %v2602
    %v2604 = vmul.f32 %v2603, 1.442695
    %v2605 = vpow.pop %v2604
    %v2606 = vsel %vm2599, %v2605, 0.0
    %2607 = vadd.xlane.f32.xlu0 %v2606
    %v2608 = vpop.xlane.xlu0 %2607
    %v2609 = vrcp.pop %v2608
    %v2610 = vmul.f32 %v2605, %v2609
    %2611 = vst [vmem:[#allocation28] sm:$0x1] %v2610
    // Predicated region
    $region134: #{inorganic_ion_classifier_forward.1} parent=1 // pred_check
      _
    $region135: #{inorganic_ion_classifier_forward.1} parent=1 // pred_check_branch
      %2613 = sbr.rel (0) target = $region137
    $region136: #{inorganic_ion_classifier_forward.1} parent=1 // pred_region
      %s2615 = ssub.s32 16, 16
      %2616 = vsyncadd [#allocation7], %s2615
      %s2618 = sshll.u32 [#allocation28], 4
      %s2619 = int_to_ptr.vmem [resolvable:$true] %s2618
      %2621 = dma.vmem_to_hbm [thread:$0]  %s2619, 16, %s20, [#allocation7]
    $region137: #{inorganic_ion_classifier_forward.1} parent=1 // pred_fallthru
      _
    // Predicated region
    $region138: #{inorganic_ion_classifier_forward.1} parent=1 // pred_check
      _
    $region139: #{inorganic_ion_classifier_forward.1} parent=1 // pred_check_branch
      %2623 = sbr.rel (0) target = $region141
    $region140: #{inorganic_ion_classifier_forward.1} parent=1 // pred_region
      %2624 = dma.done [#allocation7], 16
    $region141: #{inorganic_ion_classifier_forward.1} parent=1 // pred_fallthru
      _
    %2625 = vsyncpa [#allocation6], 1
    %2626 = vsyncpa [#allocation9], 1
    %2627 = vsyncpa [#allocation12], 1
    %2628 = vsyncpa [#allocation15], 1
    %2629 = vsyncpa [#allocation18], 1
    %2630 = vsyncpa [#allocation21], 1
    %2631 = vsyncpa [#allocation24], 1
    %2632 = vsyncpa [#allocation27], 1
    %2633 = vsyncpa [#allocation7], 1

</llo_original>
